<compile_context>
chip_gen: v7x
topology: tpu7x:2x2x1
jax: 0.10.0
libtpu: 0.0.40
codegen_flags: <defaults>
</compile_context>

<pallas_src>
import jax
import jax.numpy as jnp
from jax.experimental import pallas as pl
from jax.experimental.pallas import tpu as pltpu

_EPS = 1e-5  # BatchNorm2d default eps

# Gridless calls: whole [C, M] slabs, trivially inside VMEM.  Explicit budget
# keeps the wrappers honest on v7x's 32 MiB scoped default.
_COMPILER_PARAMS = pltpu.CompilerParams(vmem_limit_bytes=32 * 1024 * 1024)


def _round_up(x, m):
    return ((x + m - 1) // m) * m


# ----------------------------- Pallas kernels (channel-major) -----------------------------

def _stage1_kernel(x_ref, w_ref, b_ref, o_ref):
    """One stacked MXU dot over X = [x_l ; x_g]  ([16, M]):
         rows 0:8   -> out_l = (BN_l-folded) convl2l(x_l) + convg2l(x_g) + b_l
         rows 8:12  -> x1    = ReLU((BN1-folded) conv1(x_g) + b_1)
         rows 12:16 -> zero padding (zero weight rows / zero bias)
    ReLU is applied only to the lower 8-row slice (f32 sublane-tile boundary)."""
    y = jnp.dot(w_ref[...], x_ref[...], preferred_element_type=jnp.float32) + b_ref[...]
    o_ref[0:8, :] = y[0:8, :]
    o_ref[8:16, :] = jnp.maximum(y[8:16, :], 0.0)


def _fu_lfu_kernel(zf_ref, zl_ref, wf_ref, wl_ref, bf_ref, bl_ref, of_ref, ol_ref):
    """FourierUnit (fu) and LFU 1x1 conv + BN + ReLU fused in one launch.
    Inputs are interleaved re/im channel-major slabs, zero-padded on the lane
    axis to a multiple of 128 so both outputs store lane-dense."""
    yf = jnp.dot(wf_ref[...], zf_ref[...], preferred_element_type=jnp.float32) + bf_ref[...]
    of_ref[...] = jnp.maximum(yf, 0.0)
    yl = jnp.dot(wl_ref[...], zl_ref[...], preferred_element_type=jnp.float32) + bl_ref[...]
    ol_ref[...] = jnp.maximum(yl, 0.0)


def _stage2_kernel(x1_ref, fu_ref, xs_ref, xl_ref, w2_ref, wlg_ref, bg_ref, og_ref):
    """out_g = (BN_g-folded) conv2(x1 + fu + xs) + convl2g(x_l) + b_g.
    Residual add stays on the VPU; the two tiny dots (K=4, K=8) are cheaper
    than an in-kernel sublane concat, and the MXU is ~95% idle anyway."""
    z = x1_ref[...] + fu_ref[...] + xs_ref[...]
    og_ref[...] = (jnp.dot(w2_ref[...], z, preferred_element_type=jnp.float32)
                   + jnp.dot(wlg_ref[...], xl_ref[...], preferred_element_type=jnp.float32)
                   + bg_ref[...])


# --------------------------- Pallas call wrappers (gridless) ---------------------------

def stage1(x_cat, w_stack, b_stack):
    """x_cat: [16, M] (= [x_l ; x_g] channel-major). Returns [16, M]."""
    m = x_cat.shape[1]
    return pl.pallas_call(
        _stage1_kernel,
        out_shape=jax.ShapeDtypeStruct((16, m), jnp.float32),
        compiler_params=_COMPILER_PARAMS,
    )(x_cat, w_stack, b_stack)


def fu_lfu_conv(z_fu, z_lf, w_fu, w_lf, b_fu, b_lf):
    """Both FourierUnit convs in ONE call. z_*: [8, Mpad] (lane-padded)."""
    return pl.pallas_call(
        _fu_lfu_kernel,
        out_shape=(jax.ShapeDtypeStruct((w_fu.shape[0], z_fu.shape[1]), jnp.float32),
                   jax.ShapeDtypeStruct((w_lf.shape[0], z_lf.shape[1]), jnp.float32)),
        compiler_params=_COMPILER_PARAMS,
    )(z_fu, z_lf, w_fu, w_lf, b_fu, b_lf)


def stage2(x1, fu, xs, xl, w2, wlg, bg):
    """out_g = W2'@(x1+fu+xs) + Wl2g'@x_l + b_g, channel-major. Returns [8, M]."""
    m = xl.shape[1]
    return pl.pallas_call(
        _stage2_kernel,
        out_shape=jax.ShapeDtypeStruct((wlg.shape[0], m), jnp.float32),
        compiler_params=_COMPILER_PARAMS,
    )(x1, fu, xs, xl, w2, wlg, bg)


# ----------------------------- helpers -----------------------------

def _bn_scale_bias(gamma, beta, mean, var):
    scale = gamma / jnp.sqrt(var + _EPS)
    return scale, beta - mean * scale


def _fold_bn(w_oi, scale):
    # fold per-output-channel BN scale into the conv weight (XLA side, tiny)
    return w_oi * scale[:, None]


def _fft_to_cm(x_cb):
    """[C, B, H, W] -> rfft2 -> interleaved re/im channel-major [2C, round_up(M,128)].

    Channel order matches torch.view_as_real + permute(0,1,4,2,3):
    (c0_re, c0_im, c1_re, c1_im, ...)."""
    c, b, h, w = x_cb.shape
    ff = jnp.fft.rfft2(x_cb, norm="ortho")                    # [C, B, H, Wf] complex
    wf = ff.shape[-1]
    m = b * h * wf
    z = jnp.stack([jnp.real(ff), jnp.imag(ff)], axis=1).reshape(2 * c, m)
    z = jnp.pad(z, ((0, 0), (0, _round_up(m, 128) - m)))      # lane-dense pad
    return z, (b, h, w, wf, m)


def _cm_to_ifft(y, meta):
    """Inverse of _fft_to_cm: [2C, Mpad] -> view_as_complex -> irfft2 -> [C,B,H,W]."""
    b, h, w, wf, m = meta
    c = y.shape[0] // 2
    y = y[:, :m].reshape(c, 2, b, h, wf)
    comp = jax.lax.complex(y[:, 0], y[:, 1])
    return jnp.fft.irfft2(comp, s=(h, w), norm="ortho")


# ------------------------------- FFC forward -------------------------------

def ffc_bn_act_forward(x_l, x_g, p):
    """FFC_BN_ACT forward (ratio_gin=ratio_gout=0.5, act=Identity, eval-mode BN)."""
    b, cl, h, w = x_l.shape
    cg = x_g.shape[1]
    m = b * h * w

    # NCHW -> channel-major [C, B*H*W] (batch flattened onto the lane axis).
    xl_cm = jnp.transpose(x_l, (1, 0, 2, 3)).reshape(cl, m)
    xg_cm = jnp.transpose(x_g, (1, 0, 2, 3)).reshape(cg, m)
    x_cat = jnp.concatenate([xl_cm, xg_cm], axis=0)            # [16, M]

    sp = p["convg2g"]
    s_l, b_l = _bn_scale_bias(*p["bn_l"])
    s_g, b_g = _bn_scale_bias(*p["bn_g"])
    s1, b1 = _bn_scale_bias(*sp["bn1"])

    # Stacked stage-1 weight  [[Wll, Wgl], [0, W1], [0, 0]]  (BN folded, 16x16).
    w_stack = jnp.zeros((16, 16), jnp.float32)
    w_stack = w_stack.at[0:8, 0:8].set(_fold_bn(p["convl2l"], s_l))
    w_stack = w_stack.at[0:8, 8:16].set(_fold_bn(p["convg2l"], s_l))
    w_stack = w_stack.at[8:12, 8:16].set(_fold_bn(sp["conv1_w"], s1))
    b_stack = jnp.zeros((16, 1), jnp.float32)
    b_stack = b_stack.at[0:8, 0].set(b_l)
    b_stack = b_stack.at[8:12, 0].set(b1)

    # stage 1: out_l = BN_l(convl2l(x_l)+convg2l(x_g));  x1 = ReLU(BN1(conv1(x_g)))
    y1 = stage1(x_cat, w_stack, b_stack)                       # [16, M]
    out_l_cm = y1[0:8]                                         # [8, M]
    x1_cm = y1[8:12]                                           # [4, M]
    x1_cb = x1_cm.reshape(4, b, h, w)                          # [C, B, H, W]

    # LFU spatial fold of the first c//4 channels (same order as torch split/cat).
    xs_cb = x1_cb[:1]
    xs_cb = jnp.concatenate(jnp.split(xs_cb, 2, axis=2), axis=0)
    xs_cb = jnp.concatenate(jnp.split(xs_cb, 2, axis=3), axis=0)   # [4, B, H/2, W/2]

    # FFTs in XLA, then ONE Pallas call for both Fourier-domain convs.
    z_fu, meta_fu = _fft_to_cm(x1_cb)                          # [8, 384] (288 real)
    z_lf, meta_lf = _fft_to_cm(xs_cb)                          # [8, 128] (80 real)
    s_fu, bias_fu = _bn_scale_bias(*sp["fu"]["bn"])
    s_lf, bias_lf = _bn_scale_bias(*sp["lfu"]["bn"])
    y_fu, y_lf = fu_lfu_conv(
        z_fu, z_lf,
        _fold_bn(sp["fu"]["w"], s_fu), _fold_bn(sp["lfu"]["w"], s_lf),
        bias_fu.reshape(-1, 1), bias_lf.reshape(-1, 1))

    fu_cb = _cm_to_ifft(y_fu, meta_fu)                         # [4, B, H, W]
    xs_out = _cm_to_ifft(y_lf, meta_lf)                        # [4, B, H/2, W/2]
    xs_out = jnp.tile(xs_out, (1, 1, 2, 2))                    # [4, B, H, W]

    # stage 2: out_g = BN_g( conv2(x1 + fu + xs) + convl2g(x_l) )
    out_g_cm = stage2(
        x1_cm, fu_cb.reshape(4, m), xs_out.reshape(4, m), xl_cm,
        _fold_bn(sp["conv2_w"], s_g), _fold_bn(p["convl2g"], s_g), b_g.reshape(-1, 1))

    out_l = jnp.transpose(out_l_cm.reshape(-1, b, h, w), (1, 0, 2, 3))
    out_g = jnp.transpose(out_g_cm.reshape(-1, b, h, w), (1, 0, 2, 3))
    return out_l, out_g


# --------------------------- parameter construction ---------------------------

def init_params(key):
    ks = jax.random.split(key, 12)

    def w(k, o, i):
        return (jax.random.normal(k, (o, i), jnp.float32) / jnp.sqrt(i)).astype(jnp.float32)

    def bn(k, c):
        k1, k2, k3, k4 = jax.random.split(k, 4)
        gamma = 1.0 + 0.1 * jax.random.normal(k1, (c,), jnp.float32)
        beta = 0.1 * jax.random.normal(k2, (c,), jnp.float32)
        mean = 0.1 * jax.random.normal(k3, (c,), jnp.float32)
        var = 0.5 + jax.random.uniform(k4, (c,), jnp.float32)
        return (gamma, beta, mean, var)

    return {
        "convl2l": w(ks[0], 8, 8),
        "convl2g": w(ks[1], 8, 8),
        "convg2l": w(ks[2], 8, 8),
        "bn_l": bn(ks[3], 8),
        "bn_g": bn(ks[4], 8),
        "convg2g": {
            "conv1_w": w(ks[5], 4, 8),
            "bn1": bn(ks[6], 4),
            "fu": {"w": w(ks[7], 8, 8), "bn": bn(ks[8], 8)},
            "lfu": {"w": w(ks[9], 8, 8), "bn": bn(ks[10], 8)},
            "conv2_w": w(ks[11], 8, 4),
        },
    }


# ------------------------------ pure-JAX reference ------------------------------

def _ref_conv1x1(x, w):
    return jnp.einsum("bchw,oc->bohw", x, w)


def _ref_bn(x, gamma, beta, mean, var):
    s = gamma / jnp.sqrt(var + _EPS)
    return x * s[None, :, None, None] + (beta - mean * s)[None, :, None, None]


def _ref_fourier_unit(x, fu_p):
    b, c, h, w = x.shape
    ff = jnp.fft.rfft2(x, norm="ortho")
    fr = jnp.stack([jnp.real(ff), jnp.imag(ff)], axis=2).reshape(b, 2 * c, h, ff.shape[-1])
    fr = jnp.maximum(_ref_bn(_ref_conv1x1(fr, fu_p["w"]), *fu_p["bn"]), 0.0)
    fr = fr.reshape(b, c, 2, h, -1)
    comp = jax.lax.complex(fr[:, :, 0], fr[:, :, 1])
    return jnp.fft.irfft2(comp, s=(h, w), norm="ortho")


def _ref_spectral(x_g, p):
    x = jnp.maximum(_ref_bn(_ref_conv1x1(x_g, p["conv1_w"]), *p["bn1"]), 0.0)
    output = _ref_fourier_unit(x, p["fu"])
    n, c, h, w = x.shape
    xs = x[:, : c // 4]
    xs = jnp.concatenate(jnp.split(xs, 2, axis=2), axis=1)
    xs = jnp.concatenate(jnp.split(xs, 2, axis=3), axis=1)
    xs = _ref_fourier_unit(xs, p["lfu"])
    xs = jnp.tile(xs, (1, 1, 2, 2))
    return _ref_conv1x1(x + output + xs, p["conv2_w"])


def _ref_forward(x_l, x_g, p):
    out_l = _ref_bn(_ref_conv1x1(x_l, p["convl2l"]) + _ref_conv1x1(x_g, p["convg2l"]),
                    *p["bn_l"])
    out_g = _ref_bn(_ref_conv1x1(x_l, p["convl2g"]) + _ref_spectral(x_g, p["convg2g"]),
                    *p["bn_g"])
    return out_l, out_g


# ----------------------------------- main -----------------------------------

if __name__ == "__main__":
    key = jax.random.PRNGKey(0)
    kx, kp = jax.random.split(key)
    k1, k2 = jax.random.split(kx)
    # FFC input is a tuple (local branch, global branch): [B, in_cl, H, W], [B, in_cg, H, W]
    x_l = jax.random.normal(k1, (2, 8, 16, 16), jnp.float32)
    x_g = jax.random.normal(k2, (2, 8, 16, 16), jnp.float32)
    params = init_params(kp)

    out_l, out_g = jax.jit(ffc_bn_act_forward)(x_l, x_g, params)
    jax.block_until_ready((out_l, out_g))

    ref_l, ref_g = _ref_forward(x_l, x_g, params)
    assert out_l.shape == (2, 8, 16, 16) and out_g.shape == (2, 8, 16, 16)
    assert jnp.allclose(out_l, ref_l, atol=1e-3, rtol=1e-3)
    assert jnp.allclose(out_g, ref_g, atol=1e-3, rtol=1e-3)

    print("KERNEL_OK")
</pallas_src>

<mosaic_0001>
module attributes {stable_mosaic.version = 11 : i64} {
  func.func @_stage1_kernel(%arg0: memref<16x512xf32, #tpu.memory_space<vmem>>, %arg1: memref<16x16xf32, #tpu.memory_space<vmem>>, %arg2: memref<16x1xf32, #tpu.memory_space<vmem>>, %arg3: memref<16x512xf32, #tpu.memory_space<vmem>>) attributes {dimension_semantics = [], scalar_prefetch = 0 : i64, scratch_operands = 0 : i64, tpu.core_type = #tpu.core_type<tc>} {
    %c0 = arith.constant 0 : index
    %c0_0 = arith.constant 0 : index
    %0 = vector.load %arg1[%c0, %c0_0] : memref<16x16xf32, #tpu.memory_space<vmem>>, vector<16x16xf32>
    %c0_1 = arith.constant 0 : index
    %c0_2 = arith.constant 0 : index
    %1 = vector.load %arg0[%c0_1, %c0_2] : memref<16x512xf32, #tpu.memory_space<vmem>>, vector<16x512xf32>
    %cst = arith.constant dense<0.000000e+00> : vector<16x512xf32>
    %2 = tpu.matmul %0, %1, %cst {dimension_numbers = #tpu.dot_dimension_numbers<[1], [0], [0], [1], [0, 0, 1, 1], [], []>} : vector<16x16xf32>, vector<16x512xf32>, vector<16x512xf32> -> vector<16x512xf32>
    %c0_3 = arith.constant 0 : index
    %c0_4 = arith.constant 0 : index
    %3 = vector.load %arg2[%c0_3, %c0_4] : memref<16x1xf32, #tpu.memory_space<vmem>>, vector<16x1xf32>
    %4 = vector.broadcast %3 : vector<16x1xf32> to vector<16x512xf32>
    %5 = arith.addf %2, %4 : vector<16x512xf32>
    %6 = vector.extract_strided_slice %5 {offsets = [0, 0], sizes = [8, 512], strides = [1, 1]} : vector<16x512xf32> to vector<8x512xf32>
    %c0_5 = arith.constant 0 : index
    %c0_6 = arith.constant 0 : index
    %7 = vector.load %arg3[%c0_5, %c0_6] : memref<16x512xf32, #tpu.memory_space<vmem>>, vector<8x512xf32>
    tpu.vector_store %arg3[%c0_5, %c0_6], %6 {strides = array<i32>} : memref<16x512xf32, #tpu.memory_space<vmem>>, vector<8x512xf32>,
    %8 = vector.extract_strided_slice %5 {offsets = [8, 0], sizes = [8, 512], strides = [1, 1]} : vector<16x512xf32> to vector<8x512xf32>
    %cst_7 = arith.constant 0.000000e+00 : f32
    %9 = vector.broadcast %cst_7 : f32 to vector<8x512xf32>
    %10 = arith.maximumf %8, %9 : vector<8x512xf32>
    %c8 = arith.constant 8 : index
    %c0_8 = arith.constant 0 : index
    %11 = vector.load %arg3[%c8, %c0_8] : memref<16x512xf32, #tpu.memory_space<vmem>>, vector<8x512xf32>
    tpu.vector_store %arg3[%c8, %c0_8], %10 {strides = array<i32>} : memref<16x512xf32, #tpu.memory_space<vmem>>, vector<8x512xf32>,
    return
  }
}

module attributes {stable_mosaic.version = 11 : i64} {
  func.func @_fu_lfu_kernel(%arg0: memref<8x384xf32, #tpu.memory_space<vmem>>, %arg1: memref<8x128xf32, #tpu.memory_space<vmem>>, %arg2: memref<8x8xf32, #tpu.memory_space<vmem>>, %arg3: memref<8x8xf32, #tpu.memory_space<vmem>>, %arg4: memref<8x1xf32, #tpu.memory_space<vmem>>, %arg5: memref<8x1xf32, #tpu.memory_space<vmem>>, %arg6: memref<8x384xf32, #tpu.memory_space<vmem>>, %arg7: memref<8x128xf32, #tpu.memory_space<vmem>>) attributes {dimension_semantics = [], scalar_prefetch = 0 : i64, scratch_operands = 0 : i64, tpu.core_type = #tpu.core_type<tc>} {
    %c0 = arith.constant 0 : index
    %c0_0 = arith.constant 0 : index
    %0 = vector.load %arg2[%c0, %c0_0] : memref<8x8xf32, #tpu.memory_space<vmem>>, vector<8x8xf32>
    %c0_1 = arith.constant 0 : index
    %c0_2 = arith.constant 0 : index
    %1 = vector.load %arg0[%c0_1, %c0_2] : memref<8x384xf32, #tpu.memory_space<vmem>>, vector<8x384xf32>
    %cst = arith.constant dense<0.000000e+00> : vector<8x384xf32>
    %2 = tpu.matmul %0, %1, %cst {dimension_numbers = #tpu.dot_dimension_numbers<[1], [0], [0], [1], [0, 0, 1, 1], [], []>} : vector<8x8xf32>, vector<8x384xf32>, vector<8x384xf32> -> vector<8x384xf32>
    %c0_3 = arith.constant 0 : index
    %c0_4 = arith.constant 0 : index
    %3 = vector.load %arg4[%c0_3, %c0_4] : memref<8x1xf32, #tpu.memory_space<vmem>>, vector<8x1xf32>
    %4 = vector.broadcast %3 : vector<8x1xf32> to vector<8x384xf32>
    %5 = arith.addf %2, %4 : vector<8x384xf32>
    %cst_5 = arith.constant 0.000000e+00 : f32
    %6 = vector.broadcast %cst_5 : f32 to vector<8x384xf32>
    %7 = arith.maximumf %5, %6 : vector<8x384xf32>
    %c0_6 = arith.constant 0 : index
    %c0_7 = arith.constant 0 : index
    %8 = vector.load %arg6[%c0_6, %c0_7] : memref<8x384xf32, #tpu.memory_space<vmem>>, vector<8x384xf32>
    tpu.vector_store %arg6[%c0_6, %c0_7], %7 {strides = array<i32>} : memref<8x384xf32, #tpu.memory_space<vmem>>, vector<8x384xf32>,
    %c0_8 = arith.constant 0 : index
    %c0_9 = arith.constant 0 : index
    %9 = vector.load %arg3[%c0_8, %c0_9] : memref<8x8xf32, #tpu.memory_space<vmem>>, vector<8x8xf32>
    %c0_10 = arith.constant 0 : index
    %c0_11 = arith.constant 0 : index
    %10 = vector.load %arg1[%c0_10, %c0_11] : memref<8x128xf32, #tpu.memory_space<vmem>>, vector<8x128xf32>
    %cst_12 = arith.constant dense<0.000000e+00> : vector<8x128xf32>
    %11 = tpu.matmul %9, %10, %cst_12 {dimension_numbers = #tpu.dot_dimension_numbers<[1], [0], [0], [1], [0, 0, 1, 1], [], []>} : vector<8x8xf32>, vector<8x128xf32>, vector<8x128xf32> -> vector<8x128xf32>
    %c0_13 = arith.constant 0 : index
    %c0_14 = arith.constant 0 : index
    %12 = vector.load %arg5[%c0_13, %c0_14] : memref<8x1xf32, #tpu.memory_space<vmem>>, vector<8x1xf32>
    %13 = vector.broadcast %12 : vector<8x1xf32> to vector<8x128xf32>
    %14 = arith.addf %11, %13 : vector<8x128xf32>
    %cst_15 = arith.constant 0.000000e+00 : f32
    %15 = vector.broadcast %cst_15 : f32 to vector<8x128xf32>
    %16 = arith.maximumf %14, %15 : vector<8x128xf32>
    %c0_16 = arith.constant 0 : index
    %c0_17 = arith.constant 0 : index
    %17 = vector.load %arg7[%c0_16, %c0_17] : memref<8x128xf32, #tpu.memory_space<vmem>>, vector<8x128xf32>
    tpu.vector_store %arg7[%c0_16, %c0_17], %16 {strides = array<i32>} : memref<8x128xf32, #tpu.memory_space<vmem>>, vector<8x128xf32>,
    return
  }
}

module attributes {stable_mosaic.version = 11 : i64} {
  func.func @_stage2_kernel(%arg0: memref<4x512xf32, #tpu.memory_space<vmem>>, %arg1: memref<4x512xf32, #tpu.memory_space<vmem>>, %arg2: memref<4x512xf32, #tpu.memory_space<vmem>>, %arg3: memref<8x512xf32, #tpu.memory_space<vmem>>, %arg4: memref<8x4xf32, #tpu.memory_space<vmem>>, %arg5: memref<8x8xf32, #tpu.memory_space<vmem>>, %arg6: memref<8x1xf32, #tpu.memory_space<vmem>>, %arg7: memref<8x512xf32, #tpu.memory_space<vmem>>) attributes {dimension_semantics = [], scalar_prefetch = 0 : i64, scratch_operands = 0 : i64, tpu.core_type = #tpu.core_type<tc>} {
    %c0 = arith.constant 0 : index
    %c0_0 = arith.constant 0 : index
    %0 = vector.load %arg0[%c0, %c0_0] : memref<4x512xf32, #tpu.memory_space<vmem>>, vector<4x512xf32>
    %c0_1 = arith.constant 0 : index
    %c0_2 = arith.constant 0 : index
    %1 = vector.load %arg1[%c0_1, %c0_2] : memref<4x512xf32, #tpu.memory_space<vmem>>, vector<4x512xf32>
    %2 = arith.addf %0, %1 : vector<4x512xf32>
    %c0_3 = arith.constant 0 : index
    %c0_4 = arith.constant 0 : index
    %3 = vector.load %arg2[%c0_3, %c0_4] : memref<4x512xf32, #tpu.memory_space<vmem>>, vector<4x512xf32>
    %4 = arith.addf %2, %3 : vector<4x512xf32>
    %c0_5 = arith.constant 0 : index
    %c0_6 = arith.constant 0 : index
    %5 = vector.load %arg4[%c0_5, %c0_6] : memref<8x4xf32, #tpu.memory_space<vmem>>, vector<8x4xf32>
    %cst = arith.constant dense<0.000000e+00> : vector<8x512xf32>
    %6 = tpu.matmul %5, %4, %cst {dimension_numbers = #tpu.dot_dimension_numbers<[1], [0], [0], [1], [0, 0, 1, 1], [], []>} : vector<8x4xf32>, vector<4x512xf32>, vector<8x512xf32> -> vector<8x512xf32>
    %c0_7 = arith.constant 0 : index
    %c0_8 = arith.constant 0 : index
    %7 = vector.load %arg5[%c0_7, %c0_8] : memref<8x8xf32, #tpu.memory_space<vmem>>, vector<8x8xf32>
    %c0_9 = arith.constant 0 : index
    %c0_10 = arith.constant 0 : index
    %8 = vector.load %arg3[%c0_9, %c0_10] : memref<8x512xf32, #tpu.memory_space<vmem>>, vector<8x512xf32>
    %cst_11 = arith.constant dense<0.000000e+00> : vector<8x512xf32>
    %9 = tpu.matmul %7, %8, %cst_11 {dimension_numbers = #tpu.dot_dimension_numbers<[1], [0], [0], [1], [0, 0, 1, 1], [], []>} : vector<8x8xf32>, vector<8x512xf32>, vector<8x512xf32> -> vector<8x512xf32>
    %10 = arith.addf %6, %9 : vector<8x512xf32>
    %c0_12 = arith.constant 0 : index
    %c0_13 = arith.constant 0 : index
    %11 = vector.load %arg6[%c0_12, %c0_13] : memref<8x1xf32, #tpu.memory_space<vmem>>, vector<8x1xf32>
    %12 = vector.broadcast %11 : vector<8x1xf32> to vector<8x512xf32>
    %13 = arith.addf %10, %12 : vector<8x512xf32>
    %c0_14 = arith.constant 0 : index
    %c0_15 = arith.constant 0 : index
    %14 = vector.load %arg7[%c0_14, %c0_15] : memref<8x512xf32, #tpu.memory_space<vmem>>, vector<8x512xf32>
    tpu.vector_store %arg7[%c0_14, %c0_15], %13 {strides = array<i32>} : memref<8x512xf32, #tpu.memory_space<vmem>>, vector<8x512xf32>,
    return
  }
}

</mosaic_0001>

<llo_original>
// kernel: ffc_bn_act_forward.3
$region0: #{ffc_bn_act_forward.3}
  #allocation0 [shape = 'u32[]', space=smem, size = 0x4, offset = 0x4, fixed_abs, tag = 'smem constant byte address 0x4 - core index']
  #allocation1 [shape = 'u32[144,128]{1,0:T(1,128)}', space=vmem, size = 0x12000, scoped, tag = 'internal scratch']
  %s0 = inlined_call_operand.vmem [shape: f32[16,512], index: 0, kind: input, shape index: {}]
  %s1 = inlined_call_operand.vmem [shape: f32[16,16], index: 1, kind: input, shape index: {}]
  %s2 = inlined_call_operand.vmem [shape: f32[16,1], index: 2, kind: input, shape index: {}]
  %s3 = inlined_call_operand.vmem [shape: f32[16,512], index: 3, kind: output, shape index: {}]
  %s4 = sld [smem:[#allocation0]]
  $region22: #{ffc_bn_act_forward.3} parent=0
    _
  %s6 = ssub.s32 1, %s4
  %s7 = scalar_select 0, %s6, %s4
  // Predicated region
  $region2: #{ffc_bn_act_forward.3} parent=0 // pred_check
    _
  $region3: #{ffc_bn_act_forward.3} parent=0 // pred_check_branch
    %9 = sbr.rel (0) target = $region5
  $region4: #{ffc_bn_act_forward.3} parent=0 // pred_region
    _
  $region5: #{ffc_bn_act_forward.3} parent=0 // pred_fallthru
    _
  // Predicated region
  $region6: #{ffc_bn_act_forward.3} parent=0 // pred_check
    _
  $region7: #{ffc_bn_act_forward.3} parent=0 // pred_check_branch
    %11 = sbr.rel (0) target = $region9
  $region8: #{ffc_bn_act_forward.3} parent=0 // pred_region
    _
  $region9: #{ffc_bn_act_forward.3} parent=0 // pred_fallthru
    _
  // Predicated region
  $region10: #{ffc_bn_act_forward.3} parent=0 // pred_check
    _
  $region11: #{ffc_bn_act_forward.3} parent=0 // pred_check_branch
    %13 = sbr.rel (0) target = $region13
  $region12: #{ffc_bn_act_forward.3} parent=0 // pred_region
    _
  $region13: #{ffc_bn_act_forward.3} parent=0 // pred_fallthru
    _
  %v14 = vld [vmem:[%s1] sm:$0xff]
  %v15 = vld [vmem:[%s1 + $0x8] sm:$0xff]
  %v16 = vld [vmem:[%s0] sm:$0xff]
  %v17 = vld [vmem:[%s0 + $0x8] sm:$0xff]
  %v18 = vld [vmem:[%s0 + $0x10] sm:$0xff]
  %v19 = vld [vmem:[%s0 + $0x18] sm:$0xff]
  %v20 = vld [vmem:[%s0 + $0x20] sm:$0xff]
  %v21 = vld [vmem:[%s0 + $0x28] sm:$0xff]
  %v22 = vld [vmem:[%s0 + $0x30] sm:$0xff]
  %v23 = vld [vmem:[%s0 + $0x38] sm:$0xff]
  %v24 = vld [vmem:[%s2] sm:$0xff]
  %v25 = vld [vmem:[%s2 + $0x8] sm:$0xff]
  %27 = vset.pattern.permute.xlu0 0
  %28 = vperm.xlu0 %27, %v24
  %v29 = vpop.permute.xlu0 %28
  %32 = vset.pattern.permute.xlu0 0
  %33 = vperm.xlu0 %32, %v25
  %v34 = vpop.permute.xlu0 %33
  %vm36 = vcmask 130048
  %v38 = vsel %vm36, %v14, 0
  %v41 = vsel %vm36, %v15, 0
  %43 = vmatprep.subr.mxu0 %v17
  %44 = vmatpush1.msra.mxu0 %v16
  %45 = vmatprep.subr.mxu0 %v21
  %46 = vmatpush1.msra.mxu0 %v20
  %47 = vmatprep.subr.mxu0 0.0
  %48 = vmatpush1.msra.mxu0 0.0
  %49 = vmatprep.subr.mxu0 0.0
  %50 = vmatpush1.msra.mxu0 0.0
  %51 = vmatprep.subr.mxu0 0.0
  %52 = vmatpush1.msra.mxu0 0.0
  %53 = vmatprep.subr.mxu0 0.0
  %54 = vmatpush1.msra.mxu0 0.0
  %55 = vmatprep.subr.mxu0 0.0
  %56 = vmatpush1.msra.mxu0 0.0
  %57 = vmatprep.subr.mxu0 0.0
  %58 = vmatpush1.msra.mxu0 0.0
  %59 = vmatprep.subr.mxu0 0.0
  %60 = vmatpush1.msra.mxu0 0.0
  %61 = vmatprep.subr.mxu0 0.0
  %62 = vmatpush1.msra.mxu0 0.0
  %63 = vmatprep.subr.mxu0 0.0
  %64 = vmatpush1.msra.mxu0 0.0
  %65 = vmatprep.subr.mxu0 0.0
  %66 = vmatpush1.msra.mxu0 0.0
  %67 = vmatprep.subr.mxu0 0.0
  %68 = vmatpush1.msra.mxu0 0.0
  %69 = vmatprep.subr.mxu0 0.0
  %70 = vmatpush1.msra.mxu0 0.0
  %71 = vmatprep.subr.mxu0 0.0
  %72 = vmatpush1.msra.mxu0 0.0
  %73 = vmatprep.subr.mxu0 0.0
  %74 = vmatpush1.msra.mxu0 0.0
  %75 = vmatprep.subr.mxu0 0.0
  %76 = vmatpush1.msra.mxu0 0.0
  %77 = vmatprep.subr.mxu0 0.0
  %78 = vmatpush1.msra.mxu0 0.0
  %79 = vmatprep.subr.mxu0 0.0
  %80 = vmatpush1.msra.mxu0 0.0
  %81 = vmatprep.subr.mxu0 0.0
  %82 = vmatpush1.msra.mxu0 0.0
  %83 = vmatprep.subr.mxu0 0.0
  %84 = vmatpush1.msra.mxu0 0.0
  %85 = vmatprep.subr.mxu0 0.0
  %86 = vmatpush1.msra.mxu0 0.0
  %87 = vmatprep.subr.mxu0 0.0
  %88 = vmatpush1.msra.mxu0 0.0
  %89 = vmatprep.subr.mxu0 0.0
  %90 = vmatpush1.msra.mxu0 0.0
  %91 = vmatprep.subr.mxu0 0.0
  %92 = vmatpush1.msra.mxu0 0.0
  %93 = vmatprep.subr.mxu0 0.0
  %94 = vmatpush1.msra.mxu0 0.0
  %95 = vmatprep.subr.mxu0 0.0
  %96 = vmatpush1.msra.mxu0 0.0
  %97 = vmatprep.subr.mxu0 0.0
  %98 = vmatpush1.msra.mxu0 0.0
  %99 = vmatprep.subr.mxu0 0.0
  %100 = vmatpush1.msra.mxu0 0.0
  %101 = vmatprep.subr.mxu0 0.0
  %102 = vmatpush1.msra.mxu0 0.0
  %103 = vmatprep.subr.mxu0 0.0
  %104 = vmatpush1.msra.mxu0 0.0
  %105 = vmatprep.subr.mxu0 0.0
  %106 = vmatpush1.msra.mxu0 0.0
  %107 = vmatprep.mubr.f32.mxu0 0.0
  %108 = vmatmul.mubr.f32.gmra.mrb[0].mxu0 %v38
  %v109 = vpop.f32.mrb[0].mxu0
  %v110 = vadd.f32 %v29, %v109
  %v111 = vpop.f32.mrb[0].mxu0
  %v112 = vadd.f32 %v29, %v111
  %113 = vmatprep.mubr.f32.mxu0 0.0
  %114 = vmatmul.mubr.f32.gmra.mrb[0].mxu0 %v41
  %v115 = vpop.f32.mrb[0].mxu0
  %v116 = vadd.f32 %v34, %v115
  %v117 = vpop.f32.mrb[0].mxu0
  %v118 = vadd.f32 %v34, %v117
  %119 = vdwg.mxu0
  %120 = vmatprep.subr.mxu0 %v19
  %121 = vmatpush1.msra.mxu0 %v18
  %122 = vmatprep.subr.mxu0 %v23
  %123 = vmatpush1.msra.mxu0 %v22
  %124 = vmatprep.subr.mxu0 0.0
  %125 = vmatpush1.msra.mxu0 0.0
  %126 = vmatprep.subr.mxu0 0.0
  %127 = vmatpush1.msra.mxu0 0.0
  %128 = vmatprep.subr.mxu0 0.0
  %129 = vmatpush1.msra.mxu0 0.0
  %130 = vmatprep.subr.mxu0 0.0
  %131 = vmatpush1.msra.mxu0 0.0
  %132 = vmatprep.subr.mxu0 0.0
  %133 = vmatpush1.msra.mxu0 0.0
  %134 = vmatprep.subr.mxu0 0.0
  %135 = vmatpush1.msra.mxu0 0.0
  %136 = vmatprep.subr.mxu0 0.0
  %137 = vmatpush1.msra.mxu0 0.0
  %138 = vmatprep.subr.mxu0 0.0
  %139 = vmatpush1.msra.mxu0 0.0
  %140 = vmatprep.subr.mxu0 0.0
  %141 = vmatpush1.msra.mxu0 0.0
  %142 = vmatprep.subr.mxu0 0.0
  %143 = vmatpush1.msra.mxu0 0.0
  %144 = vmatprep.subr.mxu0 0.0
  %145 = vmatpush1.msra.mxu0 0.0
  %146 = vmatprep.subr.mxu0 0.0
  %147 = vmatpush1.msra.mxu0 0.0
  %148 = vmatprep.subr.mxu0 0.0
  %149 = vmatpush1.msra.mxu0 0.0
  %150 = vmatprep.subr.mxu0 0.0
  %151 = vmatpush1.msra.mxu0 0.0
  %152 = vmatprep.subr.mxu0 0.0
  %153 = vmatpush1.msra.mxu0 0.0
  %154 = vmatprep.subr.mxu0 0.0
  %155 = vmatpush1.msra.mxu0 0.0
  %156 = vmatprep.subr.mxu0 0.0
  %157 = vmatpush1.msra.mxu0 0.0
  %158 = vmatprep.subr.mxu0 0.0
  %159 = vmatpush1.msra.mxu0 0.0
  %160 = vmatprep.subr.mxu0 0.0
  %161 = vmatpush1.msra.mxu0 0.0
  %162 = vmatprep.subr.mxu0 0.0
  %163 = vmatpush1.msra.mxu0 0.0
  %164 = vmatprep.subr.mxu0 0.0
  %165 = vmatpush1.msra.mxu0 0.0
  %166 = vmatprep.subr.mxu0 0.0
  %167 = vmatpush1.msra.mxu0 0.0
  %168 = vmatprep.subr.mxu0 0.0
  %169 = vmatpush1.msra.mxu0 0.0
  %170 = vmatprep.subr.mxu0 0.0
  %171 = vmatpush1.msra.mxu0 0.0
  %172 = vmatprep.subr.mxu0 0.0
  %173 = vmatpush1.msra.mxu0 0.0
  %174 = vmatprep.subr.mxu0 0.0
  %175 = vmatpush1.msra.mxu0 0.0
  %176 = vmatprep.subr.mxu0 0.0
  %177 = vmatpush1.msra.mxu0 0.0
  %178 = vmatprep.subr.mxu0 0.0
  %179 = vmatpush1.msra.mxu0 0.0
  %180 = vmatprep.subr.mxu0 0.0
  %181 = vmatpush1.msra.mxu0 0.0
  %182 = vmatprep.subr.mxu0 0.0
  %183 = vmatpush1.msra.mxu0 0.0
  %184 = vmatprep.mubr.f32.mxu0 0.0
  %185 = vmatmul.mubr.f32.gmra.mrb[0].mxu0 %v38
  %v186 = vpop.f32.mrb[0].mxu0
  %v187 = vadd.f32 %v29, %v186
  %v188 = vpop.f32.mrb[0].mxu0
  %v189 = vadd.f32 %v29, %v188
  %190 = vmatprep.mubr.f32.mxu0 0.0
  %191 = vmatmul.mubr.f32.gmra.mrb[0].mxu0 %v41
  %v192 = vpop.f32.mrb[0].mxu0
  %v193 = vadd.f32 %v34, %v192
  %v194 = vpop.f32.mrb[0].mxu0
  %v195 = vadd.f32 %v34, %v194
  %196 = vdwg.mxu0
  %197 = vst [vmem:[%s3] sm:$0xff] %v110
  %198 = vst [vmem:[%s3 + $0x8] sm:$0xff] %v112
  %199 = vst [vmem:[%s3 + $0x10] sm:$0xff] %v187
  %200 = vst [vmem:[%s3 + $0x18] sm:$0xff] %v189
  %v201 = vmax.f32 %v116, 0.0
  %v202 = vmax.f32 %v118, 0.0
  %v203 = vmax.f32 %v193, 0.0
  %v204 = vmax.f32 %v195, 0.0
  %205 = vst [vmem:[%s3 + $0x20] sm:$0xff] %v201
  %206 = vst [vmem:[%s3 + $0x28] sm:$0xff] %v202
  %207 = vst [vmem:[%s3 + $0x30] sm:$0xff] %v203
  %208 = vst [vmem:[%s3 + $0x38] sm:$0xff] %v204
  // Predicated region
  $region14: #{ffc_bn_act_forward.3} parent=0 // pred_check
    _
  $region15: #{ffc_bn_act_forward.3} parent=0 // pred_check_branch
    %210 = sbr.rel (0) target = $region17
  $region16: #{ffc_bn_act_forward.3} parent=0 // pred_region
    _
  $region17: #{ffc_bn_act_forward.3} parent=0 // pred_fallthru
    _
  // Predicated region
  $region18: #{ffc_bn_act_forward.3} parent=0 // pred_check
    _
  $region19: #{ffc_bn_act_forward.3} parent=0 // pred_check_branch
    %212 = sbr.rel (0) target = $region21
  $region20: #{ffc_bn_act_forward.3} parent=0 // pred_region
    _
  $region21: #{ffc_bn_act_forward.3} parent=0 // pred_fallthru
    _

// kernel: ffc_bn_act_forward.4
$region0: #{ffc_bn_act_forward.4}
  #allocation0 [shape = 'u32[]', space=smem, size = 0x4, offset = 0x4, fixed_abs, tag = 'smem constant byte address 0x4 - core index']
  #allocation1 [shape = 'u32[144,128]{1,0:T(1,128)}', space=vmem, size = 0x12000, scoped, tag = 'internal scratch']
  %s0 = inlined_call_operand.vmem [shape: f32[8,384], index: 0, kind: input, shape index: {}]
  %s1 = inlined_call_operand.vmem [shape: f32[8,128], index: 1, kind: input, shape index: {}]
  %s2 = inlined_call_operand.vmem [shape: f32[8,8], index: 2, kind: input, shape index: {}]
  %s3 = inlined_call_operand.vmem [shape: f32[8,8], index: 3, kind: input, shape index: {}]
  %s4 = inlined_call_operand.vmem [shape: f32[8,1], index: 4, kind: input, shape index: {}]
  %s5 = inlined_call_operand.vmem [shape: f32[8,1], index: 5, kind: input, shape index: {}]
  %s6 = inlined_call_operand.vmem [shape: f32[8,384], index: 6, kind: output, shape index: {0}]
  %s7 = inlined_call_operand.vmem [shape: f32[8,128], index: 7, kind: output, shape index: {1}]
  %8 = xla_tuple %s6, %s7
  %s9 = sld [smem:[#allocation0]]
  $region42: #{ffc_bn_act_forward.4} parent=0
    _
  %s11 = ssub.s32 1, %s9
  %s12 = scalar_select 0, %s11, %s9
  // Predicated region
  $region2: #{ffc_bn_act_forward.4} parent=0 // pred_check
    _
  $region3: #{ffc_bn_act_forward.4} parent=0 // pred_check_branch
    %14 = sbr.rel (0) target = $region5
  $region4: #{ffc_bn_act_forward.4} parent=0 // pred_region
    _
  $region5: #{ffc_bn_act_forward.4} parent=0 // pred_fallthru
    _
  // Predicated region
  $region6: #{ffc_bn_act_forward.4} parent=0 // pred_check
    _
  $region7: #{ffc_bn_act_forward.4} parent=0 // pred_check_branch
    %16 = sbr.rel (0) target = $region9
  $region8: #{ffc_bn_act_forward.4} parent=0 // pred_region
    _
  $region9: #{ffc_bn_act_forward.4} parent=0 // pred_fallthru
    _
  // Predicated region
  $region10: #{ffc_bn_act_forward.4} parent=0 // pred_check
    _
  $region11: #{ffc_bn_act_forward.4} parent=0 // pred_check_branch
    %18 = sbr.rel (0) target = $region13
  $region12: #{ffc_bn_act_forward.4} parent=0 // pred_region
    _
  $region13: #{ffc_bn_act_forward.4} parent=0 // pred_fallthru
    _
  // Predicated region
  $region14: #{ffc_bn_act_forward.4} parent=0 // pred_check
    _
  $region15: #{ffc_bn_act_forward.4} parent=0 // pred_check_branch
    %20 = sbr.rel (0) target = $region17
  $region16: #{ffc_bn_act_forward.4} parent=0 // pred_region
    _
  $region17: #{ffc_bn_act_forward.4} parent=0 // pred_fallthru
    _
  // Predicated region
  $region18: #{ffc_bn_act_forward.4} parent=0 // pred_check
    _
  $region19: #{ffc_bn_act_forward.4} parent=0 // pred_check_branch
    %22 = sbr.rel (0) target = $region21
  $region20: #{ffc_bn_act_forward.4} parent=0 // pred_region
    _
  $region21: #{ffc_bn_act_forward.4} parent=0 // pred_fallthru
    _
  // Predicated region
  $region22: #{ffc_bn_act_forward.4} parent=0 // pred_check
    _
  $region23: #{ffc_bn_act_forward.4} parent=0 // pred_check_branch
    %24 = sbr.rel (0) target = $region25
  $region24: #{ffc_bn_act_forward.4} parent=0 // pred_region
    _
  $region25: #{ffc_bn_act_forward.4} parent=0 // pred_fallthru
    _
  %v25 = vld [vmem:[%s2] sm:$0xff]
  %v26 = vld [vmem:[%s0] sm:$0xff]
  %v27 = vld [vmem:[%s0 + $0x8] sm:$0xff]
  %v28 = vld [vmem:[%s0 + $0x10] sm:$0xff]
  %v29 = vld [vmem:[%s4] sm:$0xff]
  %31 = vset.pattern.permute.xlu0 0
  %32 = vperm.xlu0 %31, %v29
  %v33 = vpop.permute.xlu0 %32
  %vm35 = vcmask 64512
  %v37 = vsel %vm35, %v25, 0
  %39 = vmatprep.subr.mxu0 %v27
  %40 = vmatpush1.msra.mxu0 %v26
  %41 = vmatprep.subr.mxu0 0.0
  %42 = vmatpush1.msra.mxu0 0.0
  %43 = vmatprep.subr.mxu0 0.0
  %44 = vmatpush1.msra.mxu0 0.0
  %45 = vmatprep.subr.mxu0 0.0
  %46 = vmatpush1.msra.mxu0 0.0
  %47 = vmatprep.subr.mxu0 0.0
  %48 = vmatpush1.msra.mxu0 0.0
  %49 = vmatprep.subr.mxu0 0.0
  %50 = vmatpush1.msra.mxu0 0.0
  %51 = vmatprep.subr.mxu0 0.0
  %52 = vmatpush1.msra.mxu0 0.0
  %53 = vmatprep.subr.mxu0 0.0
  %54 = vmatpush1.msra.mxu0 0.0
  %55 = vmatprep.subr.mxu0 0.0
  %56 = vmatpush1.msra.mxu0 0.0
  %57 = vmatprep.subr.mxu0 0.0
  %58 = vmatpush1.msra.mxu0 0.0
  %59 = vmatprep.subr.mxu0 0.0
  %60 = vmatpush1.msra.mxu0 0.0
  %61 = vmatprep.subr.mxu0 0.0
  %62 = vmatpush1.msra.mxu0 0.0
  %63 = vmatprep.subr.mxu0 0.0
  %64 = vmatpush1.msra.mxu0 0.0
  %65 = vmatprep.subr.mxu0 0.0
  %66 = vmatpush1.msra.mxu0 0.0
  %67 = vmatprep.subr.mxu0 0.0
  %68 = vmatpush1.msra.mxu0 0.0
  %69 = vmatprep.subr.mxu0 0.0
  %70 = vmatpush1.msra.mxu0 0.0
  %71 = vmatprep.subr.mxu0 0.0
  %72 = vmatpush1.msra.mxu0 0.0
  %73 = vmatprep.subr.mxu0 0.0
  %74 = vmatpush1.msra.mxu0 0.0
  %75 = vmatprep.subr.mxu0 0.0
  %76 = vmatpush1.msra.mxu0 0.0
  %77 = vmatprep.subr.mxu0 0.0
  %78 = vmatpush1.msra.mxu0 0.0
  %79 = vmatprep.subr.mxu0 0.0
  %80 = vmatpush1.msra.mxu0 0.0
  %81 = vmatprep.subr.mxu0 0.0
  %82 = vmatpush1.msra.mxu0 0.0
  %83 = vmatprep.subr.mxu0 0.0
  %84 = vmatpush1.msra.mxu0 0.0
  %85 = vmatprep.subr.mxu0 0.0
  %86 = vmatpush1.msra.mxu0 0.0
  %87 = vmatprep.subr.mxu0 0.0
  %88 = vmatpush1.msra.mxu0 0.0
  %89 = vmatprep.subr.mxu0 0.0
  %90 = vmatpush1.msra.mxu0 0.0
  %91 = vmatprep.subr.mxu0 0.0
  %92 = vmatpush1.msra.mxu0 0.0
  %93 = vmatprep.subr.mxu0 0.0
  %94 = vmatpush1.msra.mxu0 0.0
  %95 = vmatprep.subr.mxu0 0.0
  %96 = vmatpush1.msra.mxu0 0.0
  %97 = vmatprep.subr.mxu0 0.0
  %98 = vmatpush1.msra.mxu0 0.0
  %99 = vmatprep.subr.mxu0 0.0
  %100 = vmatpush1.msra.mxu0 0.0
  %101 = vmatprep.subr.mxu0 0.0
  %102 = vmatpush1.msra.mxu0 0.0
  %103 = vmatprep.mubr.f32.mxu0 0.0
  %104 = vmatmul.mubr.f32.gmra.mrb[0].mxu0 %v37
  %v105 = vpop.f32.mrb[0].mxu0
  %v106 = vadd.f32 %v33, %v105
  %v107 = vpop.f32.mrb[0].mxu0
  %v108 = vadd.f32 %v33, %v107
  %109 = vdwg.mxu0
  %110 = vmatprep.subr.mxu0 0.0
  %111 = vmatpush1.msra.mxu0 %v28
  %112 = vmatprep.subr.mxu0 0.0
  %113 = vmatpush1.msra.mxu0 0.0
  %114 = vmatprep.subr.mxu0 0.0
  %115 = vmatpush1.msra.mxu0 0.0
  %116 = vmatprep.subr.mxu0 0.0
  %117 = vmatpush1.msra.mxu0 0.0
  %118 = vmatprep.subr.mxu0 0.0
  %119 = vmatpush1.msra.mxu0 0.0
  %120 = vmatprep.subr.mxu0 0.0
  %121 = vmatpush1.msra.mxu0 0.0
  %122 = vmatprep.subr.mxu0 0.0
  %123 = vmatpush1.msra.mxu0 0.0
  %124 = vmatprep.subr.mxu0 0.0
  %125 = vmatpush1.msra.mxu0 0.0
  %126 = vmatprep.subr.mxu0 0.0
  %127 = vmatpush1.msra.mxu0 0.0
  %128 = vmatprep.subr.mxu0 0.0
  %129 = vmatpush1.msra.mxu0 0.0
  %130 = vmatprep.subr.mxu0 0.0
  %131 = vmatpush1.msra.mxu0 0.0
  %132 = vmatprep.subr.mxu0 0.0
  %133 = vmatpush1.msra.mxu0 0.0
  %134 = vmatprep.subr.mxu0 0.0
  %135 = vmatpush1.msra.mxu0 0.0
  %136 = vmatprep.subr.mxu0 0.0
  %137 = vmatpush1.msra.mxu0 0.0
  %138 = vmatprep.subr.mxu0 0.0
  %139 = vmatpush1.msra.mxu0 0.0
  %140 = vmatprep.subr.mxu0 0.0
  %141 = vmatpush1.msra.mxu0 0.0
  %142 = vmatprep.subr.mxu0 0.0
  %143 = vmatpush1.msra.mxu0 0.0
  %144 = vmatprep.subr.mxu0 0.0
  %145 = vmatpush1.msra.mxu0 0.0
  %146 = vmatprep.subr.mxu0 0.0
  %147 = vmatpush1.msra.mxu0 0.0
  %148 = vmatprep.subr.mxu0 0.0
  %149 = vmatpush1.msra.mxu0 0.0
  %150 = vmatprep.subr.mxu0 0.0
  %151 = vmatpush1.msra.mxu0 0.0
  %152 = vmatprep.subr.mxu0 0.0
  %153 = vmatpush1.msra.mxu0 0.0
  %154 = vmatprep.subr.mxu0 0.0
  %155 = vmatpush1.msra.mxu0 0.0
  %156 = vmatprep.subr.mxu0 0.0
  %157 = vmatpush1.msra.mxu0 0.0
  %158 = vmatprep.subr.mxu0 0.0
  %159 = vmatpush1.msra.mxu0 0.0
  %160 = vmatprep.subr.mxu0 0.0
  %161 = vmatpush1.msra.mxu0 0.0
  %162 = vmatprep.subr.mxu0 0.0
  %163 = vmatpush1.msra.mxu0 0.0
  %164 = vmatprep.subr.mxu0 0.0
  %165 = vmatpush1.msra.mxu0 0.0
  %166 = vmatprep.subr.mxu0 0.0
  %167 = vmatpush1.msra.mxu0 0.0
  %168 = vmatprep.subr.mxu0 0.0
  %169 = vmatpush1.msra.mxu0 0.0
  %170 = vmatprep.subr.mxu0 0.0
  %171 = vmatpush1.msra.mxu0 0.0
  %172 = vmatprep.subr.mxu0 0.0
  %173 = vmatpush1.msra.mxu0 0.0
  %174 = vmatprep.mubr.f32.mxu0 0.0
  %175 = vmatmul.mubr.f32.gmra.mrb[0].mxu0 %v37
  %v176 = vpop.f32.mrb[0].mxu0
  %v177 = vadd.f32 %v33, %v176
  %v178 = vpop.f32.mrb[0].mxu0
  %179 = vdwg.mxu0
  %v180 = vmax.f32 %v106, 0.0
  %v181 = vmax.f32 %v108, 0.0
  %v182 = vmax.f32 %v177, 0.0
  %183 = vst [vmem:[%s6] sm:$0xff] %v180
  %184 = vst [vmem:[%s6 + $0x8] sm:$0xff] %v181
  %185 = vst [vmem:[%s6 + $0x10] sm:$0xff] %v182
  %v186 = vld [vmem:[%s3] sm:$0xff]
  %v187 = vld [vmem:[%s1] sm:$0xff]
  %v188 = vld [vmem:[%s5] sm:$0xff]
  %190 = vset.pattern.permute.xlu0 0
  %191 = vperm.xlu0 %190, %v188
  %v192 = vpop.permute.xlu0 %191
  %v195 = vsel %vm35, %v186, 0
  %197 = vmatprep.subr.mxu0 0.0
  %198 = vmatpush1.msra.mxu0 %v187
  %199 = vmatprep.subr.mxu0 0.0
  %200 = vmatpush1.msra.mxu0 0.0
  %201 = vmatprep.subr.mxu0 0.0
  %202 = vmatpush1.msra.mxu0 0.0
  %203 = vmatprep.subr.mxu0 0.0
  %204 = vmatpush1.msra.mxu0 0.0
  %205 = vmatprep.subr.mxu0 0.0
  %206 = vmatpush1.msra.mxu0 0.0
  %207 = vmatprep.subr.mxu0 0.0
  %208 = vmatpush1.msra.mxu0 0.0
  %209 = vmatprep.subr.mxu0 0.0
  %210 = vmatpush1.msra.mxu0 0.0
  %211 = vmatprep.subr.mxu0 0.0
  %212 = vmatpush1.msra.mxu0 0.0
  %213 = vmatprep.subr.mxu0 0.0
  %214 = vmatpush1.msra.mxu0 0.0
  %215 = vmatprep.subr.mxu0 0.0
  %216 = vmatpush1.msra.mxu0 0.0
  %217 = vmatprep.subr.mxu0 0.0
  %218 = vmatpush1.msra.mxu0 0.0
  %219 = vmatprep.subr.mxu0 0.0
  %220 = vmatpush1.msra.mxu0 0.0
  %221 = vmatprep.subr.mxu0 0.0
  %222 = vmatpush1.msra.mxu0 0.0
  %223 = vmatprep.subr.mxu0 0.0
  %224 = vmatpush1.msra.mxu0 0.0
  %225 = vmatprep.subr.mxu0 0.0
  %226 = vmatpush1.msra.mxu0 0.0
  %227 = vmatprep.subr.mxu0 0.0
  %228 = vmatpush1.msra.mxu0 0.0
  %229 = vmatprep.subr.mxu0 0.0
  %230 = vmatpush1.msra.mxu0 0.0
  %231 = vmatprep.subr.mxu0 0.0
  %232 = vmatpush1.msra.mxu0 0.0
  %233 = vmatprep.subr.mxu0 0.0
  %234 = vmatpush1.msra.mxu0 0.0
  %235 = vmatprep.subr.mxu0 0.0
  %236 = vmatpush1.msra.mxu0 0.0
  %237 = vmatprep.subr.mxu0 0.0
  %238 = vmatpush1.msra.mxu0 0.0
  %239 = vmatprep.subr.mxu0 0.0
  %240 = vmatpush1.msra.mxu0 0.0
  %241 = vmatprep.subr.mxu0 0.0
  %242 = vmatpush1.msra.mxu0 0.0
  %243 = vmatprep.subr.mxu0 0.0
  %244 = vmatpush1.msra.mxu0 0.0
  %245 = vmatprep.subr.mxu0 0.0
  %246 = vmatpush1.msra.mxu0 0.0
  %247 = vmatprep.subr.mxu0 0.0
  %248 = vmatpush1.msra.mxu0 0.0
  %249 = vmatprep.subr.mxu0 0.0
  %250 = vmatpush1.msra.mxu0 0.0
  %251 = vmatprep.subr.mxu0 0.0
  %252 = vmatpush1.msra.mxu0 0.0
  %253 = vmatprep.subr.mxu0 0.0
  %254 = vmatpush1.msra.mxu0 0.0
  %255 = vmatprep.subr.mxu0 0.0
  %256 = vmatpush1.msra.mxu0 0.0
  %257 = vmatprep.subr.mxu0 0.0
  %258 = vmatpush1.msra.mxu0 0.0
  %259 = vmatprep.subr.mxu0 0.0
  %260 = vmatpush1.msra.mxu0 0.0
  %261 = vmatprep.mubr.f32.mxu0 0.0
  %262 = vmatmul.mubr.f32.gmra.mrb[0].mxu0 %v195
  %v263 = vpop.f32.mrb[0].mxu0
  %v264 = vadd.f32 %v192, %v263
  %v265 = vpop.f32.mrb[0].mxu0
  %266 = vdwg.mxu0
  %v267 = vmax.f32 %v264, 0.0
  %268 = vst [vmem:[%s7] sm:$0xff] %v267
  // Predicated region
  $region26: #{ffc_bn_act_forward.4} parent=0 // pred_check
    _
  $region27: #{ffc_bn_act_forward.4} parent=0 // pred_check_branch
    %270 = sbr.rel (0) target = $region29
  $region28: #{ffc_bn_act_forward.4} parent=0 // pred_region
    _
  $region29: #{ffc_bn_act_forward.4} parent=0 // pred_fallthru
    _
  // Predicated region
  $region30: #{ffc_bn_act_forward.4} parent=0 // pred_check
    _
  $region31: #{ffc_bn_act_forward.4} parent=0 // pred_check_branch
    %272 = sbr.rel (0) target = $region33
  $region32: #{ffc_bn_act_forward.4} parent=0 // pred_region
    _
  $region33: #{ffc_bn_act_forward.4} parent=0 // pred_fallthru
    _
  // Predicated region
  $region34: #{ffc_bn_act_forward.4} parent=0 // pred_check
    _
  $region35: #{ffc_bn_act_forward.4} parent=0 // pred_check_branch
    %274 = sbr.rel (0) target = $region37
  $region36: #{ffc_bn_act_forward.4} parent=0 // pred_region
    _
  $region37: #{ffc_bn_act_forward.4} parent=0 // pred_fallthru
    _
  // Predicated region
  $region38: #{ffc_bn_act_forward.4} parent=0 // pred_check
    _
  $region39: #{ffc_bn_act_forward.4} parent=0 // pred_check_branch
    %276 = sbr.rel (0) target = $region41
  $region40: #{ffc_bn_act_forward.4} parent=0 // pred_region
    _
  $region41: #{ffc_bn_act_forward.4} parent=0 // pred_fallthru
    _

// kernel: reverse.1
$region0: #{reverse.1}
  %s0 = inlined_call_operand.vmem [shape: f32[4,2,8,3], index: 0, kind: input, shape index: {}]
  %s1 = inlined_call_operand.vmem [shape: f32[4,2,8,3], index: 1, kind: output, shape index: {}]
  $region1: #{reverse.1} parent=0
    #allocation0 [shape = 'u8[65536]{0}', space=vmem, size = 0x10000, scoped, tag = 'operand span for operand 0']
    #allocation1 [shape = 'u8[32768]{0}', space=vmem, size = 0x8000, scoped, tag = 'packed  for operand 0']
    #allocation2 [shape = 'u8[32768]{0}', space=vmem, size = 0x8000, scoped, tag = 'operand span for operand 1']
    #allocation3 [shape = 'u8[16384]{0}', space=vmem, size = 0x4000, scoped, tag = 'packed  for operand 1']
    %s2 = scalar_lea.vmem [#allocation1], 4
    // Predicated region
    $region2: #{reverse.1} parent=1 // pred_check
      _
    $region3: #{reverse.1} parent=1 // pred_check_branch
      %4 = sbr.rel (0) target = $region5
    $region4: #{reverse.1} parent=1 // pred_region
      // Predicated region
      $region6: #{reverse.1} parent=4 // pred_check
        _
      $region7: #{reverse.1} parent=4 // pred_check_branch
        %6 = sbr.rel target = $region9
      $region8: #{reverse.1} parent=4 // pred_region
        // Predicated region
        $region21: #{reverse.1} parent=8 // pred_check
          _
        $region22: #{reverse.1} parent=8 // pred_check_branch
          %35 = sbr.rel (0) target = $region24
        $region23: #{reverse.1} parent=8 // pred_region
          loop: start=0, step=1, limit=1
          $region25: #{reverse.1} parent=23 // loop_pre_header
            _
          $region26: #{reverse.1} parent=23 // loop_header
            %s37 = sphi 0, %s41
            %p38 = scmp.ge.s32.totalorder %s37, 1
            %s42 = sphi %s0, %s0
            %s43 = sphi %s2, %s2
          $region27: #{reverse.1} parent=23 // loop_header_branch
            %40 = sbr.rel (%p38) target = $region31
          $region28: #{reverse.1} parent=23 // loop_body
            _
          $region29: #{reverse.1} parent=23 // loop_footer
            %s41 = sadd.s32 1, %s37
          $region30: #{reverse.1} parent=23 // loop_footer_branch
            %36 = sbr.rel target = $region26
          $region31: #{reverse.1} parent=23 // loop_exit
            _
          loop: start=0, step=1, limit=1
          $region32: #{reverse.1} parent=23 // loop_pre_header
            _
          $region33: #{reverse.1} parent=23 // loop_header
            %s46 = sphi 0, %s50
            %p47 = scmp.ge.s32.totalorder %s46, 1
            %s51 = sphi %s0, %s0
            %s52 = sphi %s2, %s2
          $region34: #{reverse.1} parent=23 // loop_header_branch
            %49 = sbr.rel (%p47) target = $region38
          $region35: #{reverse.1} parent=23 // loop_body
            %v53 = vld [vmem:[%s51] sm:$0xf]
            %54 = vst [vmem:[%s52] sm:$0xf] %v53
            %v55 = vld [vmem:[%s51 + $0x4] sm:$0xf]
            %56 = vst [vmem:[%s52 + $0x8] sm:$0xf] %v55
            %v57 = vld [vmem:[%s51 + $0x8] sm:$0xf]
            %58 = vst [vmem:[%s52 + $0x10] sm:$0xf] %v57
            %v59 = vld [vmem:[%s51 + $0xc] sm:$0xf]
            %60 = vst [vmem:[%s52 + $0x18] sm:$0xf] %v59
            %v61 = vld [vmem:[%s51 + $0x10] sm:$0xf]
            %62 = vst [vmem:[%s52 + $0x20] sm:$0xf] %v61
            %v63 = vld [vmem:[%s51 + $0x14] sm:$0xf]
            %64 = vst [vmem:[%s52 + $0x28] sm:$0xf] %v63
            %v65 = vld [vmem:[%s51 + $0x18] sm:$0xf]
            %66 = vst [vmem:[%s52 + $0x30] sm:$0xf] %v65
            %v67 = vld [vmem:[%s51 + $0x1c] sm:$0xf]
            %68 = vst [vmem:[%s52 + $0x38] sm:$0xf] %v67
          $region36: #{reverse.1} parent=23 // loop_footer
            %s50 = sadd.s32 1, %s46
          $region37: #{reverse.1} parent=23 // loop_footer_branch
            %45 = sbr.rel target = $region33
          $region38: #{reverse.1} parent=23 // loop_exit
            _
        $region24: #{reverse.1} parent=8 // pred_fallthru
          _
      $region9: #{reverse.1} parent=4 // pred_fallthru
        _
      // Predicated region
      $region10: #{reverse.1} parent=4 // pred_check
        _
      $region11: #{reverse.1} parent=4 // pred_check_branch
        %8 = sbr.rel (0) target = $region13
      $region12: #{reverse.1} parent=4 // pred_region
        loop: start=0, step=1, limit=1
        $region14: #{reverse.1} parent=12 // loop_pre_header
          _
        $region15: #{reverse.1} parent=12 // loop_header
          %s11 = sphi 0, %s15
          %p12 = scmp.ge.s32.totalorder %s11, 1
          %s16 = sphi %s0, %s0
          %s17 = sphi %s2, %s2
        $region16: #{reverse.1} parent=12 // loop_header_branch
          %14 = sbr.rel (%p12) target = $region20
        $region17: #{reverse.1} parent=12 // loop_body
          %v18 = vld [vmem:[%s16] sm:$0xf]
          %19 = vst [vmem:[%s17] sm:$0xf] %v18
          %v20 = vld [vmem:[%s16 + $0x4] sm:$0xf]
          %21 = vst [vmem:[%s17 + $0x8] sm:$0xf] %v20
          %v22 = vld [vmem:[%s16 + $0x8] sm:$0xf]
          %23 = vst [vmem:[%s17 + $0x10] sm:$0xf] %v22
          %v24 = vld [vmem:[%s16 + $0xc] sm:$0xf]
          %25 = vst [vmem:[%s17 + $0x18] sm:$0xf] %v24
          %v26 = vld [vmem:[%s16 + $0x10] sm:$0xf]
          %27 = vst [vmem:[%s17 + $0x20] sm:$0xf] %v26
          %v28 = vld [vmem:[%s16 + $0x14] sm:$0xf]
          %29 = vst [vmem:[%s17 + $0x28] sm:$0xf] %v28
          %v30 = vld [vmem:[%s16 + $0x18] sm:$0xf]
          %31 = vst [vmem:[%s17 + $0x30] sm:$0xf] %v30
          %v32 = vld [vmem:[%s16 + $0x1c] sm:$0xf]
          %33 = vst [vmem:[%s17 + $0x38] sm:$0xf] %v32
        $region18: #{reverse.1} parent=12 // loop_footer
          %s15 = sadd.s32 1, %s11
        $region19: #{reverse.1} parent=12 // loop_footer_branch
          %10 = sbr.rel target = $region15
        $region20: #{reverse.1} parent=12 // loop_exit
          _
      $region13: #{reverse.1} parent=4 // pred_fallthru
        _
    $region5: #{reverse.1} parent=1 // pred_fallthru
      _
    %69 = vnop
    %s71 = sshllo.u32 0, 4
    %s72 = smul.addr 4, 15
    %s73 = scalar_lea.vmem [#allocation1], %s72
    %v74 = vld [vmem:[%s73] sm:%s71]
    %s75 = scalar_lea.vmem [#allocation0], 120
    %76 = vst [vmem:[%s75] sm:%s71] %v74
    %s77 = smul.addr 4, 14
    %s78 = scalar_lea.vmem [#allocation1], %s77
    %v79 = vld [vmem:[%s78] sm:%s71]
    %s80 = scalar_lea.vmem [#allocation0], 112
    %81 = vst [vmem:[%s80] sm:%s71] %v79
    %s82 = smul.addr 4, 13
    %s83 = scalar_lea.vmem [#allocation1], %s82
    %v84 = vld [vmem:[%s83] sm:%s71]
    %s85 = scalar_lea.vmem [#allocation0], 104
    %86 = vst [vmem:[%s85] sm:%s71] %v84
    %s87 = smul.addr 4, 12
    %s88 = scalar_lea.vmem [#allocation1], %s87
    %v89 = vld [vmem:[%s88] sm:%s71]
    %s90 = scalar_lea.vmem [#allocation0], 96
    %91 = vst [vmem:[%s90] sm:%s71] %v89
    %s92 = smul.addr 4, 11
    %s93 = scalar_lea.vmem [#allocation1], %s92
    %v94 = vld [vmem:[%s93] sm:%s71]
    %s95 = scalar_lea.vmem [#allocation0], 88
    %96 = vst [vmem:[%s95] sm:%s71] %v94
    %s97 = smul.addr 4, 10
    %s98 = scalar_lea.vmem [#allocation1], %s97
    %v99 = vld [vmem:[%s98] sm:%s71]
    %s100 = scalar_lea.vmem [#allocation0], 80
    %101 = vst [vmem:[%s100] sm:%s71] %v99
    %s102 = smul.addr 4, 9
    %s103 = scalar_lea.vmem [#allocation1], %s102
    %v104 = vld [vmem:[%s103] sm:%s71]
    %s105 = scalar_lea.vmem [#allocation0], 72
    %106 = vst [vmem:[%s105] sm:%s71] %v104
    %s107 = smul.addr 4, 8
    %s108 = scalar_lea.vmem [#allocation1], %s107
    %v109 = vld [vmem:[%s108] sm:%s71]
    %s110 = scalar_lea.vmem [#allocation0], 64
    %111 = vst [vmem:[%s110] sm:%s71] %v109
    %s112 = smul.addr 4, 7
    %s113 = scalar_lea.vmem [#allocation1], %s112
    %v114 = vld [vmem:[%s113] sm:%s71]
    %s115 = scalar_lea.vmem [#allocation0], 56
    %116 = vst [vmem:[%s115] sm:%s71] %v114
    %s117 = smul.addr 4, 6
    %s118 = scalar_lea.vmem [#allocation1], %s117
    %v119 = vld [vmem:[%s118] sm:%s71]
    %s120 = scalar_lea.vmem [#allocation0], 48
    %121 = vst [vmem:[%s120] sm:%s71] %v119
    %s122 = smul.addr 4, 5
    %s123 = scalar_lea.vmem [#allocation1], %s122
    %v124 = vld [vmem:[%s123] sm:%s71]
    %s125 = scalar_lea.vmem [#allocation0], 40
    %126 = vst [vmem:[%s125] sm:%s71] %v124
    %s127 = smul.addr 4, 4
    %s128 = scalar_lea.vmem [#allocation1], %s127
    %v129 = vld [vmem:[%s128] sm:%s71]
    %s130 = scalar_lea.vmem [#allocation0], 32
    %131 = vst [vmem:[%s130] sm:%s71] %v129
    %s132 = smul.addr 4, 3
    %s133 = scalar_lea.vmem [#allocation1], %s132
    %v134 = vld [vmem:[%s133] sm:%s71]
    %s135 = scalar_lea.vmem [#allocation0], 24
    %136 = vst [vmem:[%s135] sm:%s71] %v134
    %s137 = smul.addr 4, 2
    %s138 = scalar_lea.vmem [#allocation1], %s137
    %v139 = vld [vmem:[%s138] sm:%s71]
    %s140 = scalar_lea.vmem [#allocation0], 16
    %141 = vst [vmem:[%s140] sm:%s71] %v139
    %s142 = scalar_lea.vmem [#allocation1], 4
    %v143 = vld [vmem:[%s142] sm:%s71]
    %s144 = scalar_lea.vmem [#allocation0], 8
    %145 = vst [vmem:[%s144] sm:%s71] %v143
    %v146 = vld [vmem:[#allocation1] sm:%s71]
    %147 = vst [vmem:[#allocation0] sm:%s71] %v146
    %s148 = scalar_lea.vmem [#allocation0], 7
    %v149 = vld [vmem:[%s148] ss:$-1 sm:$0xff]
    %v150 = vrot.slane %v149, 5
    %151 = vst [vmem:[#allocation2] sm:$0xff] %v150
    %s152 = scalar_lea.vmem [#allocation0], 8
    %s153 = scalar_lea.vmem %s152, 7 [#allocation0]
    %v154 = vld [vmem:[%s153] ss:$-1 sm:$0xff]
    %v155 = vrot.slane %v154, 5
    %v156 = vlaneseq
    %v157 = vshrl.u32 %v156, 7
    %vm158 = vcmp.lt.s32.totalorder %v157, 3
    %159 = vst.msk [vmem:[#allocation2] sm:$0xff] %vm158, %v155
    %s160 = scalar_lea.vmem [#allocation2], 8
    %s161 = scalar_lea.vmem [#allocation0], 16
    %s162 = scalar_lea.vmem %s161, 7 [#allocation0]
    %v163 = vld [vmem:[%s162] ss:$-1 sm:$0xff]
    %v164 = vrot.slane %v163, 5
    %165 = vst [vmem:[%s160] sm:$0xff] %v164
    %s166 = scalar_lea.vmem %s161, 8 [#allocation0]
    %s167 = scalar_lea.vmem %s166, 7 [#allocation0]
    %v168 = vld [vmem:[%s167] ss:$-1 sm:$0xff]
    %v169 = vrot.slane %v168, 5
    %v170 = vlaneseq
    %v171 = vshrl.u32 %v170, 7
    %vm172 = vcmp.lt.s32.totalorder %v171, 3
    %173 = vst.msk [vmem:[%s160] sm:$0xff] %vm172, %v169
    %s174 = scalar_lea.vmem [#allocation2], 16
    %s175 = scalar_lea.vmem [#allocation0], 32
    %s176 = scalar_lea.vmem %s175, 7 [#allocation0]
    %v177 = vld [vmem:[%s176] ss:$-1 sm:$0xff]
    %v178 = vrot.slane %v177, 5
    %179 = vst [vmem:[%s174] sm:$0xff] %v178
    %s180 = scalar_lea.vmem %s175, 8 [#allocation0]
    %s181 = scalar_lea.vmem %s180, 7 [#allocation0]
    %v182 = vld [vmem:[%s181] ss:$-1 sm:$0xff]
    %v183 = vrot.slane %v182, 5
    %v184 = vlaneseq
    %v185 = vshrl.u32 %v184, 7
    %vm186 = vcmp.lt.s32.totalorder %v185, 3
    %187 = vst.msk [vmem:[%s174] sm:$0xff] %vm186, %v183
    %s188 = scalar_lea.vmem [#allocation2], 24
    %s189 = scalar_lea.vmem [#allocation0], 48
    %s190 = scalar_lea.vmem %s189, 7 [#allocation0]
    %v191 = vld [vmem:[%s190] ss:$-1 sm:$0xff]
    %v192 = vrot.slane %v191, 5
    %193 = vst [vmem:[%s188] sm:$0xff] %v192
    %s194 = scalar_lea.vmem %s189, 8 [#allocation0]
    %s195 = scalar_lea.vmem %s194, 7 [#allocation0]
    %v196 = vld [vmem:[%s195] ss:$-1 sm:$0xff]
    %v197 = vrot.slane %v196, 5
    %v198 = vlaneseq
    %v199 = vshrl.u32 %v198, 7
    %vm200 = vcmp.lt.s32.totalorder %v199, 3
    %201 = vst.msk [vmem:[%s188] sm:$0xff] %vm200, %v197
    %s202 = scalar_lea.vmem [#allocation2], 32
    %s203 = scalar_lea.vmem [#allocation0], 64
    %s204 = scalar_lea.vmem %s203, 7 [#allocation0]
    %v205 = vld [vmem:[%s204] ss:$-1 sm:$0xff]
    %v206 = vrot.slane %v205, 5
    %207 = vst [vmem:[%s202] sm:$0xff] %v206
    %s208 = scalar_lea.vmem %s203, 8 [#allocation0]
    %s209 = scalar_lea.vmem %s208, 7 [#allocation0]
    %v210 = vld [vmem:[%s209] ss:$-1 sm:$0xff]
    %v211 = vrot.slane %v210, 5
    %v212 = vlaneseq
    %v213 = vshrl.u32 %v212, 7
    %vm214 = vcmp.lt.s32.totalorder %v213, 3
    %215 = vst.msk [vmem:[%s202] sm:$0xff] %vm214, %v211
    %s216 = scalar_lea.vmem [#allocation2], 40
    %s217 = scalar_lea.vmem [#allocation0], 80
    %s218 = scalar_lea.vmem %s217, 7 [#allocation0]
    %v219 = vld [vmem:[%s218] ss:$-1 sm:$0xff]
    %v220 = vrot.slane %v219, 5
    %221 = vst [vmem:[%s216] sm:$0xff] %v220
    %s222 = scalar_lea.vmem %s217, 8 [#allocation0]
    %s223 = scalar_lea.vmem %s222, 7 [#allocation0]
    %v224 = vld [vmem:[%s223] ss:$-1 sm:$0xff]
    %v225 = vrot.slane %v224, 5
    %v226 = vlaneseq
    %v227 = vshrl.u32 %v226, 7
    %vm228 = vcmp.lt.s32.totalorder %v227, 3
    %229 = vst.msk [vmem:[%s216] sm:$0xff] %vm228, %v225
    %s230 = scalar_lea.vmem [#allocation2], 48
    %s231 = scalar_lea.vmem [#allocation0], 96
    %s232 = scalar_lea.vmem %s231, 7 [#allocation0]
    %v233 = vld [vmem:[%s232] ss:$-1 sm:$0xff]
    %v234 = vrot.slane %v233, 5
    %235 = vst [vmem:[%s230] sm:$0xff] %v234
    %s236 = scalar_lea.vmem %s231, 8 [#allocation0]
    %s237 = scalar_lea.vmem %s236, 7 [#allocation0]
    %v238 = vld [vmem:[%s237] ss:$-1 sm:$0xff]
    %v239 = vrot.slane %v238, 5
    %v240 = vlaneseq
    %v241 = vshrl.u32 %v240, 7
    %vm242 = vcmp.lt.s32.totalorder %v241, 3
    %243 = vst.msk [vmem:[%s230] sm:$0xff] %vm242, %v239
    %s244 = scalar_lea.vmem [#allocation2], 56
    %s245 = scalar_lea.vmem [#allocation0], 112
    %s246 = scalar_lea.vmem %s245, 7 [#allocation0]
    %v247 = vld [vmem:[%s246] ss:$-1 sm:$0xff]
    %v248 = vrot.slane %v247, 5
    %249 = vst [vmem:[%s244] sm:$0xff] %v248
    %s250 = scalar_lea.vmem %s245, 8 [#allocation0]
    %s251 = scalar_lea.vmem %s250, 7 [#allocation0]
    %v252 = vld [vmem:[%s251] ss:$-1 sm:$0xff]
    %v253 = vrot.slane %v252, 5
    %v254 = vlaneseq
    %v255 = vshrl.u32 %v254, 7
    %vm256 = vcmp.lt.s32.totalorder %v255, 3
    %257 = vst.msk [vmem:[%s244] sm:$0xff] %vm256, %v253
    %s259 = sshllo.u32 0, 4
    %v261 = vld [vmem:[#allocation2] sm:%s259]
    %s262 = sshllo.u32 0, 4
    %263 = vst [vmem:[#allocation3] sm:%s262] %v261
    %s264 = scalar_lea.vmem [#allocation2], 8
    %v265 = vld [vmem:[%s264] sm:%s259]
    %s266 = sshllo.u32 0, 4
    %s267 = scalar_lea.vmem [#allocation3], 4
    %268 = vst [vmem:[%s267] sm:%s266] %v265
    %s269 = scalar_lea.vmem [#allocation2], 16
    %v270 = vld [vmem:[%s269] sm:%s259]
    %s271 = sshllo.u32 0, 4
    %s272 = smul.addr 4, 2
    %s273 = scalar_lea.vmem [#allocation3], %s272
    %274 = vst [vmem:[%s273] sm:%s271] %v270
    %s275 = scalar_lea.vmem [#allocation2], 24
    %v276 = vld [vmem:[%s275] sm:%s259]
    %s277 = sshllo.u32 0, 4
    %s278 = smul.addr 4, 3
    %s279 = scalar_lea.vmem [#allocation3], %s278
    %280 = vst [vmem:[%s279] sm:%s277] %v276
    %s281 = scalar_lea.vmem [#allocation2], 32
    %v282 = vld [vmem:[%s281] sm:%s259]
    %s283 = sshllo.u32 0, 4
    %s284 = smul.addr 4, 4
    %s285 = scalar_lea.vmem [#allocation3], %s284
    %286 = vst [vmem:[%s285] sm:%s283] %v282
    %s287 = scalar_lea.vmem [#allocation2], 40
    %v288 = vld [vmem:[%s287] sm:%s259]
    %s289 = sshllo.u32 0, 4
    %s290 = smul.addr 4, 5
    %s291 = scalar_lea.vmem [#allocation3], %s290
    %292 = vst [vmem:[%s291] sm:%s289] %v288
    %s293 = scalar_lea.vmem [#allocation2], 48
    %v294 = vld [vmem:[%s293] sm:%s259]
    %s295 = sshllo.u32 0, 4
    %s296 = smul.addr 4, 6
    %s297 = scalar_lea.vmem [#allocation3], %s296
    %298 = vst [vmem:[%s297] sm:%s295] %v294
    %s299 = scalar_lea.vmem [#allocation2], 56
    %v300 = vld [vmem:[%s299] sm:%s259]
    %s301 = sshllo.u32 0, 4
    %s302 = smul.addr 4, 7
    %s303 = scalar_lea.vmem [#allocation3], %s302
    %304 = vst [vmem:[%s303] sm:%s301] %v300
    // Predicated region
    $region39: #{reverse.1} parent=1 // pred_check
      _
    $region40: #{reverse.1} parent=1 // pred_check_branch
      %306 = sbr.rel (0) target = $region42
    $region41: #{reverse.1} parent=1 // pred_region
      // Predicated region
      $region43: #{reverse.1} parent=41 // pred_check
        _
      $region44: #{reverse.1} parent=41 // pred_check_branch
        %308 = sbr.rel target = $region46
      $region45: #{reverse.1} parent=41 // pred_region
        // Predicated region
        $region58: #{reverse.1} parent=45 // pred_check
          _
        $region59: #{reverse.1} parent=45 // pred_check_branch
          %337 = sbr.rel (0) target = $region61
        $region60: #{reverse.1} parent=45 // pred_region
          loop: start=0, step=1, limit=1
          $region62: #{reverse.1} parent=60 // loop_pre_header
            _
          $region63: #{reverse.1} parent=60 // loop_header
            %s339 = sphi 0, %s343
            %p340 = scmp.ge.s32.totalorder %s339, 1
            %s344 = sphi [#allocation3], [#allocation3]
            %s345 = sphi %s1, %s1
          $region64: #{reverse.1} parent=60 // loop_header_branch
            %342 = sbr.rel (%p340) target = $region68
          $region65: #{reverse.1} parent=60 // loop_body
            _
          $region66: #{reverse.1} parent=60 // loop_footer
            %s343 = sadd.s32 1, %s339
          $region67: #{reverse.1} parent=60 // loop_footer_branch
            %338 = sbr.rel target = $region63
          $region68: #{reverse.1} parent=60 // loop_exit
            _
          loop: start=0, step=1, limit=1
          $region69: #{reverse.1} parent=60 // loop_pre_header
            _
          $region70: #{reverse.1} parent=60 // loop_header
            %s348 = sphi 0, %s352
            %p349 = scmp.ge.s32.totalorder %s348, 1
            %s353 = sphi [#allocation3], [#allocation3]
            %s354 = sphi %s1, %s1
          $region71: #{reverse.1} parent=60 // loop_header_branch
            %351 = sbr.rel (%p349) target = $region75
          $region72: #{reverse.1} parent=60 // loop_body
            %v355 = vld [vmem:[%s353] sm:$0xf]
            %356 = vst [vmem:[%s354] sm:$0xf] %v355
            %v357 = vld [vmem:[%s353 + $0x4] sm:$0xf]
            %358 = vst [vmem:[%s354 + $0x4] sm:$0xf] %v357
            %v359 = vld [vmem:[%s353 + $0x8] sm:$0xf]
            %360 = vst [vmem:[%s354 + $0x8] sm:$0xf] %v359
            %v361 = vld [vmem:[%s353 + $0xc] sm:$0xf]
            %362 = vst [vmem:[%s354 + $0xc] sm:$0xf] %v361
            %v363 = vld [vmem:[%s353 + $0x10] sm:$0xf]
            %364 = vst [vmem:[%s354 + $0x10] sm:$0xf] %v363
            %v365 = vld [vmem:[%s353 + $0x14] sm:$0xf]
            %366 = vst [vmem:[%s354 + $0x14] sm:$0xf] %v365
            %v367 = vld [vmem:[%s353 + $0x18] sm:$0xf]
            %368 = vst [vmem:[%s354 + $0x18] sm:$0xf] %v367
            %v369 = vld [vmem:[%s353 + $0x1c] sm:$0xf]
            %370 = vst [vmem:[%s354 + $0x1c] sm:$0xf] %v369
          $region73: #{reverse.1} parent=60 // loop_footer
            %s352 = sadd.s32 1, %s348
          $region74: #{reverse.1} parent=60 // loop_footer_branch
            %347 = sbr.rel target = $region70
          $region75: #{reverse.1} parent=60 // loop_exit
            _
        $region61: #{reverse.1} parent=45 // pred_fallthru
          _
      $region46: #{reverse.1} parent=41 // pred_fallthru
        _
      // Predicated region
      $region47: #{reverse.1} parent=41 // pred_check
        _
      $region48: #{reverse.1} parent=41 // pred_check_branch
        %310 = sbr.rel (0) target = $region50
      $region49: #{reverse.1} parent=41 // pred_region
        loop: start=0, step=1, limit=1
        $region51: #{reverse.1} parent=49 // loop_pre_header
          _
        $region52: #{reverse.1} parent=49 // loop_header
          %s313 = sphi 0, %s317
          %p314 = scmp.ge.s32.totalorder %s313, 1
          %s318 = sphi [#allocation3], [#allocation3]
          %s319 = sphi %s1, %s1
        $region53: #{reverse.1} parent=49 // loop_header_branch
          %316 = sbr.rel (%p314) target = $region57
        $region54: #{reverse.1} parent=49 // loop_body
          %v320 = vld [vmem:[%s318] sm:$0xf]
          %321 = vst [vmem:[%s319] sm:$0xf] %v320
          %v322 = vld [vmem:[%s318 + $0x4] sm:$0xf]
          %323 = vst [vmem:[%s319 + $0x4] sm:$0xf] %v322
          %v324 = vld [vmem:[%s318 + $0x8] sm:$0xf]
          %325 = vst [vmem:[%s319 + $0x8] sm:$0xf] %v324
          %v326 = vld [vmem:[%s318 + $0xc] sm:$0xf]
          %327 = vst [vmem:[%s319 + $0xc] sm:$0xf] %v326
          %v328 = vld [vmem:[%s318 + $0x10] sm:$0xf]
          %329 = vst [vmem:[%s319 + $0x10] sm:$0xf] %v328
          %v330 = vld [vmem:[%s318 + $0x14] sm:$0xf]
          %331 = vst [vmem:[%s319 + $0x14] sm:$0xf] %v330
          %v332 = vld [vmem:[%s318 + $0x18] sm:$0xf]
          %333 = vst [vmem:[%s319 + $0x18] sm:$0xf] %v332
          %v334 = vld [vmem:[%s318 + $0x1c] sm:$0xf]
          %335 = vst [vmem:[%s319 + $0x1c] sm:$0xf] %v334
        $region55: #{reverse.1} parent=49 // loop_footer
          %s317 = sadd.s32 1, %s313
        $region56: #{reverse.1} parent=49 // loop_footer_branch
          %312 = sbr.rel target = $region52
        $region57: #{reverse.1} parent=49 // loop_exit
          _
      $region50: #{reverse.1} parent=41 // pred_fallthru
        _
    $region42: #{reverse.1} parent=1 // pred_fallthru
      _
    %371 = vnop

// kernel: tile.9
$region0: #{tile.9}
  %s0 = inlined_call_operand.vmem [shape: f32[4,2,2,8,2,8], index: 0, kind: input, shape index: {}]
  %s1 = inlined_call_operand.vmem [shape: f32[4,512], index: 1, kind: output, shape index: {}]
  $region1: #{tile.9} parent=0
    #allocation0 [shape = 'u8[16384]{0}', space=vmem, size = 0x4000, scoped, tag = 'scoped mem for output reshape']
    #allocation1 [shape = 'u8[524288]{0}', space=vmem, size = 0x80000, scoped, tag = 'scoped mem for input reshape']
    %s3 = sshllo.u32 0, 2
    %s4 = smul.addr 2, 127
    %s5 = scalar_lea.vmem %s0, %s4
    %v6 = vld [vmem:[%s5] sm:%s3]
    %s7 = scalar_lea.vmem [#allocation1], 1016
    %8 = vst [vmem:[%s7] sm:%s3] %v6
    %s9 = smul.addr 2, 126
    %s10 = scalar_lea.vmem %s0, %s9
    %v11 = vld [vmem:[%s10] sm:%s3]
    %s12 = scalar_lea.vmem [#allocation1], 1008
    %13 = vst [vmem:[%s12] sm:%s3] %v11
    %s14 = smul.addr 2, 125
    %s15 = scalar_lea.vmem %s0, %s14
    %v16 = vld [vmem:[%s15] sm:%s3]
    %s17 = scalar_lea.vmem [#allocation1], 1000
    %18 = vst [vmem:[%s17] sm:%s3] %v16
    %s19 = smul.addr 2, 124
    %s20 = scalar_lea.vmem %s0, %s19
    %v21 = vld [vmem:[%s20] sm:%s3]
    %s22 = scalar_lea.vmem [#allocation1], 992
    %23 = vst [vmem:[%s22] sm:%s3] %v21
    %s24 = smul.addr 2, 123
    %s25 = scalar_lea.vmem %s0, %s24
    %v26 = vld [vmem:[%s25] sm:%s3]
    %s27 = scalar_lea.vmem [#allocation1], 984
    %28 = vst [vmem:[%s27] sm:%s3] %v26
    %s29 = smul.addr 2, 122
    %s30 = scalar_lea.vmem %s0, %s29
    %v31 = vld [vmem:[%s30] sm:%s3]
    %s32 = scalar_lea.vmem [#allocation1], 976
    %33 = vst [vmem:[%s32] sm:%s3] %v31
    %s34 = smul.addr 2, 121
    %s35 = scalar_lea.vmem %s0, %s34
    %v36 = vld [vmem:[%s35] sm:%s3]
    %s37 = scalar_lea.vmem [#allocation1], 968
    %38 = vst [vmem:[%s37] sm:%s3] %v36
    %s39 = smul.addr 2, 120
    %s40 = scalar_lea.vmem %s0, %s39
    %v41 = vld [vmem:[%s40] sm:%s3]
    %s42 = scalar_lea.vmem [#allocation1], 960
    %43 = vst [vmem:[%s42] sm:%s3] %v41
    %s44 = smul.addr 2, 119
    %s45 = scalar_lea.vmem %s0, %s44
    %v46 = vld [vmem:[%s45] sm:%s3]
    %s47 = scalar_lea.vmem [#allocation1], 952
    %48 = vst [vmem:[%s47] sm:%s3] %v46
    %s49 = smul.addr 2, 118
    %s50 = scalar_lea.vmem %s0, %s49
    %v51 = vld [vmem:[%s50] sm:%s3]
    %s52 = scalar_lea.vmem [#allocation1], 944
    %53 = vst [vmem:[%s52] sm:%s3] %v51
    %s54 = smul.addr 2, 117
    %s55 = scalar_lea.vmem %s0, %s54
    %v56 = vld [vmem:[%s55] sm:%s3]
    %s57 = scalar_lea.vmem [#allocation1], 936
    %58 = vst [vmem:[%s57] sm:%s3] %v56
    %s59 = smul.addr 2, 116
    %s60 = scalar_lea.vmem %s0, %s59
    %v61 = vld [vmem:[%s60] sm:%s3]
    %s62 = scalar_lea.vmem [#allocation1], 928
    %63 = vst [vmem:[%s62] sm:%s3] %v61
    %s64 = smul.addr 2, 115
    %s65 = scalar_lea.vmem %s0, %s64
    %v66 = vld [vmem:[%s65] sm:%s3]
    %s67 = scalar_lea.vmem [#allocation1], 920
    %68 = vst [vmem:[%s67] sm:%s3] %v66
    %s69 = smul.addr 2, 114
    %s70 = scalar_lea.vmem %s0, %s69
    %v71 = vld [vmem:[%s70] sm:%s3]
    %s72 = scalar_lea.vmem [#allocation1], 912
    %73 = vst [vmem:[%s72] sm:%s3] %v71
    %s74 = smul.addr 2, 113
    %s75 = scalar_lea.vmem %s0, %s74
    %v76 = vld [vmem:[%s75] sm:%s3]
    %s77 = scalar_lea.vmem [#allocation1], 904
    %78 = vst [vmem:[%s77] sm:%s3] %v76
    %s79 = smul.addr 2, 112
    %s80 = scalar_lea.vmem %s0, %s79
    %v81 = vld [vmem:[%s80] sm:%s3]
    %s82 = scalar_lea.vmem [#allocation1], 896
    %83 = vst [vmem:[%s82] sm:%s3] %v81
    %s84 = smul.addr 2, 111
    %s85 = scalar_lea.vmem %s0, %s84
    %v86 = vld [vmem:[%s85] sm:%s3]
    %s87 = scalar_lea.vmem [#allocation1], 888
    %88 = vst [vmem:[%s87] sm:%s3] %v86
    %s89 = smul.addr 2, 110
    %s90 = scalar_lea.vmem %s0, %s89
    %v91 = vld [vmem:[%s90] sm:%s3]
    %s92 = scalar_lea.vmem [#allocation1], 880
    %93 = vst [vmem:[%s92] sm:%s3] %v91
    %s94 = smul.addr 2, 109
    %s95 = scalar_lea.vmem %s0, %s94
    %v96 = vld [vmem:[%s95] sm:%s3]
    %s97 = scalar_lea.vmem [#allocation1], 872
    %98 = vst [vmem:[%s97] sm:%s3] %v96
    %s99 = smul.addr 2, 108
    %s100 = scalar_lea.vmem %s0, %s99
    %v101 = vld [vmem:[%s100] sm:%s3]
    %s102 = scalar_lea.vmem [#allocation1], 864
    %103 = vst [vmem:[%s102] sm:%s3] %v101
    %s104 = smul.addr 2, 107
    %s105 = scalar_lea.vmem %s0, %s104
    %v106 = vld [vmem:[%s105] sm:%s3]
    %s107 = scalar_lea.vmem [#allocation1], 856
    %108 = vst [vmem:[%s107] sm:%s3] %v106
    %s109 = smul.addr 2, 106
    %s110 = scalar_lea.vmem %s0, %s109
    %v111 = vld [vmem:[%s110] sm:%s3]
    %s112 = scalar_lea.vmem [#allocation1], 848
    %113 = vst [vmem:[%s112] sm:%s3] %v111
    %s114 = smul.addr 2, 105
    %s115 = scalar_lea.vmem %s0, %s114
    %v116 = vld [vmem:[%s115] sm:%s3]
    %s117 = scalar_lea.vmem [#allocation1], 840
    %118 = vst [vmem:[%s117] sm:%s3] %v116
    %s119 = smul.addr 2, 104
    %s120 = scalar_lea.vmem %s0, %s119
    %v121 = vld [vmem:[%s120] sm:%s3]
    %s122 = scalar_lea.vmem [#allocation1], 832
    %123 = vst [vmem:[%s122] sm:%s3] %v121
    %s124 = smul.addr 2, 103
    %s125 = scalar_lea.vmem %s0, %s124
    %v126 = vld [vmem:[%s125] sm:%s3]
    %s127 = scalar_lea.vmem [#allocation1], 824
    %128 = vst [vmem:[%s127] sm:%s3] %v126
    %s129 = smul.addr 2, 102
    %s130 = scalar_lea.vmem %s0, %s129
    %v131 = vld [vmem:[%s130] sm:%s3]
    %s132 = scalar_lea.vmem [#allocation1], 816
    %133 = vst [vmem:[%s132] sm:%s3] %v131
    %s134 = smul.addr 2, 101
    %s135 = scalar_lea.vmem %s0, %s134
    %v136 = vld [vmem:[%s135] sm:%s3]
    %s137 = scalar_lea.vmem [#allocation1], 808
    %138 = vst [vmem:[%s137] sm:%s3] %v136
    %s139 = smul.addr 2, 100
    %s140 = scalar_lea.vmem %s0, %s139
    %v141 = vld [vmem:[%s140] sm:%s3]
    %s142 = scalar_lea.vmem [#allocation1], 800
    %143 = vst [vmem:[%s142] sm:%s3] %v141
    %s144 = smul.addr 2, 99
    %s145 = scalar_lea.vmem %s0, %s144
    %v146 = vld [vmem:[%s145] sm:%s3]
    %s147 = scalar_lea.vmem [#allocation1], 792
    %148 = vst [vmem:[%s147] sm:%s3] %v146
    %s149 = smul.addr 2, 98
    %s150 = scalar_lea.vmem %s0, %s149
    %v151 = vld [vmem:[%s150] sm:%s3]
    %s152 = scalar_lea.vmem [#allocation1], 784
    %153 = vst [vmem:[%s152] sm:%s3] %v151
    %s154 = smul.addr 2, 97
    %s155 = scalar_lea.vmem %s0, %s154
    %v156 = vld [vmem:[%s155] sm:%s3]
    %s157 = scalar_lea.vmem [#allocation1], 776
    %158 = vst [vmem:[%s157] sm:%s3] %v156
    %s159 = smul.addr 2, 96
    %s160 = scalar_lea.vmem %s0, %s159
    %v161 = vld [vmem:[%s160] sm:%s3]
    %s162 = scalar_lea.vmem [#allocation1], 768
    %163 = vst [vmem:[%s162] sm:%s3] %v161
    %s164 = smul.addr 2, 95
    %s165 = scalar_lea.vmem %s0, %s164
    %v166 = vld [vmem:[%s165] sm:%s3]
    %s167 = scalar_lea.vmem [#allocation1], 760
    %168 = vst [vmem:[%s167] sm:%s3] %v166
    %s169 = smul.addr 2, 94
    %s170 = scalar_lea.vmem %s0, %s169
    %v171 = vld [vmem:[%s170] sm:%s3]
    %s172 = scalar_lea.vmem [#allocation1], 752
    %173 = vst [vmem:[%s172] sm:%s3] %v171
    %s174 = smul.addr 2, 93
    %s175 = scalar_lea.vmem %s0, %s174
    %v176 = vld [vmem:[%s175] sm:%s3]
    %s177 = scalar_lea.vmem [#allocation1], 744
    %178 = vst [vmem:[%s177] sm:%s3] %v176
    %s179 = smul.addr 2, 92
    %s180 = scalar_lea.vmem %s0, %s179
    %v181 = vld [vmem:[%s180] sm:%s3]
    %s182 = scalar_lea.vmem [#allocation1], 736
    %183 = vst [vmem:[%s182] sm:%s3] %v181
    %s184 = smul.addr 2, 91
    %s185 = scalar_lea.vmem %s0, %s184
    %v186 = vld [vmem:[%s185] sm:%s3]
    %s187 = scalar_lea.vmem [#allocation1], 728
    %188 = vst [vmem:[%s187] sm:%s3] %v186
    %s189 = smul.addr 2, 90
    %s190 = scalar_lea.vmem %s0, %s189
    %v191 = vld [vmem:[%s190] sm:%s3]
    %s192 = scalar_lea.vmem [#allocation1], 720
    %193 = vst [vmem:[%s192] sm:%s3] %v191
    %s194 = smul.addr 2, 89
    %s195 = scalar_lea.vmem %s0, %s194
    %v196 = vld [vmem:[%s195] sm:%s3]
    %s197 = scalar_lea.vmem [#allocation1], 712
    %198 = vst [vmem:[%s197] sm:%s3] %v196
    %s199 = smul.addr 2, 88
    %s200 = scalar_lea.vmem %s0, %s199
    %v201 = vld [vmem:[%s200] sm:%s3]
    %s202 = scalar_lea.vmem [#allocation1], 704
    %203 = vst [vmem:[%s202] sm:%s3] %v201
    %s204 = smul.addr 2, 87
    %s205 = scalar_lea.vmem %s0, %s204
    %v206 = vld [vmem:[%s205] sm:%s3]
    %s207 = scalar_lea.vmem [#allocation1], 696
    %208 = vst [vmem:[%s207] sm:%s3] %v206
    %s209 = smul.addr 2, 86
    %s210 = scalar_lea.vmem %s0, %s209
    %v211 = vld [vmem:[%s210] sm:%s3]
    %s212 = scalar_lea.vmem [#allocation1], 688
    %213 = vst [vmem:[%s212] sm:%s3] %v211
    %s214 = smul.addr 2, 85
    %s215 = scalar_lea.vmem %s0, %s214
    %v216 = vld [vmem:[%s215] sm:%s3]
    %s217 = scalar_lea.vmem [#allocation1], 680
    %218 = vst [vmem:[%s217] sm:%s3] %v216
    %s219 = smul.addr 2, 84
    %s220 = scalar_lea.vmem %s0, %s219
    %v221 = vld [vmem:[%s220] sm:%s3]
    %s222 = scalar_lea.vmem [#allocation1], 672
    %223 = vst [vmem:[%s222] sm:%s3] %v221
    %s224 = smul.addr 2, 83
    %s225 = scalar_lea.vmem %s0, %s224
    %v226 = vld [vmem:[%s225] sm:%s3]
    %s227 = scalar_lea.vmem [#allocation1], 664
    %228 = vst [vmem:[%s227] sm:%s3] %v226
    %s229 = smul.addr 2, 82
    %s230 = scalar_lea.vmem %s0, %s229
    %v231 = vld [vmem:[%s230] sm:%s3]
    %s232 = scalar_lea.vmem [#allocation1], 656
    %233 = vst [vmem:[%s232] sm:%s3] %v231
    %s234 = smul.addr 2, 81
    %s235 = scalar_lea.vmem %s0, %s234
    %v236 = vld [vmem:[%s235] sm:%s3]
    %s237 = scalar_lea.vmem [#allocation1], 648
    %238 = vst [vmem:[%s237] sm:%s3] %v236
    %s239 = smul.addr 2, 80
    %s240 = scalar_lea.vmem %s0, %s239
    %v241 = vld [vmem:[%s240] sm:%s3]
    %s242 = scalar_lea.vmem [#allocation1], 640
    %243 = vst [vmem:[%s242] sm:%s3] %v241
    %s244 = smul.addr 2, 79
    %s245 = scalar_lea.vmem %s0, %s244
    %v246 = vld [vmem:[%s245] sm:%s3]
    %s247 = scalar_lea.vmem [#allocation1], 632
    %248 = vst [vmem:[%s247] sm:%s3] %v246
    %s249 = smul.addr 2, 78
    %s250 = scalar_lea.vmem %s0, %s249
    %v251 = vld [vmem:[%s250] sm:%s3]
    %s252 = scalar_lea.vmem [#allocation1], 624
    %253 = vst [vmem:[%s252] sm:%s3] %v251
    %s254 = smul.addr 2, 77
    %s255 = scalar_lea.vmem %s0, %s254
    %v256 = vld [vmem:[%s255] sm:%s3]
    %s257 = scalar_lea.vmem [#allocation1], 616
    %258 = vst [vmem:[%s257] sm:%s3] %v256
    %s259 = smul.addr 2, 76
    %s260 = scalar_lea.vmem %s0, %s259
    %v261 = vld [vmem:[%s260] sm:%s3]
    %s262 = scalar_lea.vmem [#allocation1], 608
    %263 = vst [vmem:[%s262] sm:%s3] %v261
    %s264 = smul.addr 2, 75
    %s265 = scalar_lea.vmem %s0, %s264
    %v266 = vld [vmem:[%s265] sm:%s3]
    %s267 = scalar_lea.vmem [#allocation1], 600
    %268 = vst [vmem:[%s267] sm:%s3] %v266
    %s269 = smul.addr 2, 74
    %s270 = scalar_lea.vmem %s0, %s269
    %v271 = vld [vmem:[%s270] sm:%s3]
    %s272 = scalar_lea.vmem [#allocation1], 592
    %273 = vst [vmem:[%s272] sm:%s3] %v271
    %s274 = smul.addr 2, 73
    %s275 = scalar_lea.vmem %s0, %s274
    %v276 = vld [vmem:[%s275] sm:%s3]
    %s277 = scalar_lea.vmem [#allocation1], 584
    %278 = vst [vmem:[%s277] sm:%s3] %v276
    %s279 = smul.addr 2, 72
    %s280 = scalar_lea.vmem %s0, %s279
    %v281 = vld [vmem:[%s280] sm:%s3]
    %s282 = scalar_lea.vmem [#allocation1], 576
    %283 = vst [vmem:[%s282] sm:%s3] %v281
    %s284 = smul.addr 2, 71
    %s285 = scalar_lea.vmem %s0, %s284
    %v286 = vld [vmem:[%s285] sm:%s3]
    %s287 = scalar_lea.vmem [#allocation1], 568
    %288 = vst [vmem:[%s287] sm:%s3] %v286
    %s289 = smul.addr 2, 70
    %s290 = scalar_lea.vmem %s0, %s289
    %v291 = vld [vmem:[%s290] sm:%s3]
    %s292 = scalar_lea.vmem [#allocation1], 560
    %293 = vst [vmem:[%s292] sm:%s3] %v291
    %s294 = smul.addr 2, 69
    %s295 = scalar_lea.vmem %s0, %s294
    %v296 = vld [vmem:[%s295] sm:%s3]
    %s297 = scalar_lea.vmem [#allocation1], 552
    %298 = vst [vmem:[%s297] sm:%s3] %v296
    %s299 = smul.addr 2, 68
    %s300 = scalar_lea.vmem %s0, %s299
    %v301 = vld [vmem:[%s300] sm:%s3]
    %s302 = scalar_lea.vmem [#allocation1], 544
    %303 = vst [vmem:[%s302] sm:%s3] %v301
    %s304 = smul.addr 2, 67
    %s305 = scalar_lea.vmem %s0, %s304
    %v306 = vld [vmem:[%s305] sm:%s3]
    %s307 = scalar_lea.vmem [#allocation1], 536
    %308 = vst [vmem:[%s307] sm:%s3] %v306
    %s309 = smul.addr 2, 66
    %s310 = scalar_lea.vmem %s0, %s309
    %v311 = vld [vmem:[%s310] sm:%s3]
    %s312 = scalar_lea.vmem [#allocation1], 528
    %313 = vst [vmem:[%s312] sm:%s3] %v311
    %s314 = smul.addr 2, 65
    %s315 = scalar_lea.vmem %s0, %s314
    %v316 = vld [vmem:[%s315] sm:%s3]
    %s317 = scalar_lea.vmem [#allocation1], 520
    %318 = vst [vmem:[%s317] sm:%s3] %v316
    %s319 = smul.addr 2, 64
    %s320 = scalar_lea.vmem %s0, %s319
    %v321 = vld [vmem:[%s320] sm:%s3]
    %s322 = scalar_lea.vmem [#allocation1], 512
    %323 = vst [vmem:[%s322] sm:%s3] %v321
    %s324 = smul.addr 2, 63
    %s325 = scalar_lea.vmem %s0, %s324
    %v326 = vld [vmem:[%s325] sm:%s3]
    %s327 = scalar_lea.vmem [#allocation1], 504
    %328 = vst [vmem:[%s327] sm:%s3] %v326
    %s329 = smul.addr 2, 62
    %s330 = scalar_lea.vmem %s0, %s329
    %v331 = vld [vmem:[%s330] sm:%s3]
    %s332 = scalar_lea.vmem [#allocation1], 496
    %333 = vst [vmem:[%s332] sm:%s3] %v331
    %s334 = smul.addr 2, 61
    %s335 = scalar_lea.vmem %s0, %s334
    %v336 = vld [vmem:[%s335] sm:%s3]
    %s337 = scalar_lea.vmem [#allocation1], 488
    %338 = vst [vmem:[%s337] sm:%s3] %v336
    %s339 = smul.addr 2, 60
    %s340 = scalar_lea.vmem %s0, %s339
    %v341 = vld [vmem:[%s340] sm:%s3]
    %s342 = scalar_lea.vmem [#allocation1], 480
    %343 = vst [vmem:[%s342] sm:%s3] %v341
    %s344 = smul.addr 2, 59
    %s345 = scalar_lea.vmem %s0, %s344
    %v346 = vld [vmem:[%s345] sm:%s3]
    %s347 = scalar_lea.vmem [#allocation1], 472
    %348 = vst [vmem:[%s347] sm:%s3] %v346
    %s349 = smul.addr 2, 58
    %s350 = scalar_lea.vmem %s0, %s349
    %v351 = vld [vmem:[%s350] sm:%s3]
    %s352 = scalar_lea.vmem [#allocation1], 464
    %353 = vst [vmem:[%s352] sm:%s3] %v351
    %s354 = smul.addr 2, 57
    %s355 = scalar_lea.vmem %s0, %s354
    %v356 = vld [vmem:[%s355] sm:%s3]
    %s357 = scalar_lea.vmem [#allocation1], 456
    %358 = vst [vmem:[%s357] sm:%s3] %v356
    %s359 = smul.addr 2, 56
    %s360 = scalar_lea.vmem %s0, %s359
    %v361 = vld [vmem:[%s360] sm:%s3]
    %s362 = scalar_lea.vmem [#allocation1], 448
    %363 = vst [vmem:[%s362] sm:%s3] %v361
    %s364 = smul.addr 2, 55
    %s365 = scalar_lea.vmem %s0, %s364
    %v366 = vld [vmem:[%s365] sm:%s3]
    %s367 = scalar_lea.vmem [#allocation1], 440
    %368 = vst [vmem:[%s367] sm:%s3] %v366
    %s369 = smul.addr 2, 54
    %s370 = scalar_lea.vmem %s0, %s369
    %v371 = vld [vmem:[%s370] sm:%s3]
    %s372 = scalar_lea.vmem [#allocation1], 432
    %373 = vst [vmem:[%s372] sm:%s3] %v371
    %s374 = smul.addr 2, 53
    %s375 = scalar_lea.vmem %s0, %s374
    %v376 = vld [vmem:[%s375] sm:%s3]
    %s377 = scalar_lea.vmem [#allocation1], 424
    %378 = vst [vmem:[%s377] sm:%s3] %v376
    %s379 = smul.addr 2, 52
    %s380 = scalar_lea.vmem %s0, %s379
    %v381 = vld [vmem:[%s380] sm:%s3]
    %s382 = scalar_lea.vmem [#allocation1], 416
    %383 = vst [vmem:[%s382] sm:%s3] %v381
    %s384 = smul.addr 2, 51
    %s385 = scalar_lea.vmem %s0, %s384
    %v386 = vld [vmem:[%s385] sm:%s3]
    %s387 = scalar_lea.vmem [#allocation1], 408
    %388 = vst [vmem:[%s387] sm:%s3] %v386
    %s389 = smul.addr 2, 50
    %s390 = scalar_lea.vmem %s0, %s389
    %v391 = vld [vmem:[%s390] sm:%s3]
    %s392 = scalar_lea.vmem [#allocation1], 400
    %393 = vst [vmem:[%s392] sm:%s3] %v391
    %s394 = smul.addr 2, 49
    %s395 = scalar_lea.vmem %s0, %s394
    %v396 = vld [vmem:[%s395] sm:%s3]
    %s397 = scalar_lea.vmem [#allocation1], 392
    %398 = vst [vmem:[%s397] sm:%s3] %v396
    %s399 = smul.addr 2, 48
    %s400 = scalar_lea.vmem %s0, %s399
    %v401 = vld [vmem:[%s400] sm:%s3]
    %s402 = scalar_lea.vmem [#allocation1], 384
    %403 = vst [vmem:[%s402] sm:%s3] %v401
    %s404 = smul.addr 2, 47
    %s405 = scalar_lea.vmem %s0, %s404
    %v406 = vld [vmem:[%s405] sm:%s3]
    %s407 = scalar_lea.vmem [#allocation1], 376
    %408 = vst [vmem:[%s407] sm:%s3] %v406
    %s409 = smul.addr 2, 46
    %s410 = scalar_lea.vmem %s0, %s409
    %v411 = vld [vmem:[%s410] sm:%s3]
    %s412 = scalar_lea.vmem [#allocation1], 368
    %413 = vst [vmem:[%s412] sm:%s3] %v411
    %s414 = smul.addr 2, 45
    %s415 = scalar_lea.vmem %s0, %s414
    %v416 = vld [vmem:[%s415] sm:%s3]
    %s417 = scalar_lea.vmem [#allocation1], 360
    %418 = vst [vmem:[%s417] sm:%s3] %v416
    %s419 = smul.addr 2, 44
    %s420 = scalar_lea.vmem %s0, %s419
    %v421 = vld [vmem:[%s420] sm:%s3]
    %s422 = scalar_lea.vmem [#allocation1], 352
    %423 = vst [vmem:[%s422] sm:%s3] %v421
    %s424 = smul.addr 2, 43
    %s425 = scalar_lea.vmem %s0, %s424
    %v426 = vld [vmem:[%s425] sm:%s3]
    %s427 = scalar_lea.vmem [#allocation1], 344
    %428 = vst [vmem:[%s427] sm:%s3] %v426
    %s429 = smul.addr 2, 42
    %s430 = scalar_lea.vmem %s0, %s429
    %v431 = vld [vmem:[%s430] sm:%s3]
    %s432 = scalar_lea.vmem [#allocation1], 336
    %433 = vst [vmem:[%s432] sm:%s3] %v431
    %s434 = smul.addr 2, 41
    %s435 = scalar_lea.vmem %s0, %s434
    %v436 = vld [vmem:[%s435] sm:%s3]
    %s437 = scalar_lea.vmem [#allocation1], 328
    %438 = vst [vmem:[%s437] sm:%s3] %v436
    %s439 = smul.addr 2, 40
    %s440 = scalar_lea.vmem %s0, %s439
    %v441 = vld [vmem:[%s440] sm:%s3]
    %s442 = scalar_lea.vmem [#allocation1], 320
    %443 = vst [vmem:[%s442] sm:%s3] %v441
    %s444 = smul.addr 2, 39
    %s445 = scalar_lea.vmem %s0, %s444
    %v446 = vld [vmem:[%s445] sm:%s3]
    %s447 = scalar_lea.vmem [#allocation1], 312
    %448 = vst [vmem:[%s447] sm:%s3] %v446
    %s449 = smul.addr 2, 38
    %s450 = scalar_lea.vmem %s0, %s449
    %v451 = vld [vmem:[%s450] sm:%s3]
    %s452 = scalar_lea.vmem [#allocation1], 304
    %453 = vst [vmem:[%s452] sm:%s3] %v451
    %s454 = smul.addr 2, 37
    %s455 = scalar_lea.vmem %s0, %s454
    %v456 = vld [vmem:[%s455] sm:%s3]
    %s457 = scalar_lea.vmem [#allocation1], 296
    %458 = vst [vmem:[%s457] sm:%s3] %v456
    %s459 = smul.addr 2, 36
    %s460 = scalar_lea.vmem %s0, %s459
    %v461 = vld [vmem:[%s460] sm:%s3]
    %s462 = scalar_lea.vmem [#allocation1], 288
    %463 = vst [vmem:[%s462] sm:%s3] %v461
    %s464 = smul.addr 2, 35
    %s465 = scalar_lea.vmem %s0, %s464
    %v466 = vld [vmem:[%s465] sm:%s3]
    %s467 = scalar_lea.vmem [#allocation1], 280
    %468 = vst [vmem:[%s467] sm:%s3] %v466
    %s469 = smul.addr 2, 34
    %s470 = scalar_lea.vmem %s0, %s469
    %v471 = vld [vmem:[%s470] sm:%s3]
    %s472 = scalar_lea.vmem [#allocation1], 272
    %473 = vst [vmem:[%s472] sm:%s3] %v471
    %s474 = smul.addr 2, 33
    %s475 = scalar_lea.vmem %s0, %s474
    %v476 = vld [vmem:[%s475] sm:%s3]
    %s477 = scalar_lea.vmem [#allocation1], 264
    %478 = vst [vmem:[%s477] sm:%s3] %v476
    %s479 = smul.addr 2, 32
    %s480 = scalar_lea.vmem %s0, %s479
    %v481 = vld [vmem:[%s480] sm:%s3]
    %s482 = scalar_lea.vmem [#allocation1], 256
    %483 = vst [vmem:[%s482] sm:%s3] %v481
    %s484 = smul.addr 2, 31
    %s485 = scalar_lea.vmem %s0, %s484
    %v486 = vld [vmem:[%s485] sm:%s3]
    %s487 = scalar_lea.vmem [#allocation1], 248
    %488 = vst [vmem:[%s487] sm:%s3] %v486
    %s489 = smul.addr 2, 30
    %s490 = scalar_lea.vmem %s0, %s489
    %v491 = vld [vmem:[%s490] sm:%s3]
    %s492 = scalar_lea.vmem [#allocation1], 240
    %493 = vst [vmem:[%s492] sm:%s3] %v491
    %s494 = smul.addr 2, 29
    %s495 = scalar_lea.vmem %s0, %s494
    %v496 = vld [vmem:[%s495] sm:%s3]
    %s497 = scalar_lea.vmem [#allocation1], 232
    %498 = vst [vmem:[%s497] sm:%s3] %v496
    %s499 = smul.addr 2, 28
    %s500 = scalar_lea.vmem %s0, %s499
    %v501 = vld [vmem:[%s500] sm:%s3]
    %s502 = scalar_lea.vmem [#allocation1], 224
    %503 = vst [vmem:[%s502] sm:%s3] %v501
    %s504 = smul.addr 2, 27
    %s505 = scalar_lea.vmem %s0, %s504
    %v506 = vld [vmem:[%s505] sm:%s3]
    %s507 = scalar_lea.vmem [#allocation1], 216
    %508 = vst [vmem:[%s507] sm:%s3] %v506
    %s509 = smul.addr 2, 26
    %s510 = scalar_lea.vmem %s0, %s509
    %v511 = vld [vmem:[%s510] sm:%s3]
    %s512 = scalar_lea.vmem [#allocation1], 208
    %513 = vst [vmem:[%s512] sm:%s3] %v511
    %s514 = smul.addr 2, 25
    %s515 = scalar_lea.vmem %s0, %s514
    %v516 = vld [vmem:[%s515] sm:%s3]
    %s517 = scalar_lea.vmem [#allocation1], 200
    %518 = vst [vmem:[%s517] sm:%s3] %v516
    %s519 = smul.addr 2, 24
    %s520 = scalar_lea.vmem %s0, %s519
    %v521 = vld [vmem:[%s520] sm:%s3]
    %s522 = scalar_lea.vmem [#allocation1], 192
    %523 = vst [vmem:[%s522] sm:%s3] %v521
    %s524 = smul.addr 2, 23
    %s525 = scalar_lea.vmem %s0, %s524
    %v526 = vld [vmem:[%s525] sm:%s3]
    %s527 = scalar_lea.vmem [#allocation1], 184
    %528 = vst [vmem:[%s527] sm:%s3] %v526
    %s529 = smul.addr 2, 22
    %s530 = scalar_lea.vmem %s0, %s529
    %v531 = vld [vmem:[%s530] sm:%s3]
    %s532 = scalar_lea.vmem [#allocation1], 176
    %533 = vst [vmem:[%s532] sm:%s3] %v531
    %s534 = smul.addr 2, 21
    %s535 = scalar_lea.vmem %s0, %s534
    %v536 = vld [vmem:[%s535] sm:%s3]
    %s537 = scalar_lea.vmem [#allocation1], 168
    %538 = vst [vmem:[%s537] sm:%s3] %v536
    %s539 = smul.addr 2, 20
    %s540 = scalar_lea.vmem %s0, %s539
    %v541 = vld [vmem:[%s540] sm:%s3]
    %s542 = scalar_lea.vmem [#allocation1], 160
    %543 = vst [vmem:[%s542] sm:%s3] %v541
    %s544 = smul.addr 2, 19
    %s545 = scalar_lea.vmem %s0, %s544
    %v546 = vld [vmem:[%s545] sm:%s3]
    %s547 = scalar_lea.vmem [#allocation1], 152
    %548 = vst [vmem:[%s547] sm:%s3] %v546
    %s549 = smul.addr 2, 18
    %s550 = scalar_lea.vmem %s0, %s549
    %v551 = vld [vmem:[%s550] sm:%s3]
    %s552 = scalar_lea.vmem [#allocation1], 144
    %553 = vst [vmem:[%s552] sm:%s3] %v551
    %s554 = smul.addr 2, 17
    %s555 = scalar_lea.vmem %s0, %s554
    %v556 = vld [vmem:[%s555] sm:%s3]
    %s557 = scalar_lea.vmem [#allocation1], 136
    %558 = vst [vmem:[%s557] sm:%s3] %v556
    %s559 = smul.addr 2, 16
    %s560 = scalar_lea.vmem %s0, %s559
    %v561 = vld [vmem:[%s560] sm:%s3]
    %s562 = scalar_lea.vmem [#allocation1], 128
    %563 = vst [vmem:[%s562] sm:%s3] %v561
    %s564 = smul.addr 2, 15
    %s565 = scalar_lea.vmem %s0, %s564
    %v566 = vld [vmem:[%s565] sm:%s3]
    %s567 = scalar_lea.vmem [#allocation1], 120
    %568 = vst [vmem:[%s567] sm:%s3] %v566
    %s569 = smul.addr 2, 14
    %s570 = scalar_lea.vmem %s0, %s569
    %v571 = vld [vmem:[%s570] sm:%s3]
    %s572 = scalar_lea.vmem [#allocation1], 112
    %573 = vst [vmem:[%s572] sm:%s3] %v571
    %s574 = smul.addr 2, 13
    %s575 = scalar_lea.vmem %s0, %s574
    %v576 = vld [vmem:[%s575] sm:%s3]
    %s577 = scalar_lea.vmem [#allocation1], 104
    %578 = vst [vmem:[%s577] sm:%s3] %v576
    %s579 = smul.addr 2, 12
    %s580 = scalar_lea.vmem %s0, %s579
    %v581 = vld [vmem:[%s580] sm:%s3]
    %s582 = scalar_lea.vmem [#allocation1], 96
    %583 = vst [vmem:[%s582] sm:%s3] %v581
    %s584 = smul.addr 2, 11
    %s585 = scalar_lea.vmem %s0, %s584
    %v586 = vld [vmem:[%s585] sm:%s3]
    %s587 = scalar_lea.vmem [#allocation1], 88
    %588 = vst [vmem:[%s587] sm:%s3] %v586
    %s589 = smul.addr 2, 10
    %s590 = scalar_lea.vmem %s0, %s589
    %v591 = vld [vmem:[%s590] sm:%s3]
    %s592 = scalar_lea.vmem [#allocation1], 80
    %593 = vst [vmem:[%s592] sm:%s3] %v591
    %s594 = smul.addr 2, 9
    %s595 = scalar_lea.vmem %s0, %s594
    %v596 = vld [vmem:[%s595] sm:%s3]
    %s597 = scalar_lea.vmem [#allocation1], 72
    %598 = vst [vmem:[%s597] sm:%s3] %v596
    %s599 = smul.addr 2, 8
    %s600 = scalar_lea.vmem %s0, %s599
    %v601 = vld [vmem:[%s600] sm:%s3]
    %s602 = scalar_lea.vmem [#allocation1], 64
    %603 = vst [vmem:[%s602] sm:%s3] %v601
    %s604 = smul.addr 2, 7
    %s605 = scalar_lea.vmem %s0, %s604
    %v606 = vld [vmem:[%s605] sm:%s3]
    %s607 = scalar_lea.vmem [#allocation1], 56
    %608 = vst [vmem:[%s607] sm:%s3] %v606
    %s609 = smul.addr 2, 6
    %s610 = scalar_lea.vmem %s0, %s609
    %v611 = vld [vmem:[%s610] sm:%s3]
    %s612 = scalar_lea.vmem [#allocation1], 48
    %613 = vst [vmem:[%s612] sm:%s3] %v611
    %s614 = smul.addr 2, 5
    %s615 = scalar_lea.vmem %s0, %s614
    %v616 = vld [vmem:[%s615] sm:%s3]
    %s617 = scalar_lea.vmem [#allocation1], 40
    %618 = vst [vmem:[%s617] sm:%s3] %v616
    %s619 = smul.addr 2, 4
    %s620 = scalar_lea.vmem %s0, %s619
    %v621 = vld [vmem:[%s620] sm:%s3]
    %s622 = scalar_lea.vmem [#allocation1], 32
    %623 = vst [vmem:[%s622] sm:%s3] %v621
    %s624 = smul.addr 2, 3
    %s625 = scalar_lea.vmem %s0, %s624
    %v626 = vld [vmem:[%s625] sm:%s3]
    %s627 = scalar_lea.vmem [#allocation1], 24
    %628 = vst [vmem:[%s627] sm:%s3] %v626
    %s629 = smul.addr 2, 2
    %s630 = scalar_lea.vmem %s0, %s629
    %v631 = vld [vmem:[%s630] sm:%s3]
    %s632 = scalar_lea.vmem [#allocation1], 16
    %633 = vst [vmem:[%s632] sm:%s3] %v631
    %s634 = scalar_lea.vmem %s0, 2
    %v635 = vld [vmem:[%s634] sm:%s3]
    %s636 = scalar_lea.vmem [#allocation1], 8
    %637 = vst [vmem:[%s636] sm:%s3] %v635
    %v638 = vld [vmem:[%s0] sm:%s3]
    %639 = vst [vmem:[#allocation1] sm:%s3] %v638
    %v640 = vld [vmem:[#allocation1] sm:$0x1]
    %s641 = scalar_lea.vmem [#allocation1], 63
    %v642 = vld [vmem:[%s641] sm:$0x2]
    %vm643 = vcmask 1041409
    %v644 = vsel %vm643, %v642, %v640
    %s645 = scalar_lea.vmem [#allocation1], 126
    %v646 = vld [vmem:[%s645] sm:$0x4]
    %vm647 = vcmask 1042434
    %v648 = vsel %vm647, %v646, %v644
    %s649 = scalar_lea.vmem [#allocation1], 189
    %v650 = vld [vmem:[%s649] sm:$0x8]
    %vm651 = vcmask 1043459
    %v652 = vsel %vm651, %v650, %v648
    %s653 = scalar_lea.vmem [#allocation1], 252
    %v654 = vld [vmem:[%s653] sm:$0x10]
    %vm655 = vcmask 1044484
    %v656 = vsel %vm655, %v654, %v652
    %s657 = scalar_lea.vmem [#allocation1], 315
    %v658 = vld [vmem:[%s657] sm:$0x20]
    %vm659 = vcmask 1045509
    %v660 = vsel %vm659, %v658, %v656
    %s661 = scalar_lea.vmem [#allocation1], 378
    %v662 = vld [vmem:[%s661] sm:$0x40]
    %vm663 = vcmask 1046534
    %v664 = vsel %vm663, %v662, %v660
    %s665 = scalar_lea.vmem [#allocation1], 441
    %v666 = vld [vmem:[%s665] sm:$0x80]
    %vm667 = vcmask 1047559
    %v668 = vsel %vm667, %v666, %v664
    %vm669 = vcmask 64512
    %670 = vst.msk [vmem:[#allocation0] ss:$8 sm:$0xf] %vm669, %v668
    %s671 = scalar_lea.vmem [#allocation0], 4294967265
    %672 = vst.msk [vmem:[%s671] ss:$8 sm:$0xf0] %vm669, %v668
    %s673 = scalar_lea.vmem [#allocation1], 512
    %v674 = vld [vmem:[%s673] sm:$0x1]
    %s675 = scalar_lea.vmem [#allocation1], 575
    %v676 = vld [vmem:[%s675] sm:$0x2]
    %vm677 = vcmask 1041409
    %v678 = vsel %vm677, %v676, %v674
    %s679 = scalar_lea.vmem [#allocation1], 638
    %v680 = vld [vmem:[%s679] sm:$0x4]
    %vm681 = vcmask 1042434
    %v682 = vsel %vm681, %v680, %v678
    %s683 = scalar_lea.vmem [#allocation1], 701
    %v684 = vld [vmem:[%s683] sm:$0x8]
    %vm685 = vcmask 1043459
    %v686 = vsel %vm685, %v684, %v682
    %s687 = scalar_lea.vmem [#allocation1], 764
    %v688 = vld [vmem:[%s687] sm:$0x10]
    %vm689 = vcmask 1044484
    %v690 = vsel %vm689, %v688, %v686
    %s691 = scalar_lea.vmem [#allocation1], 827
    %v692 = vld [vmem:[%s691] sm:$0x20]
    %vm693 = vcmask 1045509
    %v694 = vsel %vm693, %v692, %v690
    %s695 = scalar_lea.vmem [#allocation1], 890
    %v696 = vld [vmem:[%s695] sm:$0x40]
    %vm697 = vcmask 1046534
    %v698 = vsel %vm697, %v696, %v694
    %s699 = scalar_lea.vmem [#allocation1], 953
    %v700 = vld [vmem:[%s699] sm:$0x80]
    %vm701 = vcmask 1047559
    %v702 = vsel %vm701, %v700, %v698
    %vm703 = vcmask 64512
    %s704 = scalar_lea.vmem [#allocation0], 2
    %705 = vst.msk [vmem:[%s704] ss:$8 sm:$0xf] %vm703, %v702
    %s706 = scalar_lea.vmem [#allocation0], 4294967267
    %707 = vst.msk [vmem:[%s706] ss:$8 sm:$0xf0] %vm703, %v702
    %s708 = scalar_lea.vmem [#allocation1], 57
    %v709 = vld [vmem:[%s708] sm:$0x1]
    %s710 = scalar_lea.vmem [#allocation1], 312
    %v711 = vld [vmem:[%s710] sm:$0x2]
    %vm712 = vcmask 1041409
    %v713 = vsel %vm712, %v711, %v709
    %s714 = scalar_lea.vmem [#allocation1], 567
    %v715 = vld [vmem:[%s714] sm:$0x4]
    %vm716 = vcmask 1042434
    %v717 = vsel %vm716, %v715, %v713
    %s718 = scalar_lea.vmem [#allocation1], 822
    %v719 = vld [vmem:[%s718] sm:$0x8]
    %vm720 = vcmask 1043459
    %v721 = vsel %vm720, %v719, %v717
    %s722 = scalar_lea.vmem [#allocation1], 117
    %v723 = vld [vmem:[%s722] sm:$0x10]
    %vm724 = vcmask 1044484
    %v725 = vsel %vm724, %v723, %v721
    %s726 = scalar_lea.vmem [#allocation1], 372
    %v727 = vld [vmem:[%s726] sm:$0x20]
    %vm728 = vcmask 1045509
    %v729 = vsel %vm728, %v727, %v725
    %s730 = scalar_lea.vmem [#allocation1], 627
    %v731 = vld [vmem:[%s730] sm:$0x40]
    %vm732 = vcmask 1046534
    %v733 = vsel %vm732, %v731, %v729
    %s734 = scalar_lea.vmem [#allocation1], 882
    %v735 = vld [vmem:[%s734] sm:$0x80]
    %vm736 = vcmask 1047559
    %v737 = vsel %vm736, %v735, %v733
    %738 = vrot.lane.b32.xlu0 %v737, 120
    %v739 = vpop.permute.xlu0 %738
    %vm740 = vcmask 1048512
    %741 = vst.msk [vmem:[#allocation0] sm:$0xf] %vm740, %v739
    %s742 = scalar_lea.vmem [#allocation0], 4
    %743 = vst.msk [vmem:[%s742] sm:$0xf0] %vm740, %v739
    %s744 = scalar_lea.vmem [#allocation1], 185
    %v745 = vld [vmem:[%s744] sm:$0x1]
    %s746 = scalar_lea.vmem [#allocation1], 440
    %v747 = vld [vmem:[%s746] sm:$0x2]
    %vm748 = vcmask 1041409
    %v749 = vsel %vm748, %v747, %v745
    %s750 = scalar_lea.vmem [#allocation1], 695
    %v751 = vld [vmem:[%s750] sm:$0x4]
    %vm752 = vcmask 1042434
    %v753 = vsel %vm752, %v751, %v749
    %s754 = scalar_lea.vmem [#allocation1], 950
    %v755 = vld [vmem:[%s754] sm:$0x8]
    %vm756 = vcmask 1043459
    %v757 = vsel %vm756, %v755, %v753
    %s758 = scalar_lea.vmem [#allocation1], 245
    %v759 = vld [vmem:[%s758] sm:$0x10]
    %vm760 = vcmask 1044484
    %v761 = vsel %vm760, %v759, %v757
    %s762 = scalar_lea.vmem [#allocation1], 500
    %v763 = vld [vmem:[%s762] sm:$0x20]
    %vm764 = vcmask 1045509
    %v765 = vsel %vm764, %v763, %v761
    %s766 = scalar_lea.vmem [#allocation1], 755
    %v767 = vld [vmem:[%s766] sm:$0x40]
    %vm768 = vcmask 1046534
    %v769 = vsel %vm768, %v767, %v765
    %s770 = scalar_lea.vmem [#allocation1], 1010
    %v771 = vld [vmem:[%s770] sm:$0x80]
    %vm772 = vcmask 1047559
    %v773 = vsel %vm772, %v771, %v769
    %774 = vrot.lane.b32.xlu0 %v773, 120
    %v775 = vpop.permute.xlu0 %774
    %vm776 = vcmask 1048512
    %s777 = scalar_lea.vmem [#allocation0], 16
    %778 = vst.msk [vmem:[%s777] sm:$0xf] %vm776, %v775
    %s779 = scalar_lea.vmem [#allocation0], 20
    %780 = vst.msk [vmem:[%s779] sm:$0xf0] %vm776, %v775
    %s781 = scalar_lea.vmem [#allocation1], 56
    %v782 = vld [vmem:[%s781] sm:$0x1]
    %s783 = scalar_lea.vmem [#allocation1], 311
    %v784 = vld [vmem:[%s783] sm:$0x2]
    %vm785 = vcmask 1041409
    %v786 = vsel %vm785, %v784, %v782
    %s787 = scalar_lea.vmem [#allocation1], 566
    %v788 = vld [vmem:[%s787] sm:$0x4]
    %vm789 = vcmask 1042434
    %v790 = vsel %vm789, %v788, %v786
    %s791 = scalar_lea.vmem [#allocation1], 821
    %v792 = vld [vmem:[%s791] sm:$0x8]
    %vm793 = vcmask 1043459
    %v794 = vsel %vm793, %v792, %v790
    %s795 = scalar_lea.vmem [#allocation1], 116
    %v796 = vld [vmem:[%s795] sm:$0x10]
    %vm797 = vcmask 1044484
    %v798 = vsel %vm797, %v796, %v794
    %s799 = scalar_lea.vmem [#allocation1], 371
    %v800 = vld [vmem:[%s799] sm:$0x20]
    %vm801 = vcmask 1045509
    %v802 = vsel %vm801, %v800, %v798
    %s803 = scalar_lea.vmem [#allocation1], 626
    %v804 = vld [vmem:[%s803] sm:$0x40]
    %vm805 = vcmask 1046534
    %v806 = vsel %vm805, %v804, %v802
    %s807 = scalar_lea.vmem [#allocation1], 881
    %v808 = vld [vmem:[%s807] sm:$0x80]
    %vm809 = vcmask 1047559
    %v810 = vsel %vm809, %v808, %v806
    %811 = vrot.lane.b32.xlu0 %v810, 112
    %v812 = vpop.permute.xlu0 %811
    %vm813 = vcmask 982912
    %814 = vst.msk [vmem:[#allocation0] sm:$0xf] %vm813, %v812
    %s815 = scalar_lea.vmem [#allocation0], 4
    %816 = vst.msk [vmem:[%s815] sm:$0xf0] %vm813, %v812
    %s817 = scalar_lea.vmem [#allocation1], 184
    %v818 = vld [vmem:[%s817] sm:$0x1]
    %s819 = scalar_lea.vmem [#allocation1], 439
    %v820 = vld [vmem:[%s819] sm:$0x2]
    %vm821 = vcmask 1041409
    %v822 = vsel %vm821, %v820, %v818
    %s823 = scalar_lea.vmem [#allocation1], 694
    %v824 = vld [vmem:[%s823] sm:$0x4]
    %vm825 = vcmask 1042434
    %v826 = vsel %vm825, %v824, %v822
    %s827 = scalar_lea.vmem [#allocation1], 949
    %v828 = vld [vmem:[%s827] sm:$0x8]
    %vm829 = vcmask 1043459
    %v830 = vsel %vm829, %v828, %v826
    %s831 = scalar_lea.vmem [#allocation1], 244
    %v832 = vld [vmem:[%s831] sm:$0x10]
    %vm833 = vcmask 1044484
    %v834 = vsel %vm833, %v832, %v830
    %s835 = scalar_lea.vmem [#allocation1], 499
    %v836 = vld [vmem:[%s835] sm:$0x20]
    %vm837 = vcmask 1045509
    %v838 = vsel %vm837, %v836, %v834
    %s839 = scalar_lea.vmem [#allocation1], 754
    %v840 = vld [vmem:[%s839] sm:$0x40]
    %vm841 = vcmask 1046534
    %v842 = vsel %vm841, %v840, %v838
    %s843 = scalar_lea.vmem [#allocation1], 1009
    %v844 = vld [vmem:[%s843] sm:$0x80]
    %vm845 = vcmask 1047559
    %v846 = vsel %vm845, %v844, %v842
    %847 = vrot.lane.b32.xlu0 %v846, 112
    %v848 = vpop.permute.xlu0 %847
    %vm849 = vcmask 982912
    %s850 = scalar_lea.vmem [#allocation0], 16
    %851 = vst.msk [vmem:[%s850] sm:$0xf] %vm849, %v848
    %s852 = scalar_lea.vmem [#allocation0], 20
    %853 = vst.msk [vmem:[%s852] sm:$0xf0] %vm849, %v848
    %s854 = scalar_lea.vmem [#allocation1], 49
    %v855 = vld [vmem:[%s854] sm:$0x1]
    %s856 = scalar_lea.vmem [#allocation1], 304
    %v857 = vld [vmem:[%s856] sm:$0x2]
    %vm858 = vcmask 1041409
    %v859 = vsel %vm858, %v857, %v855
    %s860 = scalar_lea.vmem [#allocation1], 559
    %v861 = vld [vmem:[%s860] sm:$0x4]
    %vm862 = vcmask 1042434
    %v863 = vsel %vm862, %v861, %v859
    %s864 = scalar_lea.vmem [#allocation1], 814
    %v865 = vld [vmem:[%s864] sm:$0x8]
    %vm866 = vcmask 1043459
    %v867 = vsel %vm866, %v865, %v863
    %s868 = scalar_lea.vmem [#allocation1], 109
    %v869 = vld [vmem:[%s868] sm:$0x10]
    %vm870 = vcmask 1044484
    %v871 = vsel %vm870, %v869, %v867
    %s872 = scalar_lea.vmem [#allocation1], 364
    %v873 = vld [vmem:[%s872] sm:$0x20]
    %vm874 = vcmask 1045509
    %v875 = vsel %vm874, %v873, %v871
    %s876 = scalar_lea.vmem [#allocation1], 619
    %v877 = vld [vmem:[%s876] sm:$0x40]
    %vm878 = vcmask 1046534
    %v879 = vsel %vm878, %v877, %v875
    %s880 = scalar_lea.vmem [#allocation1], 874
    %v881 = vld [vmem:[%s880] sm:$0x80]
    %vm882 = vcmask 1047559
    %v883 = vsel %vm882, %v881, %v879
    %884 = vrot.lane.b32.xlu0 %v883, 104
    %v885 = vpop.permute.xlu0 %884
    %vm886 = vcmask 917312
    %887 = vst.msk [vmem:[#allocation0] sm:$0xf] %vm886, %v885
    %s888 = scalar_lea.vmem [#allocation0], 4
    %889 = vst.msk [vmem:[%s888] sm:$0xf0] %vm886, %v885
    %s890 = scalar_lea.vmem [#allocation1], 177
    %v891 = vld [vmem:[%s890] sm:$0x1]
    %s892 = scalar_lea.vmem [#allocation1], 432
    %v893 = vld [vmem:[%s892] sm:$0x2]
    %vm894 = vcmask 1041409
    %v895 = vsel %vm894, %v893, %v891
    %s896 = scalar_lea.vmem [#allocation1], 687
    %v897 = vld [vmem:[%s896] sm:$0x4]
    %vm898 = vcmask 1042434
    %v899 = vsel %vm898, %v897, %v895
    %s900 = scalar_lea.vmem [#allocation1], 942
    %v901 = vld [vmem:[%s900] sm:$0x8]
    %vm902 = vcmask 1043459
    %v903 = vsel %vm902, %v901, %v899
    %s904 = scalar_lea.vmem [#allocation1], 237
    %v905 = vld [vmem:[%s904] sm:$0x10]
    %vm906 = vcmask 1044484
    %v907 = vsel %vm906, %v905, %v903
    %s908 = scalar_lea.vmem [#allocation1], 492
    %v909 = vld [vmem:[%s908] sm:$0x20]
    %vm910 = vcmask 1045509
    %v911 = vsel %vm910, %v909, %v907
    %s912 = scalar_lea.vmem [#allocation1], 747
    %v913 = vld [vmem:[%s912] sm:$0x40]
    %vm914 = vcmask 1046534
    %v915 = vsel %vm914, %v913, %v911
    %s916 = scalar_lea.vmem [#allocation1], 1002
    %v917 = vld [vmem:[%s916] sm:$0x80]
    %vm918 = vcmask 1047559
    %v919 = vsel %vm918, %v917, %v915
    %920 = vrot.lane.b32.xlu0 %v919, 104
    %v921 = vpop.permute.xlu0 %920
    %vm922 = vcmask 917312
    %s923 = scalar_lea.vmem [#allocation0], 16
    %924 = vst.msk [vmem:[%s923] sm:$0xf] %vm922, %v921
    %s925 = scalar_lea.vmem [#allocation0], 20
    %926 = vst.msk [vmem:[%s925] sm:$0xf0] %vm922, %v921
    %s927 = scalar_lea.vmem [#allocation1], 48
    %v928 = vld [vmem:[%s927] sm:$0x1]
    %s929 = scalar_lea.vmem [#allocation1], 303
    %v930 = vld [vmem:[%s929] sm:$0x2]
    %vm931 = vcmask 1041409
    %v932 = vsel %vm931, %v930, %v928
    %s933 = scalar_lea.vmem [#allocation1], 558
    %v934 = vld [vmem:[%s933] sm:$0x4]
    %vm935 = vcmask 1042434
    %v936 = vsel %vm935, %v934, %v932
    %s937 = scalar_lea.vmem [#allocation1], 813
    %v938 = vld [vmem:[%s937] sm:$0x8]
    %vm939 = vcmask 1043459
    %v940 = vsel %vm939, %v938, %v936
    %s941 = scalar_lea.vmem [#allocation1], 108
    %v942 = vld [vmem:[%s941] sm:$0x10]
    %vm943 = vcmask 1044484
    %v944 = vsel %vm943, %v942, %v940
    %s945 = scalar_lea.vmem [#allocation1], 363
    %v946 = vld [vmem:[%s945] sm:$0x20]
    %vm947 = vcmask 1045509
    %v948 = vsel %vm947, %v946, %v944
    %s949 = scalar_lea.vmem [#allocation1], 618
    %v950 = vld [vmem:[%s949] sm:$0x40]
    %vm951 = vcmask 1046534
    %v952 = vsel %vm951, %v950, %v948
    %s953 = scalar_lea.vmem [#allocation1], 873
    %v954 = vld [vmem:[%s953] sm:$0x80]
    %vm955 = vcmask 1047559
    %v956 = vsel %vm955, %v954, %v952
    %957 = vrot.lane.b32.xlu0 %v956, 96
    %v958 = vpop.permute.xlu0 %957
    %vm959 = vcmask 851712
    %960 = vst.msk [vmem:[#allocation0] sm:$0xf] %vm959, %v958
    %s961 = scalar_lea.vmem [#allocation0], 4
    %962 = vst.msk [vmem:[%s961] sm:$0xf0] %vm959, %v958
    %s963 = scalar_lea.vmem [#allocation1], 176
    %v964 = vld [vmem:[%s963] sm:$0x1]
    %s965 = scalar_lea.vmem [#allocation1], 431
    %v966 = vld [vmem:[%s965] sm:$0x2]
    %vm967 = vcmask 1041409
    %v968 = vsel %vm967, %v966, %v964
    %s969 = scalar_lea.vmem [#allocation1], 686
    %v970 = vld [vmem:[%s969] sm:$0x4]
    %vm971 = vcmask 1042434
    %v972 = vsel %vm971, %v970, %v968
    %s973 = scalar_lea.vmem [#allocation1], 941
    %v974 = vld [vmem:[%s973] sm:$0x8]
    %vm975 = vcmask 1043459
    %v976 = vsel %vm975, %v974, %v972
    %s977 = scalar_lea.vmem [#allocation1], 236
    %v978 = vld [vmem:[%s977] sm:$0x10]
    %vm979 = vcmask 1044484
    %v980 = vsel %vm979, %v978, %v976
    %s981 = scalar_lea.vmem [#allocation1], 491
    %v982 = vld [vmem:[%s981] sm:$0x20]
    %vm983 = vcmask 1045509
    %v984 = vsel %vm983, %v982, %v980
    %s985 = scalar_lea.vmem [#allocation1], 746
    %v986 = vld [vmem:[%s985] sm:$0x40]
    %vm987 = vcmask 1046534
    %v988 = vsel %vm987, %v986, %v984
    %s989 = scalar_lea.vmem [#allocation1], 1001
    %v990 = vld [vmem:[%s989] sm:$0x80]
    %vm991 = vcmask 1047559
    %v992 = vsel %vm991, %v990, %v988
    %993 = vrot.lane.b32.xlu0 %v992, 96
    %v994 = vpop.permute.xlu0 %993
    %vm995 = vcmask 851712
    %s996 = scalar_lea.vmem [#allocation0], 16
    %997 = vst.msk [vmem:[%s996] sm:$0xf] %vm995, %v994
    %s998 = scalar_lea.vmem [#allocation0], 20
    %999 = vst.msk [vmem:[%s998] sm:$0xf0] %vm995, %v994
    %s1000 = scalar_lea.vmem [#allocation1], 41
    %v1001 = vld [vmem:[%s1000] sm:$0x1]
    %s1002 = scalar_lea.vmem [#allocation1], 296
    %v1003 = vld [vmem:[%s1002] sm:$0x2]
    %vm1004 = vcmask 1041409
    %v1005 = vsel %vm1004, %v1003, %v1001
    %s1006 = scalar_lea.vmem [#allocation1], 551
    %v1007 = vld [vmem:[%s1006] sm:$0x4]
    %vm1008 = vcmask 1042434
    %v1009 = vsel %vm1008, %v1007, %v1005
    %s1010 = scalar_lea.vmem [#allocation1], 806
    %v1011 = vld [vmem:[%s1010] sm:$0x8]
    %vm1012 = vcmask 1043459
    %v1013 = vsel %vm1012, %v1011, %v1009
    %s1014 = scalar_lea.vmem [#allocation1], 101
    %v1015 = vld [vmem:[%s1014] sm:$0x10]
    %vm1016 = vcmask 1044484
    %v1017 = vsel %vm1016, %v1015, %v1013
    %s1018 = scalar_lea.vmem [#allocation1], 356
    %v1019 = vld [vmem:[%s1018] sm:$0x20]
    %vm1020 = vcmask 1045509
    %v1021 = vsel %vm1020, %v1019, %v1017
    %s1022 = scalar_lea.vmem [#allocation1], 611
    %v1023 = vld [vmem:[%s1022] sm:$0x40]
    %vm1024 = vcmask 1046534
    %v1025 = vsel %vm1024, %v1023, %v1021
    %s1026 = scalar_lea.vmem [#allocation1], 866
    %v1027 = vld [vmem:[%s1026] sm:$0x80]
    %vm1028 = vcmask 1047559
    %v1029 = vsel %vm1028, %v1027, %v1025
    %1030 = vrot.lane.b32.xlu0 %v1029, 88
    %v1031 = vpop.permute.xlu0 %1030
    %vm1032 = vcmask 786112
    %1033 = vst.msk [vmem:[#allocation0] sm:$0xf] %vm1032, %v1031
    %s1034 = scalar_lea.vmem [#allocation0], 4
    %1035 = vst.msk [vmem:[%s1034] sm:$0xf0] %vm1032, %v1031
    %s1036 = scalar_lea.vmem [#allocation1], 169
    %v1037 = vld [vmem:[%s1036] sm:$0x1]
    %s1038 = scalar_lea.vmem [#allocation1], 424
    %v1039 = vld [vmem:[%s1038] sm:$0x2]
    %vm1040 = vcmask 1041409
    %v1041 = vsel %vm1040, %v1039, %v1037
    %s1042 = scalar_lea.vmem [#allocation1], 679
    %v1043 = vld [vmem:[%s1042] sm:$0x4]
    %vm1044 = vcmask 1042434
    %v1045 = vsel %vm1044, %v1043, %v1041
    %s1046 = scalar_lea.vmem [#allocation1], 934
    %v1047 = vld [vmem:[%s1046] sm:$0x8]
    %vm1048 = vcmask 1043459
    %v1049 = vsel %vm1048, %v1047, %v1045
    %s1050 = scalar_lea.vmem [#allocation1], 229
    %v1051 = vld [vmem:[%s1050] sm:$0x10]
    %vm1052 = vcmask 1044484
    %v1053 = vsel %vm1052, %v1051, %v1049
    %s1054 = scalar_lea.vmem [#allocation1], 484
    %v1055 = vld [vmem:[%s1054] sm:$0x20]
    %vm1056 = vcmask 1045509
    %v1057 = vsel %vm1056, %v1055, %v1053
    %s1058 = scalar_lea.vmem [#allocation1], 739
    %v1059 = vld [vmem:[%s1058] sm:$0x40]
    %vm1060 = vcmask 1046534
    %v1061 = vsel %vm1060, %v1059, %v1057
    %s1062 = scalar_lea.vmem [#allocation1], 994
    %v1063 = vld [vmem:[%s1062] sm:$0x80]
    %vm1064 = vcmask 1047559
    %v1065 = vsel %vm1064, %v1063, %v1061
    %1066 = vrot.lane.b32.xlu0 %v1065, 88
    %v1067 = vpop.permute.xlu0 %1066
    %vm1068 = vcmask 786112
    %s1069 = scalar_lea.vmem [#allocation0], 16
    %1070 = vst.msk [vmem:[%s1069] sm:$0xf] %vm1068, %v1067
    %s1071 = scalar_lea.vmem [#allocation0], 20
    %1072 = vst.msk [vmem:[%s1071] sm:$0xf0] %vm1068, %v1067
    %s1073 = scalar_lea.vmem [#allocation1], 40
    %v1074 = vld [vmem:[%s1073] sm:$0x1]
    %s1075 = scalar_lea.vmem [#allocation1], 295
    %v1076 = vld [vmem:[%s1075] sm:$0x2]
    %vm1077 = vcmask 1041409
    %v1078 = vsel %vm1077, %v1076, %v1074
    %s1079 = scalar_lea.vmem [#allocation1], 550
    %v1080 = vld [vmem:[%s1079] sm:$0x4]
    %vm1081 = vcmask 1042434
    %v1082 = vsel %vm1081, %v1080, %v1078
    %s1083 = scalar_lea.vmem [#allocation1], 805
    %v1084 = vld [vmem:[%s1083] sm:$0x8]
    %vm1085 = vcmask 1043459
    %v1086 = vsel %vm1085, %v1084, %v1082
    %s1087 = scalar_lea.vmem [#allocation1], 100
    %v1088 = vld [vmem:[%s1087] sm:$0x10]
    %vm1089 = vcmask 1044484
    %v1090 = vsel %vm1089, %v1088, %v1086
    %s1091 = scalar_lea.vmem [#allocation1], 355
    %v1092 = vld [vmem:[%s1091] sm:$0x20]
    %vm1093 = vcmask 1045509
    %v1094 = vsel %vm1093, %v1092, %v1090
    %s1095 = scalar_lea.vmem [#allocation1], 610
    %v1096 = vld [vmem:[%s1095] sm:$0x40]
    %vm1097 = vcmask 1046534
    %v1098 = vsel %vm1097, %v1096, %v1094
    %s1099 = scalar_lea.vmem [#allocation1], 865
    %v1100 = vld [vmem:[%s1099] sm:$0x80]
    %vm1101 = vcmask 1047559
    %v1102 = vsel %vm1101, %v1100, %v1098
    %1103 = vrot.lane.b32.xlu0 %v1102, 80
    %v1104 = vpop.permute.xlu0 %1103
    %vm1105 = vcmask 720512
    %1106 = vst.msk [vmem:[#allocation0] sm:$0xf] %vm1105, %v1104
    %s1107 = scalar_lea.vmem [#allocation0], 4
    %1108 = vst.msk [vmem:[%s1107] sm:$0xf0] %vm1105, %v1104
    %s1109 = scalar_lea.vmem [#allocation1], 168
    %v1110 = vld [vmem:[%s1109] sm:$0x1]
    %s1111 = scalar_lea.vmem [#allocation1], 423
    %v1112 = vld [vmem:[%s1111] sm:$0x2]
    %vm1113 = vcmask 1041409
    %v1114 = vsel %vm1113, %v1112, %v1110
    %s1115 = scalar_lea.vmem [#allocation1], 678
    %v1116 = vld [vmem:[%s1115] sm:$0x4]
    %vm1117 = vcmask 1042434
    %v1118 = vsel %vm1117, %v1116, %v1114
    %s1119 = scalar_lea.vmem [#allocation1], 933
    %v1120 = vld [vmem:[%s1119] sm:$0x8]
    %vm1121 = vcmask 1043459
    %v1122 = vsel %vm1121, %v1120, %v1118
    %s1123 = scalar_lea.vmem [#allocation1], 228
    %v1124 = vld [vmem:[%s1123] sm:$0x10]
    %vm1125 = vcmask 1044484
    %v1126 = vsel %vm1125, %v1124, %v1122
    %s1127 = scalar_lea.vmem [#allocation1], 483
    %v1128 = vld [vmem:[%s1127] sm:$0x20]
    %vm1129 = vcmask 1045509
    %v1130 = vsel %vm1129, %v1128, %v1126
    %s1131 = scalar_lea.vmem [#allocation1], 738
    %v1132 = vld [vmem:[%s1131] sm:$0x40]
    %vm1133 = vcmask 1046534
    %v1134 = vsel %vm1133, %v1132, %v1130
    %s1135 = scalar_lea.vmem [#allocation1], 993
    %v1136 = vld [vmem:[%s1135] sm:$0x80]
    %vm1137 = vcmask 1047559
    %v1138 = vsel %vm1137, %v1136, %v1134
    %1139 = vrot.lane.b32.xlu0 %v1138, 80
    %v1140 = vpop.permute.xlu0 %1139
    %vm1141 = vcmask 720512
    %s1142 = scalar_lea.vmem [#allocation0], 16
    %1143 = vst.msk [vmem:[%s1142] sm:$0xf] %vm1141, %v1140
    %s1144 = scalar_lea.vmem [#allocation0], 20
    %1145 = vst.msk [vmem:[%s1144] sm:$0xf0] %vm1141, %v1140
    %s1146 = scalar_lea.vmem [#allocation1], 33
    %v1147 = vld [vmem:[%s1146] sm:$0x1]
    %s1148 = scalar_lea.vmem [#allocation1], 288
    %v1149 = vld [vmem:[%s1148] sm:$0x2]
    %vm1150 = vcmask 1041409
    %v1151 = vsel %vm1150, %v1149, %v1147
    %s1152 = scalar_lea.vmem [#allocation1], 543
    %v1153 = vld [vmem:[%s1152] sm:$0x4]
    %vm1154 = vcmask 1042434
    %v1155 = vsel %vm1154, %v1153, %v1151
    %s1156 = scalar_lea.vmem [#allocation1], 798
    %v1157 = vld [vmem:[%s1156] sm:$0x8]
    %vm1158 = vcmask 1043459
    %v1159 = vsel %vm1158, %v1157, %v1155
    %s1160 = scalar_lea.vmem [#allocation1], 93
    %v1161 = vld [vmem:[%s1160] sm:$0x10]
    %vm1162 = vcmask 1044484
    %v1163 = vsel %vm1162, %v1161, %v1159
    %s1164 = scalar_lea.vmem [#allocation1], 348
    %v1165 = vld [vmem:[%s1164] sm:$0x20]
    %vm1166 = vcmask 1045509
    %v1167 = vsel %vm1166, %v1165, %v1163
    %s1168 = scalar_lea.vmem [#allocation1], 603
    %v1169 = vld [vmem:[%s1168] sm:$0x40]
    %vm1170 = vcmask 1046534
    %v1171 = vsel %vm1170, %v1169, %v1167
    %s1172 = scalar_lea.vmem [#allocation1], 858
    %v1173 = vld [vmem:[%s1172] sm:$0x80]
    %vm1174 = vcmask 1047559
    %v1175 = vsel %vm1174, %v1173, %v1171
    %1176 = vrot.lane.b32.xlu0 %v1175, 72
    %v1177 = vpop.permute.xlu0 %1176
    %vm1178 = vcmask 654912
    %1179 = vst.msk [vmem:[#allocation0] sm:$0xf] %vm1178, %v1177
    %s1180 = scalar_lea.vmem [#allocation0], 4
    %1181 = vst.msk [vmem:[%s1180] sm:$0xf0] %vm1178, %v1177
    %s1182 = scalar_lea.vmem [#allocation1], 161
    %v1183 = vld [vmem:[%s1182] sm:$0x1]
    %s1184 = scalar_lea.vmem [#allocation1], 416
    %v1185 = vld [vmem:[%s1184] sm:$0x2]
    %vm1186 = vcmask 1041409
    %v1187 = vsel %vm1186, %v1185, %v1183
    %s1188 = scalar_lea.vmem [#allocation1], 671
    %v1189 = vld [vmem:[%s1188] sm:$0x4]
    %vm1190 = vcmask 1042434
    %v1191 = vsel %vm1190, %v1189, %v1187
    %s1192 = scalar_lea.vmem [#allocation1], 926
    %v1193 = vld [vmem:[%s1192] sm:$0x8]
    %vm1194 = vcmask 1043459
    %v1195 = vsel %vm1194, %v1193, %v1191
    %s1196 = scalar_lea.vmem [#allocation1], 221
    %v1197 = vld [vmem:[%s1196] sm:$0x10]
    %vm1198 = vcmask 1044484
    %v1199 = vsel %vm1198, %v1197, %v1195
    %s1200 = scalar_lea.vmem [#allocation1], 476
    %v1201 = vld [vmem:[%s1200] sm:$0x20]
    %vm1202 = vcmask 1045509
    %v1203 = vsel %vm1202, %v1201, %v1199
    %s1204 = scalar_lea.vmem [#allocation1], 731
    %v1205 = vld [vmem:[%s1204] sm:$0x40]
    %vm1206 = vcmask 1046534
    %v1207 = vsel %vm1206, %v1205, %v1203
    %s1208 = scalar_lea.vmem [#allocation1], 986
    %v1209 = vld [vmem:[%s1208] sm:$0x80]
    %vm1210 = vcmask 1047559
    %v1211 = vsel %vm1210, %v1209, %v1207
    %1212 = vrot.lane.b32.xlu0 %v1211, 72
    %v1213 = vpop.permute.xlu0 %1212
    %vm1214 = vcmask 654912
    %s1215 = scalar_lea.vmem [#allocation0], 16
    %1216 = vst.msk [vmem:[%s1215] sm:$0xf] %vm1214, %v1213
    %s1217 = scalar_lea.vmem [#allocation0], 20
    %1218 = vst.msk [vmem:[%s1217] sm:$0xf0] %vm1214, %v1213
    %s1219 = scalar_lea.vmem [#allocation1], 32
    %v1220 = vld [vmem:[%s1219] sm:$0x1]
    %s1221 = scalar_lea.vmem [#allocation1], 287
    %v1222 = vld [vmem:[%s1221] sm:$0x2]
    %vm1223 = vcmask 1041409
    %v1224 = vsel %vm1223, %v1222, %v1220
    %s1225 = scalar_lea.vmem [#allocation1], 542
    %v1226 = vld [vmem:[%s1225] sm:$0x4]
    %vm1227 = vcmask 1042434
    %v1228 = vsel %vm1227, %v1226, %v1224
    %s1229 = scalar_lea.vmem [#allocation1], 797
    %v1230 = vld [vmem:[%s1229] sm:$0x8]
    %vm1231 = vcmask 1043459
    %v1232 = vsel %vm1231, %v1230, %v1228
    %s1233 = scalar_lea.vmem [#allocation1], 92
    %v1234 = vld [vmem:[%s1233] sm:$0x10]
    %vm1235 = vcmask 1044484
    %v1236 = vsel %vm1235, %v1234, %v1232
    %s1237 = scalar_lea.vmem [#allocation1], 347
    %v1238 = vld [vmem:[%s1237] sm:$0x20]
    %vm1239 = vcmask 1045509
    %v1240 = vsel %vm1239, %v1238, %v1236
    %s1241 = scalar_lea.vmem [#allocation1], 602
    %v1242 = vld [vmem:[%s1241] sm:$0x40]
    %vm1243 = vcmask 1046534
    %v1244 = vsel %vm1243, %v1242, %v1240
    %s1245 = scalar_lea.vmem [#allocation1], 857
    %v1246 = vld [vmem:[%s1245] sm:$0x80]
    %vm1247 = vcmask 1047559
    %v1248 = vsel %vm1247, %v1246, %v1244
    %1249 = vrot.lane.b32.xlu0 %v1248, 64
    %v1250 = vpop.permute.xlu0 %1249
    %vm1251 = vcmask 589312
    %1252 = vst.msk [vmem:[#allocation0] sm:$0xf] %vm1251, %v1250
    %s1253 = scalar_lea.vmem [#allocation0], 4
    %1254 = vst.msk [vmem:[%s1253] sm:$0xf0] %vm1251, %v1250
    %s1255 = scalar_lea.vmem [#allocation1], 160
    %v1256 = vld [vmem:[%s1255] sm:$0x1]
    %s1257 = scalar_lea.vmem [#allocation1], 415
    %v1258 = vld [vmem:[%s1257] sm:$0x2]
    %vm1259 = vcmask 1041409
    %v1260 = vsel %vm1259, %v1258, %v1256
    %s1261 = scalar_lea.vmem [#allocation1], 670
    %v1262 = vld [vmem:[%s1261] sm:$0x4]
    %vm1263 = vcmask 1042434
    %v1264 = vsel %vm1263, %v1262, %v1260
    %s1265 = scalar_lea.vmem [#allocation1], 925
    %v1266 = vld [vmem:[%s1265] sm:$0x8]
    %vm1267 = vcmask 1043459
    %v1268 = vsel %vm1267, %v1266, %v1264
    %s1269 = scalar_lea.vmem [#allocation1], 220
    %v1270 = vld [vmem:[%s1269] sm:$0x10]
    %vm1271 = vcmask 1044484
    %v1272 = vsel %vm1271, %v1270, %v1268
    %s1273 = scalar_lea.vmem [#allocation1], 475
    %v1274 = vld [vmem:[%s1273] sm:$0x20]
    %vm1275 = vcmask 1045509
    %v1276 = vsel %vm1275, %v1274, %v1272
    %s1277 = scalar_lea.vmem [#allocation1], 730
    %v1278 = vld [vmem:[%s1277] sm:$0x40]
    %vm1279 = vcmask 1046534
    %v1280 = vsel %vm1279, %v1278, %v1276
    %s1281 = scalar_lea.vmem [#allocation1], 985
    %v1282 = vld [vmem:[%s1281] sm:$0x80]
    %vm1283 = vcmask 1047559
    %v1284 = vsel %vm1283, %v1282, %v1280
    %1285 = vrot.lane.b32.xlu0 %v1284, 64
    %v1286 = vpop.permute.xlu0 %1285
    %vm1287 = vcmask 589312
    %s1288 = scalar_lea.vmem [#allocation0], 16
    %1289 = vst.msk [vmem:[%s1288] sm:$0xf] %vm1287, %v1286
    %s1290 = scalar_lea.vmem [#allocation0], 20
    %1291 = vst.msk [vmem:[%s1290] sm:$0xf0] %vm1287, %v1286
    %s1292 = scalar_lea.vmem [#allocation1], 25
    %v1293 = vld [vmem:[%s1292] sm:$0x1]
    %s1294 = scalar_lea.vmem [#allocation1], 280
    %v1295 = vld [vmem:[%s1294] sm:$0x2]
    %vm1296 = vcmask 1041409
    %v1297 = vsel %vm1296, %v1295, %v1293
    %s1298 = scalar_lea.vmem [#allocation1], 535
    %v1299 = vld [vmem:[%s1298] sm:$0x4]
    %vm1300 = vcmask 1042434
    %v1301 = vsel %vm1300, %v1299, %v1297
    %s1302 = scalar_lea.vmem [#allocation1], 790
    %v1303 = vld [vmem:[%s1302] sm:$0x8]
    %vm1304 = vcmask 1043459
    %v1305 = vsel %vm1304, %v1303, %v1301
    %s1306 = scalar_lea.vmem [#allocation1], 85
    %v1307 = vld [vmem:[%s1306] sm:$0x10]
    %vm1308 = vcmask 1044484
    %v1309 = vsel %vm1308, %v1307, %v1305
    %s1310 = scalar_lea.vmem [#allocation1], 340
    %v1311 = vld [vmem:[%s1310] sm:$0x20]
    %vm1312 = vcmask 1045509
    %v1313 = vsel %vm1312, %v1311, %v1309
    %s1314 = scalar_lea.vmem [#allocation1], 595
    %v1315 = vld [vmem:[%s1314] sm:$0x40]
    %vm1316 = vcmask 1046534
    %v1317 = vsel %vm1316, %v1315, %v1313
    %s1318 = scalar_lea.vmem [#allocation1], 850
    %v1319 = vld [vmem:[%s1318] sm:$0x80]
    %vm1320 = vcmask 1047559
    %v1321 = vsel %vm1320, %v1319, %v1317
    %1322 = vrot.lane.b32.xlu0 %v1321, 56
    %v1323 = vpop.permute.xlu0 %1322
    %vm1324 = vcmask 523712
    %1325 = vst.msk [vmem:[#allocation0] sm:$0xf] %vm1324, %v1323
    %s1326 = scalar_lea.vmem [#allocation0], 4
    %1327 = vst.msk [vmem:[%s1326] sm:$0xf0] %vm1324, %v1323
    %s1328 = scalar_lea.vmem [#allocation1], 153
    %v1329 = vld [vmem:[%s1328] sm:$0x1]
    %s1330 = scalar_lea.vmem [#allocation1], 408
    %v1331 = vld [vmem:[%s1330] sm:$0x2]
    %vm1332 = vcmask 1041409
    %v1333 = vsel %vm1332, %v1331, %v1329
    %s1334 = scalar_lea.vmem [#allocation1], 663
    %v1335 = vld [vmem:[%s1334] sm:$0x4]
    %vm1336 = vcmask 1042434
    %v1337 = vsel %vm1336, %v1335, %v1333
    %s1338 = scalar_lea.vmem [#allocation1], 918
    %v1339 = vld [vmem:[%s1338] sm:$0x8]
    %vm1340 = vcmask 1043459
    %v1341 = vsel %vm1340, %v1339, %v1337
    %s1342 = scalar_lea.vmem [#allocation1], 213
    %v1343 = vld [vmem:[%s1342] sm:$0x10]
    %vm1344 = vcmask 1044484
    %v1345 = vsel %vm1344, %v1343, %v1341
    %s1346 = scalar_lea.vmem [#allocation1], 468
    %v1347 = vld [vmem:[%s1346] sm:$0x20]
    %vm1348 = vcmask 1045509
    %v1349 = vsel %vm1348, %v1347, %v1345
    %s1350 = scalar_lea.vmem [#allocation1], 723
    %v1351 = vld [vmem:[%s1350] sm:$0x40]
    %vm1352 = vcmask 1046534
    %v1353 = vsel %vm1352, %v1351, %v1349
    %s1354 = scalar_lea.vmem [#allocation1], 978
    %v1355 = vld [vmem:[%s1354] sm:$0x80]
    %vm1356 = vcmask 1047559
    %v1357 = vsel %vm1356, %v1355, %v1353
    %1358 = vrot.lane.b32.xlu0 %v1357, 56
    %v1359 = vpop.permute.xlu0 %1358
    %vm1360 = vcmask 523712
    %s1361 = scalar_lea.vmem [#allocation0], 16
    %1362 = vst.msk [vmem:[%s1361] sm:$0xf] %vm1360, %v1359
    %s1363 = scalar_lea.vmem [#allocation0], 20
    %1364 = vst.msk [vmem:[%s1363] sm:$0xf0] %vm1360, %v1359
    %s1365 = scalar_lea.vmem [#allocation1], 24
    %v1366 = vld [vmem:[%s1365] sm:$0x1]
    %s1367 = scalar_lea.vmem [#allocation1], 279
    %v1368 = vld [vmem:[%s1367] sm:$0x2]
    %vm1369 = vcmask 1041409
    %v1370 = vsel %vm1369, %v1368, %v1366
    %s1371 = scalar_lea.vmem [#allocation1], 534
    %v1372 = vld [vmem:[%s1371] sm:$0x4]
    %vm1373 = vcmask 1042434
    %v1374 = vsel %vm1373, %v1372, %v1370
    %s1375 = scalar_lea.vmem [#allocation1], 789
    %v1376 = vld [vmem:[%s1375] sm:$0x8]
    %vm1377 = vcmask 1043459
    %v1378 = vsel %vm1377, %v1376, %v1374
    %s1379 = scalar_lea.vmem [#allocation1], 84
    %v1380 = vld [vmem:[%s1379] sm:$0x10]
    %vm1381 = vcmask 1044484
    %v1382 = vsel %vm1381, %v1380, %v1378
    %s1383 = scalar_lea.vmem [#allocation1], 339
    %v1384 = vld [vmem:[%s1383] sm:$0x20]
    %vm1385 = vcmask 1045509
    %v1386 = vsel %vm1385, %v1384, %v1382
    %s1387 = scalar_lea.vmem [#allocation1], 594
    %v1388 = vld [vmem:[%s1387] sm:$0x40]
    %vm1389 = vcmask 1046534
    %v1390 = vsel %vm1389, %v1388, %v1386
    %s1391 = scalar_lea.vmem [#allocation1], 849
    %v1392 = vld [vmem:[%s1391] sm:$0x80]
    %vm1393 = vcmask 1047559
    %v1394 = vsel %vm1393, %v1392, %v1390
    %1395 = vrot.lane.b32.xlu0 %v1394, 48
    %v1396 = vpop.permute.xlu0 %1395
    %vm1397 = vcmask 458112
    %1398 = vst.msk [vmem:[#allocation0] sm:$0xf] %vm1397, %v1396
    %s1399 = scalar_lea.vmem [#allocation0], 4
    %1400 = vst.msk [vmem:[%s1399] sm:$0xf0] %vm1397, %v1396
    %s1401 = scalar_lea.vmem [#allocation1], 152
    %v1402 = vld [vmem:[%s1401] sm:$0x1]
    %s1403 = scalar_lea.vmem [#allocation1], 407
    %v1404 = vld [vmem:[%s1403] sm:$0x2]
    %vm1405 = vcmask 1041409
    %v1406 = vsel %vm1405, %v1404, %v1402
    %s1407 = scalar_lea.vmem [#allocation1], 662
    %v1408 = vld [vmem:[%s1407] sm:$0x4]
    %vm1409 = vcmask 1042434
    %v1410 = vsel %vm1409, %v1408, %v1406
    %s1411 = scalar_lea.vmem [#allocation1], 917
    %v1412 = vld [vmem:[%s1411] sm:$0x8]
    %vm1413 = vcmask 1043459
    %v1414 = vsel %vm1413, %v1412, %v1410
    %s1415 = scalar_lea.vmem [#allocation1], 212
    %v1416 = vld [vmem:[%s1415] sm:$0x10]
    %vm1417 = vcmask 1044484
    %v1418 = vsel %vm1417, %v1416, %v1414
    %s1419 = scalar_lea.vmem [#allocation1], 467
    %v1420 = vld [vmem:[%s1419] sm:$0x20]
    %vm1421 = vcmask 1045509
    %v1422 = vsel %vm1421, %v1420, %v1418
    %s1423 = scalar_lea.vmem [#allocation1], 722
    %v1424 = vld [vmem:[%s1423] sm:$0x40]
    %vm1425 = vcmask 1046534
    %v1426 = vsel %vm1425, %v1424, %v1422
    %s1427 = scalar_lea.vmem [#allocation1], 977
    %v1428 = vld [vmem:[%s1427] sm:$0x80]
    %vm1429 = vcmask 1047559
    %v1430 = vsel %vm1429, %v1428, %v1426
    %1431 = vrot.lane.b32.xlu0 %v1430, 48
    %v1432 = vpop.permute.xlu0 %1431
    %vm1433 = vcmask 458112
    %s1434 = scalar_lea.vmem [#allocation0], 16
    %1435 = vst.msk [vmem:[%s1434] sm:$0xf] %vm1433, %v1432
    %s1436 = scalar_lea.vmem [#allocation0], 20
    %1437 = vst.msk [vmem:[%s1436] sm:$0xf0] %vm1433, %v1432
    %s1438 = scalar_lea.vmem [#allocation1], 17
    %v1439 = vld [vmem:[%s1438] sm:$0x1]
    %s1440 = scalar_lea.vmem [#allocation1], 272
    %v1441 = vld [vmem:[%s1440] sm:$0x2]
    %vm1442 = vcmask 1041409
    %v1443 = vsel %vm1442, %v1441, %v1439
    %s1444 = scalar_lea.vmem [#allocation1], 527
    %v1445 = vld [vmem:[%s1444] sm:$0x4]
    %vm1446 = vcmask 1042434
    %v1447 = vsel %vm1446, %v1445, %v1443
    %s1448 = scalar_lea.vmem [#allocation1], 782
    %v1449 = vld [vmem:[%s1448] sm:$0x8]
    %vm1450 = vcmask 1043459
    %v1451 = vsel %vm1450, %v1449, %v1447
    %s1452 = scalar_lea.vmem [#allocation1], 77
    %v1453 = vld [vmem:[%s1452] sm:$0x10]
    %vm1454 = vcmask 1044484
    %v1455 = vsel %vm1454, %v1453, %v1451
    %s1456 = scalar_lea.vmem [#allocation1], 332
    %v1457 = vld [vmem:[%s1456] sm:$0x20]
    %vm1458 = vcmask 1045509
    %v1459 = vsel %vm1458, %v1457, %v1455
    %s1460 = scalar_lea.vmem [#allocation1], 587
    %v1461 = vld [vmem:[%s1460] sm:$0x40]
    %vm1462 = vcmask 1046534
    %v1463 = vsel %vm1462, %v1461, %v1459
    %s1464 = scalar_lea.vmem [#allocation1], 842
    %v1465 = vld [vmem:[%s1464] sm:$0x80]
    %vm1466 = vcmask 1047559
    %v1467 = vsel %vm1466, %v1465, %v1463
    %1468 = vrot.lane.b32.xlu0 %v1467, 40
    %v1469 = vpop.permute.xlu0 %1468
    %vm1470 = vcmask 392512
    %1471 = vst.msk [vmem:[#allocation0] sm:$0xf] %vm1470, %v1469
    %s1472 = scalar_lea.vmem [#allocation0], 4
    %1473 = vst.msk [vmem:[%s1472] sm:$0xf0] %vm1470, %v1469
    %s1474 = scalar_lea.vmem [#allocation1], 145
    %v1475 = vld [vmem:[%s1474] sm:$0x1]
    %s1476 = scalar_lea.vmem [#allocation1], 400
    %v1477 = vld [vmem:[%s1476] sm:$0x2]
    %vm1478 = vcmask 1041409
    %v1479 = vsel %vm1478, %v1477, %v1475
    %s1480 = scalar_lea.vmem [#allocation1], 655
    %v1481 = vld [vmem:[%s1480] sm:$0x4]
    %vm1482 = vcmask 1042434
    %v1483 = vsel %vm1482, %v1481, %v1479
    %s1484 = scalar_lea.vmem [#allocation1], 910
    %v1485 = vld [vmem:[%s1484] sm:$0x8]
    %vm1486 = vcmask 1043459
    %v1487 = vsel %vm1486, %v1485, %v1483
    %s1488 = scalar_lea.vmem [#allocation1], 205
    %v1489 = vld [vmem:[%s1488] sm:$0x10]
    %vm1490 = vcmask 1044484
    %v1491 = vsel %vm1490, %v1489, %v1487
    %s1492 = scalar_lea.vmem [#allocation1], 460
    %v1493 = vld [vmem:[%s1492] sm:$0x20]
    %vm1494 = vcmask 1045509
    %v1495 = vsel %vm1494, %v1493, %v1491
    %s1496 = scalar_lea.vmem [#allocation1], 715
    %v1497 = vld [vmem:[%s1496] sm:$0x40]
    %vm1498 = vcmask 1046534
    %v1499 = vsel %vm1498, %v1497, %v1495
    %s1500 = scalar_lea.vmem [#allocation1], 970
    %v1501 = vld [vmem:[%s1500] sm:$0x80]
    %vm1502 = vcmask 1047559
    %v1503 = vsel %vm1502, %v1501, %v1499
    %1504 = vrot.lane.b32.xlu0 %v1503, 40
    %v1505 = vpop.permute.xlu0 %1504
    %vm1506 = vcmask 392512
    %s1507 = scalar_lea.vmem [#allocation0], 16
    %1508 = vst.msk [vmem:[%s1507] sm:$0xf] %vm1506, %v1505
    %s1509 = scalar_lea.vmem [#allocation0], 20
    %1510 = vst.msk [vmem:[%s1509] sm:$0xf0] %vm1506, %v1505
    %s1511 = scalar_lea.vmem [#allocation1], 16
    %v1512 = vld [vmem:[%s1511] sm:$0x1]
    %s1513 = scalar_lea.vmem [#allocation1], 271
    %v1514 = vld [vmem:[%s1513] sm:$0x2]
    %vm1515 = vcmask 1041409
    %v1516 = vsel %vm1515, %v1514, %v1512
    %s1517 = scalar_lea.vmem [#allocation1], 526
    %v1518 = vld [vmem:[%s1517] sm:$0x4]
    %vm1519 = vcmask 1042434
    %v1520 = vsel %vm1519, %v1518, %v1516
    %s1521 = scalar_lea.vmem [#allocation1], 781
    %v1522 = vld [vmem:[%s1521] sm:$0x8]
    %vm1523 = vcmask 1043459
    %v1524 = vsel %vm1523, %v1522, %v1520
    %s1525 = scalar_lea.vmem [#allocation1], 76
    %v1526 = vld [vmem:[%s1525] sm:$0x10]
    %vm1527 = vcmask 1044484
    %v1528 = vsel %vm1527, %v1526, %v1524
    %s1529 = scalar_lea.vmem [#allocation1], 331
    %v1530 = vld [vmem:[%s1529] sm:$0x20]
    %vm1531 = vcmask 1045509
    %v1532 = vsel %vm1531, %v1530, %v1528
    %s1533 = scalar_lea.vmem [#allocation1], 586
    %v1534 = vld [vmem:[%s1533] sm:$0x40]
    %vm1535 = vcmask 1046534
    %v1536 = vsel %vm1535, %v1534, %v1532
    %s1537 = scalar_lea.vmem [#allocation1], 841
    %v1538 = vld [vmem:[%s1537] sm:$0x80]
    %vm1539 = vcmask 1047559
    %v1540 = vsel %vm1539, %v1538, %v1536
    %1541 = vrot.lane.b32.xlu0 %v1540, 32
    %v1542 = vpop.permute.xlu0 %1541
    %vm1543 = vcmask 326912
    %1544 = vst.msk [vmem:[#allocation0] sm:$0xf] %vm1543, %v1542
    %s1545 = scalar_lea.vmem [#allocation0], 4
    %1546 = vst.msk [vmem:[%s1545] sm:$0xf0] %vm1543, %v1542
    %s1547 = scalar_lea.vmem [#allocation1], 144
    %v1548 = vld [vmem:[%s1547] sm:$0x1]
    %s1549 = scalar_lea.vmem [#allocation1], 399
    %v1550 = vld [vmem:[%s1549] sm:$0x2]
    %vm1551 = vcmask 1041409
    %v1552 = vsel %vm1551, %v1550, %v1548
    %s1553 = scalar_lea.vmem [#allocation1], 654
    %v1554 = vld [vmem:[%s1553] sm:$0x4]
    %vm1555 = vcmask 1042434
    %v1556 = vsel %vm1555, %v1554, %v1552
    %s1557 = scalar_lea.vmem [#allocation1], 909
    %v1558 = vld [vmem:[%s1557] sm:$0x8]
    %vm1559 = vcmask 1043459
    %v1560 = vsel %vm1559, %v1558, %v1556
    %s1561 = scalar_lea.vmem [#allocation1], 204
    %v1562 = vld [vmem:[%s1561] sm:$0x10]
    %vm1563 = vcmask 1044484
    %v1564 = vsel %vm1563, %v1562, %v1560
    %s1565 = scalar_lea.vmem [#allocation1], 459
    %v1566 = vld [vmem:[%s1565] sm:$0x20]
    %vm1567 = vcmask 1045509
    %v1568 = vsel %vm1567, %v1566, %v1564
    %s1569 = scalar_lea.vmem [#allocation1], 714
    %v1570 = vld [vmem:[%s1569] sm:$0x40]
    %vm1571 = vcmask 1046534
    %v1572 = vsel %vm1571, %v1570, %v1568
    %s1573 = scalar_lea.vmem [#allocation1], 969
    %v1574 = vld [vmem:[%s1573] sm:$0x80]
    %vm1575 = vcmask 1047559
    %v1576 = vsel %vm1575, %v1574, %v1572
    %1577 = vrot.lane.b32.xlu0 %v1576, 32
    %v1578 = vpop.permute.xlu0 %1577
    %vm1579 = vcmask 326912
    %s1580 = scalar_lea.vmem [#allocation0], 16
    %1581 = vst.msk [vmem:[%s1580] sm:$0xf] %vm1579, %v1578
    %s1582 = scalar_lea.vmem [#allocation0], 20
    %1583 = vst.msk [vmem:[%s1582] sm:$0xf0] %vm1579, %v1578
    %s1584 = scalar_lea.vmem [#allocation1], 9
    %v1585 = vld [vmem:[%s1584] sm:$0x1]
    %s1586 = scalar_lea.vmem [#allocation1], 264
    %v1587 = vld [vmem:[%s1586] sm:$0x2]
    %vm1588 = vcmask 1041409
    %v1589 = vsel %vm1588, %v1587, %v1585
    %s1590 = scalar_lea.vmem [#allocation1], 519
    %v1591 = vld [vmem:[%s1590] sm:$0x4]
    %vm1592 = vcmask 1042434
    %v1593 = vsel %vm1592, %v1591, %v1589
    %s1594 = scalar_lea.vmem [#allocation1], 774
    %v1595 = vld [vmem:[%s1594] sm:$0x8]
    %vm1596 = vcmask 1043459
    %v1597 = vsel %vm1596, %v1595, %v1593
    %s1598 = scalar_lea.vmem [#allocation1], 69
    %v1599 = vld [vmem:[%s1598] sm:$0x10]
    %vm1600 = vcmask 1044484
    %v1601 = vsel %vm1600, %v1599, %v1597
    %s1602 = scalar_lea.vmem [#allocation1], 324
    %v1603 = vld [vmem:[%s1602] sm:$0x20]
    %vm1604 = vcmask 1045509
    %v1605 = vsel %vm1604, %v1603, %v1601
    %s1606 = scalar_lea.vmem [#allocation1], 579
    %v1607 = vld [vmem:[%s1606] sm:$0x40]
    %vm1608 = vcmask 1046534
    %v1609 = vsel %vm1608, %v1607, %v1605
    %s1610 = scalar_lea.vmem [#allocation1], 834
    %v1611 = vld [vmem:[%s1610] sm:$0x80]
    %vm1612 = vcmask 1047559
    %v1613 = vsel %vm1612, %v1611, %v1609
    %1614 = vrot.lane.b32.xlu0 %v1613, 24
    %v1615 = vpop.permute.xlu0 %1614
    %vm1616 = vcmask 261312
    %1617 = vst.msk [vmem:[#allocation0] sm:$0xf] %vm1616, %v1615
    %s1618 = scalar_lea.vmem [#allocation0], 4
    %1619 = vst.msk [vmem:[%s1618] sm:$0xf0] %vm1616, %v1615
    %s1620 = scalar_lea.vmem [#allocation1], 137
    %v1621 = vld [vmem:[%s1620] sm:$0x1]
    %s1622 = scalar_lea.vmem [#allocation1], 392
    %v1623 = vld [vmem:[%s1622] sm:$0x2]
    %vm1624 = vcmask 1041409
    %v1625 = vsel %vm1624, %v1623, %v1621
    %s1626 = scalar_lea.vmem [#allocation1], 647
    %v1627 = vld [vmem:[%s1626] sm:$0x4]
    %vm1628 = vcmask 1042434
    %v1629 = vsel %vm1628, %v1627, %v1625
    %s1630 = scalar_lea.vmem [#allocation1], 902
    %v1631 = vld [vmem:[%s1630] sm:$0x8]
    %vm1632 = vcmask 1043459
    %v1633 = vsel %vm1632, %v1631, %v1629
    %s1634 = scalar_lea.vmem [#allocation1], 197
    %v1635 = vld [vmem:[%s1634] sm:$0x10]
    %vm1636 = vcmask 1044484
    %v1637 = vsel %vm1636, %v1635, %v1633
    %s1638 = scalar_lea.vmem [#allocation1], 452
    %v1639 = vld [vmem:[%s1638] sm:$0x20]
    %vm1640 = vcmask 1045509
    %v1641 = vsel %vm1640, %v1639, %v1637
    %s1642 = scalar_lea.vmem [#allocation1], 707
    %v1643 = vld [vmem:[%s1642] sm:$0x40]
    %vm1644 = vcmask 1046534
    %v1645 = vsel %vm1644, %v1643, %v1641
    %s1646 = scalar_lea.vmem [#allocation1], 962
    %v1647 = vld [vmem:[%s1646] sm:$0x80]
    %vm1648 = vcmask 1047559
    %v1649 = vsel %vm1648, %v1647, %v1645
    %1650 = vrot.lane.b32.xlu0 %v1649, 24
    %v1651 = vpop.permute.xlu0 %1650
    %vm1652 = vcmask 261312
    %s1653 = scalar_lea.vmem [#allocation0], 16
    %1654 = vst.msk [vmem:[%s1653] sm:$0xf] %vm1652, %v1651
    %s1655 = scalar_lea.vmem [#allocation0], 20
    %1656 = vst.msk [vmem:[%s1655] sm:$0xf0] %vm1652, %v1651
    %s1657 = scalar_lea.vmem [#allocation1], 8
    %v1658 = vld [vmem:[%s1657] sm:$0x1]
    %s1659 = scalar_lea.vmem [#allocation1], 263
    %v1660 = vld [vmem:[%s1659] sm:$0x2]
    %vm1661 = vcmask 1041409
    %v1662 = vsel %vm1661, %v1660, %v1658
    %s1663 = scalar_lea.vmem [#allocation1], 518
    %v1664 = vld [vmem:[%s1663] sm:$0x4]
    %vm1665 = vcmask 1042434
    %v1666 = vsel %vm1665, %v1664, %v1662
    %s1667 = scalar_lea.vmem [#allocation1], 773
    %v1668 = vld [vmem:[%s1667] sm:$0x8]
    %vm1669 = vcmask 1043459
    %v1670 = vsel %vm1669, %v1668, %v1666
    %s1671 = scalar_lea.vmem [#allocation1], 68
    %v1672 = vld [vmem:[%s1671] sm:$0x10]
    %vm1673 = vcmask 1044484
    %v1674 = vsel %vm1673, %v1672, %v1670
    %s1675 = scalar_lea.vmem [#allocation1], 323
    %v1676 = vld [vmem:[%s1675] sm:$0x20]
    %vm1677 = vcmask 1045509
    %v1678 = vsel %vm1677, %v1676, %v1674
    %s1679 = scalar_lea.vmem [#allocation1], 578
    %v1680 = vld [vmem:[%s1679] sm:$0x40]
    %vm1681 = vcmask 1046534
    %v1682 = vsel %vm1681, %v1680, %v1678
    %s1683 = scalar_lea.vmem [#allocation1], 833
    %v1684 = vld [vmem:[%s1683] sm:$0x80]
    %vm1685 = vcmask 1047559
    %v1686 = vsel %vm1685, %v1684, %v1682
    %1687 = vrot.lane.b32.xlu0 %v1686, 16
    %v1688 = vpop.permute.xlu0 %1687
    %vm1689 = vcmask 195712
    %1690 = vst.msk [vmem:[#allocation0] sm:$0xf] %vm1689, %v1688
    %s1691 = scalar_lea.vmem [#allocation0], 4
    %1692 = vst.msk [vmem:[%s1691] sm:$0xf0] %vm1689, %v1688
    %s1693 = scalar_lea.vmem [#allocation1], 136
    %v1694 = vld [vmem:[%s1693] sm:$0x1]
    %s1695 = scalar_lea.vmem [#allocation1], 391
    %v1696 = vld [vmem:[%s1695] sm:$0x2]
    %vm1697 = vcmask 1041409
    %v1698 = vsel %vm1697, %v1696, %v1694
    %s1699 = scalar_lea.vmem [#allocation1], 646
    %v1700 = vld [vmem:[%s1699] sm:$0x4]
    %vm1701 = vcmask 1042434
    %v1702 = vsel %vm1701, %v1700, %v1698
    %s1703 = scalar_lea.vmem [#allocation1], 901
    %v1704 = vld [vmem:[%s1703] sm:$0x8]
    %vm1705 = vcmask 1043459
    %v1706 = vsel %vm1705, %v1704, %v1702
    %s1707 = scalar_lea.vmem [#allocation1], 196
    %v1708 = vld [vmem:[%s1707] sm:$0x10]
    %vm1709 = vcmask 1044484
    %v1710 = vsel %vm1709, %v1708, %v1706
    %s1711 = scalar_lea.vmem [#allocation1], 451
    %v1712 = vld [vmem:[%s1711] sm:$0x20]
    %vm1713 = vcmask 1045509
    %v1714 = vsel %vm1713, %v1712, %v1710
    %s1715 = scalar_lea.vmem [#allocation1], 706
    %v1716 = vld [vmem:[%s1715] sm:$0x40]
    %vm1717 = vcmask 1046534
    %v1718 = vsel %vm1717, %v1716, %v1714
    %s1719 = scalar_lea.vmem [#allocation1], 961
    %v1720 = vld [vmem:[%s1719] sm:$0x80]
    %vm1721 = vcmask 1047559
    %v1722 = vsel %vm1721, %v1720, %v1718
    %1723 = vrot.lane.b32.xlu0 %v1722, 16
    %v1724 = vpop.permute.xlu0 %1723
    %vm1725 = vcmask 195712
    %s1726 = scalar_lea.vmem [#allocation0], 16
    %1727 = vst.msk [vmem:[%s1726] sm:$0xf] %vm1725, %v1724
    %s1728 = scalar_lea.vmem [#allocation0], 20
    %1729 = vst.msk [vmem:[%s1728] sm:$0xf0] %vm1725, %v1724
    %s1730 = scalar_lea.vmem [#allocation1], 1
    %v1731 = vld [vmem:[%s1730] sm:$0x1]
    %s1732 = scalar_lea.vmem [#allocation1], 256
    %v1733 = vld [vmem:[%s1732] sm:$0x2]
    %vm1734 = vcmask 1041409
    %v1735 = vsel %vm1734, %v1733, %v1731
    %s1736 = scalar_lea.vmem [#allocation1], 511
    %v1737 = vld [vmem:[%s1736] sm:$0x4]
    %vm1738 = vcmask 1042434
    %v1739 = vsel %vm1738, %v1737, %v1735
    %s1740 = scalar_lea.vmem [#allocation1], 766
    %v1741 = vld [vmem:[%s1740] sm:$0x8]
    %vm1742 = vcmask 1043459
    %v1743 = vsel %vm1742, %v1741, %v1739
    %s1744 = scalar_lea.vmem [#allocation1], 61
    %v1745 = vld [vmem:[%s1744] sm:$0x10]
    %vm1746 = vcmask 1044484
    %v1747 = vsel %vm1746, %v1745, %v1743
    %s1748 = scalar_lea.vmem [#allocation1], 316
    %v1749 = vld [vmem:[%s1748] sm:$0x20]
    %vm1750 = vcmask 1045509
    %v1751 = vsel %vm1750, %v1749, %v1747
    %s1752 = scalar_lea.vmem [#allocation1], 571
    %v1753 = vld [vmem:[%s1752] sm:$0x40]
    %vm1754 = vcmask 1046534
    %v1755 = vsel %vm1754, %v1753, %v1751
    %s1756 = scalar_lea.vmem [#allocation1], 826
    %v1757 = vld [vmem:[%s1756] sm:$0x80]
    %vm1758 = vcmask 1047559
    %v1759 = vsel %vm1758, %v1757, %v1755
    %1760 = vrot.lane.b32.xlu0 %v1759, 8
    %v1761 = vpop.permute.xlu0 %1760
    %vm1762 = vcmask 130112
    %1763 = vst.msk [vmem:[#allocation0] sm:$0xf] %vm1762, %v1761
    %s1764 = scalar_lea.vmem [#allocation0], 4
    %1765 = vst.msk [vmem:[%s1764] sm:$0xf0] %vm1762, %v1761
    %s1766 = scalar_lea.vmem [#allocation1], 129
    %v1767 = vld [vmem:[%s1766] sm:$0x1]
    %s1768 = scalar_lea.vmem [#allocation1], 384
    %v1769 = vld [vmem:[%s1768] sm:$0x2]
    %vm1770 = vcmask 1041409
    %v1771 = vsel %vm1770, %v1769, %v1767
    %s1772 = scalar_lea.vmem [#allocation1], 639
    %v1773 = vld [vmem:[%s1772] sm:$0x4]
    %vm1774 = vcmask 1042434
    %v1775 = vsel %vm1774, %v1773, %v1771
    %s1776 = scalar_lea.vmem [#allocation1], 894
    %v1777 = vld [vmem:[%s1776] sm:$0x8]
    %vm1778 = vcmask 1043459
    %v1779 = vsel %vm1778, %v1777, %v1775
    %s1780 = scalar_lea.vmem [#allocation1], 189
    %v1781 = vld [vmem:[%s1780] sm:$0x10]
    %vm1782 = vcmask 1044484
    %v1783 = vsel %vm1782, %v1781, %v1779
    %s1784 = scalar_lea.vmem [#allocation1], 444
    %v1785 = vld [vmem:[%s1784] sm:$0x20]
    %vm1786 = vcmask 1045509
    %v1787 = vsel %vm1786, %v1785, %v1783
    %s1788 = scalar_lea.vmem [#allocation1], 699
    %v1789 = vld [vmem:[%s1788] sm:$0x40]
    %vm1790 = vcmask 1046534
    %v1791 = vsel %vm1790, %v1789, %v1787
    %s1792 = scalar_lea.vmem [#allocation1], 954
    %v1793 = vld [vmem:[%s1792] sm:$0x80]
    %vm1794 = vcmask 1047559
    %v1795 = vsel %vm1794, %v1793, %v1791
    %1796 = vrot.lane.b32.xlu0 %v1795, 8
    %v1797 = vpop.permute.xlu0 %1796
    %vm1798 = vcmask 130112
    %s1799 = scalar_lea.vmem [#allocation0], 16
    %1800 = vst.msk [vmem:[%s1799] sm:$0xf] %vm1798, %v1797
    %s1801 = scalar_lea.vmem [#allocation0], 20
    %1802 = vst.msk [vmem:[%s1801] sm:$0xf0] %vm1798, %v1797
    %s1804 = sshllo.u32 0, 4
    %v1806 = vld [vmem:[#allocation0] sm:%s1804]
    %s1807 = sshllo.u32 0, 4
    %1808 = vst [vmem:[%s1] sm:%s1807] %v1806
    %s1809 = scalar_lea.vmem [#allocation0], 8
    %v1810 = vld [vmem:[%s1809] sm:%s1804]
    %s1811 = sshllo.u32 0, 4
    %s1812 = scalar_lea.vmem %s1, 4
    %1813 = vst [vmem:[%s1812] sm:%s1811] %v1810
    %s1814 = scalar_lea.vmem [#allocation0], 16
    %v1815 = vld [vmem:[%s1814] sm:%s1804]
    %s1816 = sshllo.u32 0, 4
    %s1817 = smul.addr 4, 2
    %s1818 = scalar_lea.vmem %s1, %s1817
    %1819 = vst [vmem:[%s1818] sm:%s1816] %v1815
    %s1820 = scalar_lea.vmem [#allocation0], 24
    %v1821 = vld [vmem:[%s1820] sm:%s1804]
    %s1822 = sshllo.u32 0, 4
    %s1823 = smul.addr 4, 3
    %s1824 = scalar_lea.vmem %s1, %s1823
    %1825 = vst [vmem:[%s1824] sm:%s1822] %v1821

// kernel: reverse.0
$region0: #{reverse.0}
  %s0 = inlined_call_operand.vmem [shape: f32[4,2,16,7], index: 0, kind: input, shape index: {}]
  %s1 = inlined_call_operand.vmem [shape: f32[4,2,16,7], index: 1, kind: output, shape index: {}]
  $region1: #{reverse.0} parent=0
    #allocation0 [shape = 'u8[65536]{0}', space=vmem, size = 0x10000, scoped, tag = 'operand span for operand 0']
    #allocation1 [shape = 'u8[32768]{0}', space=vmem, size = 0x8000, scoped, tag = 'operand span for operand 1']
    %s2 = scalar_lea.vmem [#allocation0], 8
    // Predicated region
    $region2: #{reverse.0} parent=1 // pred_check
      _
    $region3: #{reverse.0} parent=1 // pred_check_branch
      %4 = sbr.rel (0) target = $region5
    $region4: #{reverse.0} parent=1 // pred_region
      // Predicated region
      $region6: #{reverse.0} parent=4 // pred_check
        _
      $region7: #{reverse.0} parent=4 // pred_check_branch
        %6 = sbr.rel (0) target = $region9
      $region8: #{reverse.0} parent=4 // pred_region
        // Predicated region
        $region21: #{reverse.0} parent=8 // pred_check
          _
        $region22: #{reverse.0} parent=8 // pred_check_branch
          %35 = sbr.rel (0) target = $region24
        $region23: #{reverse.0} parent=8 // pred_region
          loop: start=0, step=1, limit=1
          $region25: #{reverse.0} parent=23 // loop_pre_header
            _
          $region26: #{reverse.0} parent=23 // loop_header
            %s37 = sphi 0, %s41
            %p38 = scmp.ge.s32.totalorder %s37, 1
            %s42 = sphi %s0, %s0
            %s43 = sphi %s2, %s2
          $region27: #{reverse.0} parent=23 // loop_header_branch
            %40 = sbr.rel (%p38) target = $region31
          $region28: #{reverse.0} parent=23 // loop_body
            %v44 = vld [vmem:[%s42] sm:$0xff]
            %45 = vst [vmem:[%s43] sm:$0xff] %v44
            %v46 = vld [vmem:[%s42 + $0x8] sm:$0xff]
            %47 = vst [vmem:[%s43 + $0x10] sm:$0xff] %v46
            %v48 = vld [vmem:[%s42 + $0x10] sm:$0xff]
            %49 = vst [vmem:[%s43 + $0x20] sm:$0xff] %v48
            %v50 = vld [vmem:[%s42 + $0x18] sm:$0xff]
            %51 = vst [vmem:[%s43 + $0x30] sm:$0xff] %v50
            %v52 = vld [vmem:[%s42 + $0x20] sm:$0xff]
            %53 = vst [vmem:[%s43 + $0x40] sm:$0xff] %v52
            %v54 = vld [vmem:[%s42 + $0x28] sm:$0xff]
            %55 = vst [vmem:[%s43 + $0x50] sm:$0xff] %v54
            %v56 = vld [vmem:[%s42 + $0x30] sm:$0xff]
            %57 = vst [vmem:[%s43 + $0x60] sm:$0xff] %v56
            %v58 = vld [vmem:[%s42 + $0x38] sm:$0xff]
            %59 = vst [vmem:[%s43 + $0x70] sm:$0xff] %v58
          $region29: #{reverse.0} parent=23 // loop_footer
            %s41 = sadd.s32 1, %s37
          $region30: #{reverse.0} parent=23 // loop_footer_branch
            %36 = sbr.rel target = $region26
          $region31: #{reverse.0} parent=23 // loop_exit
            _
        $region24: #{reverse.0} parent=8 // pred_fallthru
          _
        // Predicated region
        $region32: #{reverse.0} parent=8 // pred_check
          _
        $region33: #{reverse.0} parent=8 // pred_check_branch
          %61 = sbr.rel target = $region35
        $region34: #{reverse.0} parent=8 // pred_region
          _
        $region35: #{reverse.0} parent=8 // pred_fallthru
          _
      $region9: #{reverse.0} parent=4 // pred_fallthru
        _
      // Predicated region
      $region10: #{reverse.0} parent=4 // pred_check
        _
      $region11: #{reverse.0} parent=4 // pred_check_branch
        %8 = sbr.rel target = $region13
      $region12: #{reverse.0} parent=4 // pred_region
        loop: start=0, step=1, limit=1
        $region14: #{reverse.0} parent=12 // loop_pre_header
          _
        $region15: #{reverse.0} parent=12 // loop_header
          %s11 = sphi 0, %s15
          %p12 = scmp.ge.s32.totalorder %s11, 1
          %s16 = sphi %s0, %s0
          %s17 = sphi %s2, %s2
        $region16: #{reverse.0} parent=12 // loop_header_branch
          %14 = sbr.rel (%p12) target = $region20
        $region17: #{reverse.0} parent=12 // loop_body
          %v18 = vld [vmem:[%s16] sm:$0xff]
          %19 = vst [vmem:[%s17] sm:$0xff] %v18
          %v20 = vld [vmem:[%s16 + $0x8] sm:$0xff]
          %21 = vst [vmem:[%s17 + $0x10] sm:$0xff] %v20
          %v22 = vld [vmem:[%s16 + $0x10] sm:$0xff]
          %23 = vst [vmem:[%s17 + $0x20] sm:$0xff] %v22
          %v24 = vld [vmem:[%s16 + $0x18] sm:$0xff]
          %25 = vst [vmem:[%s17 + $0x30] sm:$0xff] %v24
          %v26 = vld [vmem:[%s16 + $0x20] sm:$0xff]
          %27 = vst [vmem:[%s17 + $0x40] sm:$0xff] %v26
          %v28 = vld [vmem:[%s16 + $0x28] sm:$0xff]
          %29 = vst [vmem:[%s17 + $0x50] sm:$0xff] %v28
          %v30 = vld [vmem:[%s16 + $0x30] sm:$0xff]
          %31 = vst [vmem:[%s17 + $0x60] sm:$0xff] %v30
          %v32 = vld [vmem:[%s16 + $0x38] sm:$0xff]
          %33 = vst [vmem:[%s17 + $0x70] sm:$0xff] %v32
        $region18: #{reverse.0} parent=12 // loop_footer
          %s15 = sadd.s32 1, %s11
        $region19: #{reverse.0} parent=12 // loop_footer_branch
          %10 = sbr.rel target = $region15
        $region20: #{reverse.0} parent=12 // loop_exit
          _
      $region13: #{reverse.0} parent=4 // pred_fallthru
        _
    $region5: #{reverse.0} parent=1 // pred_fallthru
      _
    %62 = vnop
    %s63 = scalar_lea.vmem [#allocation0], 7
    %v64 = vld [vmem:[%s63] ss:$-1 sm:$0xff]
    %v65 = vrot.slane %v64, 1
    %66 = vst [vmem:[#allocation1] sm:$0xff] %v65
    %s67 = scalar_lea.vmem [#allocation0], 8
    %s68 = scalar_lea.vmem %s67, 7 [#allocation0]
    %v69 = vld [vmem:[%s68] ss:$-1 sm:$0xff]
    %v70 = vrot.slane %v69, 1
    %v71 = vlaneseq
    %v72 = vshrl.u32 %v71, 7
    %vm73 = vcmp.lt.s32.totalorder %v72, 7
    %74 = vst.msk [vmem:[#allocation1] sm:$0xff] %vm73, %v70
    %s75 = scalar_lea.vmem [#allocation1], 8
    %s76 = scalar_lea.vmem [#allocation0], 16
    %s77 = scalar_lea.vmem %s76, 7 [#allocation0]
    %v78 = vld [vmem:[%s77] ss:$-1 sm:$0xff]
    %v79 = vrot.slane %v78, 1
    %80 = vst [vmem:[%s75] sm:$0xff] %v79
    %s81 = scalar_lea.vmem %s76, 8 [#allocation0]
    %s82 = scalar_lea.vmem %s81, 7 [#allocation0]
    %v83 = vld [vmem:[%s82] ss:$-1 sm:$0xff]
    %v84 = vrot.slane %v83, 1
    %v85 = vlaneseq
    %v86 = vshrl.u32 %v85, 7
    %vm87 = vcmp.lt.s32.totalorder %v86, 7
    %88 = vst.msk [vmem:[%s75] sm:$0xff] %vm87, %v84
    %s89 = scalar_lea.vmem [#allocation1], 16
    %s90 = scalar_lea.vmem [#allocation0], 32
    %s91 = scalar_lea.vmem %s90, 7 [#allocation0]
    %v92 = vld [vmem:[%s91] ss:$-1 sm:$0xff]
    %v93 = vrot.slane %v92, 1
    %94 = vst [vmem:[%s89] sm:$0xff] %v93
    %s95 = scalar_lea.vmem %s90, 8 [#allocation0]
    %s96 = scalar_lea.vmem %s95, 7 [#allocation0]
    %v97 = vld [vmem:[%s96] ss:$-1 sm:$0xff]
    %v98 = vrot.slane %v97, 1
    %v99 = vlaneseq
    %v100 = vshrl.u32 %v99, 7
    %vm101 = vcmp.lt.s32.totalorder %v100, 7
    %102 = vst.msk [vmem:[%s89] sm:$0xff] %vm101, %v98
    %s103 = scalar_lea.vmem [#allocation1], 24
    %s104 = scalar_lea.vmem [#allocation0], 48
    %s105 = scalar_lea.vmem %s104, 7 [#allocation0]
    %v106 = vld [vmem:[%s105] ss:$-1 sm:$0xff]
    %v107 = vrot.slane %v106, 1
    %108 = vst [vmem:[%s103] sm:$0xff] %v107
    %s109 = scalar_lea.vmem %s104, 8 [#allocation0]
    %s110 = scalar_lea.vmem %s109, 7 [#allocation0]
    %v111 = vld [vmem:[%s110] ss:$-1 sm:$0xff]
    %v112 = vrot.slane %v111, 1
    %v113 = vlaneseq
    %v114 = vshrl.u32 %v113, 7
    %vm115 = vcmp.lt.s32.totalorder %v114, 7
    %116 = vst.msk [vmem:[%s103] sm:$0xff] %vm115, %v112
    %s117 = scalar_lea.vmem [#allocation1], 32
    %s118 = scalar_lea.vmem [#allocation0], 64
    %s119 = scalar_lea.vmem %s118, 7 [#allocation0]
    %v120 = vld [vmem:[%s119] ss:$-1 sm:$0xff]
    %v121 = vrot.slane %v120, 1
    %122 = vst [vmem:[%s117] sm:$0xff] %v121
    %s123 = scalar_lea.vmem %s118, 8 [#allocation0]
    %s124 = scalar_lea.vmem %s123, 7 [#allocation0]
    %v125 = vld [vmem:[%s124] ss:$-1 sm:$0xff]
    %v126 = vrot.slane %v125, 1
    %v127 = vlaneseq
    %v128 = vshrl.u32 %v127, 7
    %vm129 = vcmp.lt.s32.totalorder %v128, 7
    %130 = vst.msk [vmem:[%s117] sm:$0xff] %vm129, %v126
    %s131 = scalar_lea.vmem [#allocation1], 40
    %s132 = scalar_lea.vmem [#allocation0], 80
    %s133 = scalar_lea.vmem %s132, 7 [#allocation0]
    %v134 = vld [vmem:[%s133] ss:$-1 sm:$0xff]
    %v135 = vrot.slane %v134, 1
    %136 = vst [vmem:[%s131] sm:$0xff] %v135
    %s137 = scalar_lea.vmem %s132, 8 [#allocation0]
    %s138 = scalar_lea.vmem %s137, 7 [#allocation0]
    %v139 = vld [vmem:[%s138] ss:$-1 sm:$0xff]
    %v140 = vrot.slane %v139, 1
    %v141 = vlaneseq
    %v142 = vshrl.u32 %v141, 7
    %vm143 = vcmp.lt.s32.totalorder %v142, 7
    %144 = vst.msk [vmem:[%s131] sm:$0xff] %vm143, %v140
    %s145 = scalar_lea.vmem [#allocation1], 48
    %s146 = scalar_lea.vmem [#allocation0], 96
    %s147 = scalar_lea.vmem %s146, 7 [#allocation0]
    %v148 = vld [vmem:[%s147] ss:$-1 sm:$0xff]
    %v149 = vrot.slane %v148, 1
    %150 = vst [vmem:[%s145] sm:$0xff] %v149
    %s151 = scalar_lea.vmem %s146, 8 [#allocation0]
    %s152 = scalar_lea.vmem %s151, 7 [#allocation0]
    %v153 = vld [vmem:[%s152] ss:$-1 sm:$0xff]
    %v154 = vrot.slane %v153, 1
    %v155 = vlaneseq
    %v156 = vshrl.u32 %v155, 7
    %vm157 = vcmp.lt.s32.totalorder %v156, 7
    %158 = vst.msk [vmem:[%s145] sm:$0xff] %vm157, %v154
    %s159 = scalar_lea.vmem [#allocation1], 56
    %s160 = scalar_lea.vmem [#allocation0], 112
    %s161 = scalar_lea.vmem %s160, 7 [#allocation0]
    %v162 = vld [vmem:[%s161] ss:$-1 sm:$0xff]
    %v163 = vrot.slane %v162, 1
    %164 = vst [vmem:[%s159] sm:$0xff] %v163
    %s165 = scalar_lea.vmem %s160, 8 [#allocation0]
    %s166 = scalar_lea.vmem %s165, 7 [#allocation0]
    %v167 = vld [vmem:[%s166] ss:$-1 sm:$0xff]
    %v168 = vrot.slane %v167, 1
    %v169 = vlaneseq
    %v170 = vshrl.u32 %v169, 7
    %vm171 = vcmp.lt.s32.totalorder %v170, 7
    %172 = vst.msk [vmem:[%s159] sm:$0xff] %vm171, %v168
    // Predicated region
    $region36: #{reverse.0} parent=1 // pred_check
      _
    $region37: #{reverse.0} parent=1 // pred_check_branch
      %174 = sbr.rel (0) target = $region39
    $region38: #{reverse.0} parent=1 // pred_region
      // Predicated region
      $region40: #{reverse.0} parent=38 // pred_check
        _
      $region41: #{reverse.0} parent=38 // pred_check_branch
        %176 = sbr.rel (0) target = $region43
      $region42: #{reverse.0} parent=38 // pred_region
        // Predicated region
        $region55: #{reverse.0} parent=42 // pred_check
          _
        $region56: #{reverse.0} parent=42 // pred_check_branch
          %205 = sbr.rel (0) target = $region58
        $region57: #{reverse.0} parent=42 // pred_region
          loop: start=0, step=1, limit=1
          $region59: #{reverse.0} parent=57 // loop_pre_header
            _
          $region60: #{reverse.0} parent=57 // loop_header
            %s207 = sphi 0, %s211
            %p208 = scmp.ge.s32.totalorder %s207, 1
            %s212 = sphi [#allocation1], [#allocation1]
            %s213 = sphi %s1, %s1
          $region61: #{reverse.0} parent=57 // loop_header_branch
            %210 = sbr.rel (%p208) target = $region65
          $region62: #{reverse.0} parent=57 // loop_body
            %v214 = vld [vmem:[%s212] sm:$0xff]
            %215 = vst [vmem:[%s213] sm:$0xff] %v214
            %v216 = vld [vmem:[%s212 + $0x8] sm:$0xff]
            %217 = vst [vmem:[%s213 + $0x8] sm:$0xff] %v216
            %v218 = vld [vmem:[%s212 + $0x10] sm:$0xff]
            %219 = vst [vmem:[%s213 + $0x10] sm:$0xff] %v218
            %v220 = vld [vmem:[%s212 + $0x18] sm:$0xff]
            %221 = vst [vmem:[%s213 + $0x18] sm:$0xff] %v220
            %v222 = vld [vmem:[%s212 + $0x20] sm:$0xff]
            %223 = vst [vmem:[%s213 + $0x20] sm:$0xff] %v222
            %v224 = vld [vmem:[%s212 + $0x28] sm:$0xff]
            %225 = vst [vmem:[%s213 + $0x28] sm:$0xff] %v224
            %v226 = vld [vmem:[%s212 + $0x30] sm:$0xff]
            %227 = vst [vmem:[%s213 + $0x30] sm:$0xff] %v226
            %v228 = vld [vmem:[%s212 + $0x38] sm:$0xff]
            %229 = vst [vmem:[%s213 + $0x38] sm:$0xff] %v228
          $region63: #{reverse.0} parent=57 // loop_footer
            %s211 = sadd.s32 1, %s207
          $region64: #{reverse.0} parent=57 // loop_footer_branch
            %206 = sbr.rel target = $region60
          $region65: #{reverse.0} parent=57 // loop_exit
            _
        $region58: #{reverse.0} parent=42 // pred_fallthru
          _
        // Predicated region
        $region66: #{reverse.0} parent=42 // pred_check
          _
        $region67: #{reverse.0} parent=42 // pred_check_branch
          %231 = sbr.rel target = $region69
        $region68: #{reverse.0} parent=42 // pred_region
          _
        $region69: #{reverse.0} parent=42 // pred_fallthru
          _
      $region43: #{reverse.0} parent=38 // pred_fallthru
        _
      // Predicated region
      $region44: #{reverse.0} parent=38 // pred_check
        _
      $region45: #{reverse.0} parent=38 // pred_check_branch
        %178 = sbr.rel target = $region47
      $region46: #{reverse.0} parent=38 // pred_region
        loop: start=0, step=1, limit=1
        $region48: #{reverse.0} parent=46 // loop_pre_header
          _
        $region49: #{reverse.0} parent=46 // loop_header
          %s181 = sphi 0, %s185
          %p182 = scmp.ge.s32.totalorder %s181, 1
          %s186 = sphi [#allocation1], [#allocation1]
          %s187 = sphi %s1, %s1
        $region50: #{reverse.0} parent=46 // loop_header_branch
          %184 = sbr.rel (%p182) target = $region54
        $region51: #{reverse.0} parent=46 // loop_body
          %v188 = vld [vmem:[%s186] sm:$0xff]
          %189 = vst [vmem:[%s187] sm:$0xff] %v188
          %v190 = vld [vmem:[%s186 + $0x8] sm:$0xff]
          %191 = vst [vmem:[%s187 + $0x8] sm:$0xff] %v190
          %v192 = vld [vmem:[%s186 + $0x10] sm:$0xff]
          %193 = vst [vmem:[%s187 + $0x10] sm:$0xff] %v192
          %v194 = vld [vmem:[%s186 + $0x18] sm:$0xff]
          %195 = vst [vmem:[%s187 + $0x18] sm:$0xff] %v194
          %v196 = vld [vmem:[%s186 + $0x20] sm:$0xff]
          %197 = vst [vmem:[%s187 + $0x20] sm:$0xff] %v196
          %v198 = vld [vmem:[%s186 + $0x28] sm:$0xff]
          %199 = vst [vmem:[%s187 + $0x28] sm:$0xff] %v198
          %v200 = vld [vmem:[%s186 + $0x30] sm:$0xff]
          %201 = vst [vmem:[%s187 + $0x30] sm:$0xff] %v200
          %v202 = vld [vmem:[%s186 + $0x38] sm:$0xff]
          %203 = vst [vmem:[%s187 + $0x38] sm:$0xff] %v202
        $region52: #{reverse.0} parent=46 // loop_footer
          %s185 = sadd.s32 1, %s181
        $region53: #{reverse.0} parent=46 // loop_footer_branch
          %180 = sbr.rel target = $region49
        $region54: #{reverse.0} parent=46 // loop_exit
          _
      $region47: #{reverse.0} parent=38 // pred_fallthru
        _
    $region39: #{reverse.0} parent=1 // pred_fallthru
      _
    %232 = vnop

// kernel: ffc_bn_act_forward.5
$region0: #{ffc_bn_act_forward.5}
  #allocation0 [shape = 'u32[]', space=smem, size = 0x4, offset = 0x4, fixed_abs, tag = 'smem constant byte address 0x4 - core index']
  #allocation1 [shape = 'u32[144,128]{1,0:T(1,128)}', space=vmem, size = 0x12000, scoped, tag = 'internal scratch']
  %s0 = inlined_call_operand.vmem [shape: f32[4,512], index: 0, kind: input, shape index: {}]
  %s1 = inlined_call_operand.vmem [shape: f32[4,512], index: 1, kind: input, shape index: {}]
  %s2 = inlined_call_operand.vmem [shape: f32[4,512], index: 2, kind: input, shape index: {}]
  %s3 = inlined_call_operand.vmem [shape: f32[8,512], index: 3, kind: input, shape index: {}]
  %s4 = inlined_call_operand.vmem [shape: f32[8,4], index: 4, kind: input, shape index: {}]
  %s5 = inlined_call_operand.vmem [shape: f32[8,8], index: 5, kind: input, shape index: {}]
  %s6 = inlined_call_operand.vmem [shape: f32[8,1], index: 6, kind: input, shape index: {}]
  %s7 = inlined_call_operand.vmem [shape: f32[8,512], index: 7, kind: output, shape index: {}]
  %s8 = sld [smem:[#allocation0]]
  $region38: #{ffc_bn_act_forward.5} parent=0
    _
  %s10 = ssub.s32 1, %s8
  %s11 = scalar_select 0, %s10, %s8
  // Predicated region
  $region2: #{ffc_bn_act_forward.5} parent=0 // pred_check
    _
  $region3: #{ffc_bn_act_forward.5} parent=0 // pred_check_branch
    %13 = sbr.rel (0) target = $region5
  $region4: #{ffc_bn_act_forward.5} parent=0 // pred_region
    _
  $region5: #{ffc_bn_act_forward.5} parent=0 // pred_fallthru
    _
  // Predicated region
  $region6: #{ffc_bn_act_forward.5} parent=0 // pred_check
    _
  $region7: #{ffc_bn_act_forward.5} parent=0 // pred_check_branch
    %15 = sbr.rel (0) target = $region9
  $region8: #{ffc_bn_act_forward.5} parent=0 // pred_region
    _
  $region9: #{ffc_bn_act_forward.5} parent=0 // pred_fallthru
    _
  // Predicated region
  $region10: #{ffc_bn_act_forward.5} parent=0 // pred_check
    _
  $region11: #{ffc_bn_act_forward.5} parent=0 // pred_check_branch
    %17 = sbr.rel (0) target = $region13
  $region12: #{ffc_bn_act_forward.5} parent=0 // pred_region
    _
  $region13: #{ffc_bn_act_forward.5} parent=0 // pred_fallthru
    _
  // Predicated region
  $region14: #{ffc_bn_act_forward.5} parent=0 // pred_check
    _
  $region15: #{ffc_bn_act_forward.5} parent=0 // pred_check_branch
    %19 = sbr.rel (0) target = $region17
  $region16: #{ffc_bn_act_forward.5} parent=0 // pred_region
    _
  $region17: #{ffc_bn_act_forward.5} parent=0 // pred_fallthru
    _
  // Predicated region
  $region18: #{ffc_bn_act_forward.5} parent=0 // pred_check
    _
  $region19: #{ffc_bn_act_forward.5} parent=0 // pred_check_branch
    %21 = sbr.rel (0) target = $region21
  $region20: #{ffc_bn_act_forward.5} parent=0 // pred_region
    _
  $region21: #{ffc_bn_act_forward.5} parent=0 // pred_fallthru
    _
  // Predicated region
  $region22: #{ffc_bn_act_forward.5} parent=0 // pred_check
    _
  $region23: #{ffc_bn_act_forward.5} parent=0 // pred_check_branch
    %23 = sbr.rel (0) target = $region25
  $region24: #{ffc_bn_act_forward.5} parent=0 // pred_region
    _
  $region25: #{ffc_bn_act_forward.5} parent=0 // pred_fallthru
    _
  // Predicated region
  $region26: #{ffc_bn_act_forward.5} parent=0 // pred_check
    _
  $region27: #{ffc_bn_act_forward.5} parent=0 // pred_check_branch
    %25 = sbr.rel (0) target = $region29
  $region28: #{ffc_bn_act_forward.5} parent=0 // pred_region
    _
  $region29: #{ffc_bn_act_forward.5} parent=0 // pred_fallthru
    _
  %v26 = vld [vmem:[%s0] sm:$0xff]
  %v27 = vld [vmem:[%s0 + $0x8] sm:$0xff]
  %v28 = vld [vmem:[%s1] sm:$0xff]
  %v29 = vld [vmem:[%s1 + $0x8] sm:$0xff]
  %v30 = vadd.f32 %v26, %v28
  %v31 = vadd.f32 %v27, %v29
  %v32 = vld [vmem:[%s2] sm:$0xff]
  %v33 = vld [vmem:[%s2 + $0x8] sm:$0xff]
  %v34 = vadd.f32 %v30, %v32
  %v35 = vadd.f32 %v31, %v33
  %v36 = vld [vmem:[%s4] sm:$0xff]
  %v37 = vld [vmem:[%s5] sm:$0xff]
  %v38 = vld [vmem:[%s3] sm:$0xff]
  %v39 = vld [vmem:[%s3 + $0x8] sm:$0xff]
  %v40 = vld [vmem:[%s3 + $0x10] sm:$0xff]
  %v41 = vld [vmem:[%s3 + $0x18] sm:$0xff]
  %vm42 = vcmask 64512
  %v44 = vsel %vm42, %v37, 0
  %46 = vmatprep.subr.mxu0 %v39
  %47 = vmatpush1.msra.mxu0 %v38
  %48 = vmatprep.subr.mxu0 0.0
  %49 = vmatpush1.msra.mxu0 0.0
  %50 = vmatprep.subr.mxu0 0.0
  %51 = vmatpush1.msra.mxu0 0.0
  %52 = vmatprep.subr.mxu0 0.0
  %53 = vmatpush1.msra.mxu0 0.0
  %54 = vmatprep.subr.mxu0 0.0
  %55 = vmatpush1.msra.mxu0 0.0
  %56 = vmatprep.subr.mxu0 0.0
  %57 = vmatpush1.msra.mxu0 0.0
  %58 = vmatprep.subr.mxu0 0.0
  %59 = vmatpush1.msra.mxu0 0.0
  %60 = vmatprep.subr.mxu0 0.0
  %61 = vmatpush1.msra.mxu0 0.0
  %62 = vmatprep.subr.mxu0 0.0
  %63 = vmatpush1.msra.mxu0 0.0
  %64 = vmatprep.subr.mxu0 0.0
  %65 = vmatpush1.msra.mxu0 0.0
  %66 = vmatprep.subr.mxu0 0.0
  %67 = vmatpush1.msra.mxu0 0.0
  %68 = vmatprep.subr.mxu0 0.0
  %69 = vmatpush1.msra.mxu0 0.0
  %70 = vmatprep.subr.mxu0 0.0
  %71 = vmatpush1.msra.mxu0 0.0
  %72 = vmatprep.subr.mxu0 0.0
  %73 = vmatpush1.msra.mxu0 0.0
  %74 = vmatprep.subr.mxu0 0.0
  %75 = vmatpush1.msra.mxu0 0.0
  %76 = vmatprep.subr.mxu0 0.0
  %77 = vmatpush1.msra.mxu0 0.0
  %78 = vmatprep.subr.mxu0 0.0
  %79 = vmatpush1.msra.mxu0 0.0
  %80 = vmatprep.subr.mxu0 0.0
  %81 = vmatpush1.msra.mxu0 0.0
  %82 = vmatprep.subr.mxu0 0.0
  %83 = vmatpush1.msra.mxu0 0.0
  %84 = vmatprep.subr.mxu0 0.0
  %85 = vmatpush1.msra.mxu0 0.0
  %86 = vmatprep.subr.mxu0 0.0
  %87 = vmatpush1.msra.mxu0 0.0
  %88 = vmatprep.subr.mxu0 0.0
  %89 = vmatpush1.msra.mxu0 0.0
  %90 = vmatprep.subr.mxu0 0.0
  %91 = vmatpush1.msra.mxu0 0.0
  %92 = vmatprep.subr.mxu0 0.0
  %93 = vmatpush1.msra.mxu0 0.0
  %94 = vmatprep.subr.mxu0 0.0
  %95 = vmatpush1.msra.mxu0 0.0
  %96 = vmatprep.subr.mxu0 0.0
  %97 = vmatpush1.msra.mxu0 0.0
  %98 = vmatprep.subr.mxu0 0.0
  %99 = vmatpush1.msra.mxu0 0.0
  %100 = vmatprep.subr.mxu0 0.0
  %101 = vmatpush1.msra.mxu0 0.0
  %102 = vmatprep.subr.mxu0 0.0
  %103 = vmatpush1.msra.mxu0 0.0
  %104 = vmatprep.subr.mxu0 0.0
  %105 = vmatpush1.msra.mxu0 0.0
  %106 = vmatprep.subr.mxu0 0.0
  %107 = vmatpush1.msra.mxu0 0.0
  %108 = vmatprep.subr.mxu0 0.0
  %109 = vmatpush1.msra.mxu0 0.0
  %110 = vmatprep.mubr.f32.mxu0 0.0
  %111 = vmatmul.mubr.f32.gmra.mrb[0].mxu0 %v44
  %v112 = vpop.f32.mrb[0].mxu0
  %v113 = vadd.f32 0.0, %v112
  %v114 = vpop.f32.mrb[0].mxu0
  %v115 = vadd.f32 0.0, %v114
  %116 = vdwg.mxu0
  %117 = vmatprep.subr.mxu0 %v41
  %118 = vmatpush1.msra.mxu0 %v40
  %119 = vmatprep.subr.mxu0 0.0
  %120 = vmatpush1.msra.mxu0 0.0
  %121 = vmatprep.subr.mxu0 0.0
  %122 = vmatpush1.msra.mxu0 0.0
  %123 = vmatprep.subr.mxu0 0.0
  %124 = vmatpush1.msra.mxu0 0.0
  %125 = vmatprep.subr.mxu0 0.0
  %126 = vmatpush1.msra.mxu0 0.0
  %127 = vmatprep.subr.mxu0 0.0
  %128 = vmatpush1.msra.mxu0 0.0
  %129 = vmatprep.subr.mxu0 0.0
  %130 = vmatpush1.msra.mxu0 0.0
  %131 = vmatprep.subr.mxu0 0.0
  %132 = vmatpush1.msra.mxu0 0.0
  %133 = vmatprep.subr.mxu0 0.0
  %134 = vmatpush1.msra.mxu0 0.0
  %135 = vmatprep.subr.mxu0 0.0
  %136 = vmatpush1.msra.mxu0 0.0
  %137 = vmatprep.subr.mxu0 0.0
  %138 = vmatpush1.msra.mxu0 0.0
  %139 = vmatprep.subr.mxu0 0.0
  %140 = vmatpush1.msra.mxu0 0.0
  %141 = vmatprep.subr.mxu0 0.0
  %142 = vmatpush1.msra.mxu0 0.0
  %143 = vmatprep.subr.mxu0 0.0
  %144 = vmatpush1.msra.mxu0 0.0
  %145 = vmatprep.subr.mxu0 0.0
  %146 = vmatpush1.msra.mxu0 0.0
  %147 = vmatprep.subr.mxu0 0.0
  %148 = vmatpush1.msra.mxu0 0.0
  %149 = vmatprep.subr.mxu0 0.0
  %150 = vmatpush1.msra.mxu0 0.0
  %151 = vmatprep.subr.mxu0 0.0
  %152 = vmatpush1.msra.mxu0 0.0
  %153 = vmatprep.subr.mxu0 0.0
  %154 = vmatpush1.msra.mxu0 0.0
  %155 = vmatprep.subr.mxu0 0.0
  %156 = vmatpush1.msra.mxu0 0.0
  %157 = vmatprep.subr.mxu0 0.0
  %158 = vmatpush1.msra.mxu0 0.0
  %159 = vmatprep.subr.mxu0 0.0
  %160 = vmatpush1.msra.mxu0 0.0
  %161 = vmatprep.subr.mxu0 0.0
  %162 = vmatpush1.msra.mxu0 0.0
  %163 = vmatprep.subr.mxu0 0.0
  %164 = vmatpush1.msra.mxu0 0.0
  %165 = vmatprep.subr.mxu0 0.0
  %166 = vmatpush1.msra.mxu0 0.0
  %167 = vmatprep.subr.mxu0 0.0
  %168 = vmatpush1.msra.mxu0 0.0
  %169 = vmatprep.subr.mxu0 0.0
  %170 = vmatpush1.msra.mxu0 0.0
  %171 = vmatprep.subr.mxu0 0.0
  %172 = vmatpush1.msra.mxu0 0.0
  %173 = vmatprep.subr.mxu0 0.0
  %174 = vmatpush1.msra.mxu0 0.0
  %175 = vmatprep.subr.mxu0 0.0
  %176 = vmatpush1.msra.mxu0 0.0
  %177 = vmatprep.subr.mxu0 0.0
  %178 = vmatpush1.msra.mxu0 0.0
  %179 = vmatprep.subr.mxu0 0.0
  %180 = vmatpush1.msra.mxu0 0.0
  %181 = vmatprep.mubr.f32.mxu0 0.0
  %182 = vmatmul.mubr.f32.gmra.mrb[0].mxu0 %v44
  %v183 = vpop.f32.mrb[0].mxu0
  %v184 = vadd.f32 0.0, %v183
  %v185 = vpop.f32.mrb[0].mxu0
  %v186 = vadd.f32 0.0, %v185
  %187 = vdwg.mxu0
  %v190 = vcombine.high %v34, %v34
  %v191 = vcombine.high %v35, %v35
  %vm192 = vcmask 31744
  %v194 = vsel %vm192, %v36, 0
  %vm196 = vcmask 1043456
  %v197 = vsel %vm196, %v34, 0
  %v199 = vsel %vm196, %v190, 0
  %v201 = vsel %vm196, %v35, 0
  %v203 = vsel %vm196, %v191, 0
  %205 = vmatprep.subr.mxu0 %v199
  %206 = vmatpush1.msra.mxu0 %v197
  %207 = vmatprep.subr.mxu0 0.0
  %208 = vmatpush1.msra.mxu0 0.0
  %209 = vmatprep.subr.mxu0 0.0
  %210 = vmatpush1.msra.mxu0 0.0
  %211 = vmatprep.subr.mxu0 0.0
  %212 = vmatpush1.msra.mxu0 0.0
  %213 = vmatprep.subr.mxu0 0.0
  %214 = vmatpush1.msra.mxu0 0.0
  %215 = vmatprep.subr.mxu0 0.0
  %216 = vmatpush1.msra.mxu0 0.0
  %217 = vmatprep.subr.mxu0 0.0
  %218 = vmatpush1.msra.mxu0 0.0
  %219 = vmatprep.subr.mxu0 0.0
  %220 = vmatpush1.msra.mxu0 0.0
  %221 = vmatprep.subr.mxu0 0.0
  %222 = vmatpush1.msra.mxu0 0.0
  %223 = vmatprep.subr.mxu0 0.0
  %224 = vmatpush1.msra.mxu0 0.0
  %225 = vmatprep.subr.mxu0 0.0
  %226 = vmatpush1.msra.mxu0 0.0
  %227 = vmatprep.subr.mxu0 0.0
  %228 = vmatpush1.msra.mxu0 0.0
  %229 = vmatprep.subr.mxu0 0.0
  %230 = vmatpush1.msra.mxu0 0.0
  %231 = vmatprep.subr.mxu0 0.0
  %232 = vmatpush1.msra.mxu0 0.0
  %233 = vmatprep.subr.mxu0 0.0
  %234 = vmatpush1.msra.mxu0 0.0
  %235 = vmatprep.subr.mxu0 0.0
  %236 = vmatpush1.msra.mxu0 0.0
  %237 = vmatprep.subr.mxu0 0.0
  %238 = vmatpush1.msra.mxu0 0.0
  %239 = vmatprep.subr.mxu0 0.0
  %240 = vmatpush1.msra.mxu0 0.0
  %241 = vmatprep.subr.mxu0 0.0
  %242 = vmatpush1.msra.mxu0 0.0
  %243 = vmatprep.subr.mxu0 0.0
  %244 = vmatpush1.msra.mxu0 0.0
  %245 = vmatprep.subr.mxu0 0.0
  %246 = vmatpush1.msra.mxu0 0.0
  %247 = vmatprep.subr.mxu0 0.0
  %248 = vmatpush1.msra.mxu0 0.0
  %249 = vmatprep.subr.mxu0 0.0
  %250 = vmatpush1.msra.mxu0 0.0
  %251 = vmatprep.subr.mxu0 0.0
  %252 = vmatpush1.msra.mxu0 0.0
  %253 = vmatprep.subr.mxu0 0.0
  %254 = vmatpush1.msra.mxu0 0.0
  %255 = vmatprep.subr.mxu0 0.0
  %256 = vmatpush1.msra.mxu0 0.0
  %257 = vmatprep.subr.mxu0 0.0
  %258 = vmatpush1.msra.mxu0 0.0
  %259 = vmatprep.subr.mxu0 0.0
  %260 = vmatpush1.msra.mxu0 0.0
  %261 = vmatprep.subr.mxu0 0.0
  %262 = vmatpush1.msra.mxu0 0.0
  %263 = vmatprep.subr.mxu0 0.0
  %264 = vmatpush1.msra.mxu0 0.0
  %265 = vmatprep.subr.mxu0 0.0
  %266 = vmatpush1.msra.mxu0 0.0
  %267 = vmatprep.subr.mxu0 0.0
  %268 = vmatpush1.msra.mxu0 0.0
  %269 = vmatprep.mubr.f32.mxu0 0.0
  %270 = vmatmul.mubr.f32.gmra.mrb[0].mxu0 %v194
  %v271 = vpop.f32.mrb[0].mxu0
  %v272 = vadd.f32 %v113, %v271
  %v273 = vpop.f32.mrb[0].mxu0
  %v274 = vadd.f32 %v115, %v273
  %275 = vdwg.mxu0
  %276 = vmatprep.subr.mxu0 %v203
  %277 = vmatpush1.msra.mxu0 %v201
  %278 = vmatprep.subr.mxu0 0.0
  %279 = vmatpush1.msra.mxu0 0.0
  %280 = vmatprep.subr.mxu0 0.0
  %281 = vmatpush1.msra.mxu0 0.0
  %282 = vmatprep.subr.mxu0 0.0
  %283 = vmatpush1.msra.mxu0 0.0
  %284 = vmatprep.subr.mxu0 0.0
  %285 = vmatpush1.msra.mxu0 0.0
  %286 = vmatprep.subr.mxu0 0.0
  %287 = vmatpush1.msra.mxu0 0.0
  %288 = vmatprep.subr.mxu0 0.0
  %289 = vmatpush1.msra.mxu0 0.0
  %290 = vmatprep.subr.mxu0 0.0
  %291 = vmatpush1.msra.mxu0 0.0
  %292 = vmatprep.subr.mxu0 0.0
  %293 = vmatpush1.msra.mxu0 0.0
  %294 = vmatprep.subr.mxu0 0.0
  %295 = vmatpush1.msra.mxu0 0.0
  %296 = vmatprep.subr.mxu0 0.0
  %297 = vmatpush1.msra.mxu0 0.0
  %298 = vmatprep.subr.mxu0 0.0
  %299 = vmatpush1.msra.mxu0 0.0
  %300 = vmatprep.subr.mxu0 0.0
  %301 = vmatpush1.msra.mxu0 0.0
  %302 = vmatprep.subr.mxu0 0.0
  %303 = vmatpush1.msra.mxu0 0.0
  %304 = vmatprep.subr.mxu0 0.0
  %305 = vmatpush1.msra.mxu0 0.0
  %306 = vmatprep.subr.mxu0 0.0
  %307 = vmatpush1.msra.mxu0 0.0
  %308 = vmatprep.subr.mxu0 0.0
  %309 = vmatpush1.msra.mxu0 0.0
  %310 = vmatprep.subr.mxu0 0.0
  %311 = vmatpush1.msra.mxu0 0.0
  %312 = vmatprep.subr.mxu0 0.0
  %313 = vmatpush1.msra.mxu0 0.0
  %314 = vmatprep.subr.mxu0 0.0
  %315 = vmatpush1.msra.mxu0 0.0
  %316 = vmatprep.subr.mxu0 0.0
  %317 = vmatpush1.msra.mxu0 0.0
  %318 = vmatprep.subr.mxu0 0.0
  %319 = vmatpush1.msra.mxu0 0.0
  %320 = vmatprep.subr.mxu0 0.0
  %321 = vmatpush1.msra.mxu0 0.0
  %322 = vmatprep.subr.mxu0 0.0
  %323 = vmatpush1.msra.mxu0 0.0
  %324 = vmatprep.subr.mxu0 0.0
  %325 = vmatpush1.msra.mxu0 0.0
  %326 = vmatprep.subr.mxu0 0.0
  %327 = vmatpush1.msra.mxu0 0.0
  %328 = vmatprep.subr.mxu0 0.0
  %329 = vmatpush1.msra.mxu0 0.0
  %330 = vmatprep.subr.mxu0 0.0
  %331 = vmatpush1.msra.mxu0 0.0
  %332 = vmatprep.subr.mxu0 0.0
  %333 = vmatpush1.msra.mxu0 0.0
  %334 = vmatprep.subr.mxu0 0.0
  %335 = vmatpush1.msra.mxu0 0.0
  %336 = vmatprep.subr.mxu0 0.0
  %337 = vmatpush1.msra.mxu0 0.0
  %338 = vmatprep.subr.mxu0 0.0
  %339 = vmatpush1.msra.mxu0 0.0
  %340 = vmatprep.mubr.f32.mxu0 0.0
  %341 = vmatmul.mubr.f32.gmra.mrb[0].mxu0 %v194
  %v342 = vpop.f32.mrb[0].mxu0
  %v343 = vadd.f32 %v184, %v342
  %v344 = vpop.f32.mrb[0].mxu0
  %v345 = vadd.f32 %v186, %v344
  %346 = vdwg.mxu0
  %v347 = vld [vmem:[%s6] sm:$0xff]
  %349 = vset.pattern.permute.xlu0 0
  %350 = vperm.xlu0 %349, %v347
  %v351 = vpop.permute.xlu0 %350
  %v353 = vadd.f32 %v272, %v351
  %v354 = vadd.f32 %v274, %v351
  %v355 = vadd.f32 %v343, %v351
  %v356 = vadd.f32 %v345, %v351
  %357 = vst [vmem:[%s7] sm:$0xff] %v353
  %358 = vst [vmem:[%s7 + $0x8] sm:$0xff] %v354
  %359 = vst [vmem:[%s7 + $0x10] sm:$0xff] %v355
  %360 = vst [vmem:[%s7 + $0x18] sm:$0xff] %v356
  // Predicated region
  $region30: #{ffc_bn_act_forward.5} parent=0 // pred_check
    _
  $region31: #{ffc_bn_act_forward.5} parent=0 // pred_check_branch
    %362 = sbr.rel (0) target = $region33
  $region32: #{ffc_bn_act_forward.5} parent=0 // pred_region
    _
  $region33: #{ffc_bn_act_forward.5} parent=0 // pred_fallthru
    _
  // Predicated region
  $region34: #{ffc_bn_act_forward.5} parent=0 // pred_check
    _
  $region35: #{ffc_bn_act_forward.5} parent=0 // pred_check_branch
    %364 = sbr.rel (0) target = $region37
  $region36: #{ffc_bn_act_forward.5} parent=0 // pred_region
    _
  $region37: #{ffc_bn_act_forward.5} parent=0 // pred_fallthru
    _

</llo_original>
